<compile_context>
chip_gen: v7x
topology: tpu7x:2x2x1
jax: 0.10.0
libtpu: 0.0.40
codegen_flags: <defaults>
</compile_context>

<pallas_src>
import math

import jax
import jax.numpy as jnp
from jax.experimental import pallas as pl
from jax.experimental.pallas import tpu as pltpu

# ----------------------------- model config (small, consistent with the module) -----------------
B = 2            # batch
S = 8            # sequence length
IN_F = 16        # input_size
D = 32           # d_model
NHEAD = 4        # nhead
HD = D // NHEAD  # head dim
L = 2            # num_layers
FF = 64          # dim_feedforward
OUT_F = 4        # output_size
EPS = 1e-5       # PyTorch LayerNorm eps
BS = B * S


def _layer_norm(x, g, b):
    mu = jnp.mean(x, axis=-1, keepdims=True)
    var = jnp.mean((x - mu) ** 2, axis=-1, keepdims=True)
    return (x - mu) * jax.lax.rsqrt(var + EPS) * g + b


def transformer_kernel(
    x_ref, pe_ref, qmask_ref, vmask_ref,
    wi_ref, bi_ref,
    wqkv_ref, bqkv_ref, wo_ref, bo_ref,
    ln1g_ref, ln1b_ref,
    w1_ref, b1_ref, w2_ref, b2_ref,
    ln2g_ref, ln2b_ref,
    wout_ref, bout_ref,
    out_ref,
):
    f32 = jnp.float32
    bf16 = jnp.bfloat16

    def mm(a_bf, w_bf):
        # bf16 operands, f32 accumulation on the MXU.
        return jnp.dot(a_bf, w_bf, preferred_element_type=f32)

    # hoisted once: per-head lane masks (q mask carries the 1/sqrt(HD) scale)
    qmask = qmask_ref[...]                                             # (NHEAD,1,1,D) f32
    vmask = vmask_ref[...]                                             # (NHEAD,1,1,D) f32

    # ---- input linear + positional encoding on the flattened (B*S, .) slab ----
    x2 = x_ref[...]                                                    # (BS, IN_F) f32
    h = mm(x2.astype(bf16), wi_ref[...].astype(bf16)) + bi_ref[0]      # (BS, D) f32
    h = h + pe_ref[...]                                                # pe pre-tiled (BS, D)

    # ---- encoder layers (post-LN, ReLU FFN); dropout = identity (eval) ----
    # TODO(synk): dropout intentionally omitted (inference semantics).
    for l in range(L):
        wq = wqkv_ref[l, 0].astype(bf16)
        wk = wqkv_ref[l, 1].astype(bf16)
        wv = wqkv_ref[l, 2].astype(bf16)
        bq = bqkv_ref[l, 0]
        bk = bqkv_ref[l, 1]
        bv = bqkv_ref[l, 2]
        wo_l = wo_ref[l].astype(bf16)
        bo_l = bo_ref[l]
        w1_l = w1_ref[l].astype(bf16)
        b1_l = b1_ref[l]
        w2_l = w2_ref[l].astype(bf16)
        b2_l = b2_ref[l]
        g1 = ln1g_ref[l]
        be1 = ln1b_ref[l]
        g2 = ln2g_ref[l]
        be2 = ln2b_ref[l]

        h_bf = h.astype(bf16)
        q = mm(h_bf, wq) + bq                                          # (BS, D) f32
        k = mm(h_bf, wk) + bk
        v = mm(h_bf, wv) + bv

        # Merge (head, batch) into a single batch axis of size NHEAD*B so scores and the
        # value matmul are each ONE batched contraction; head separation is done with the
        # disjoint per-head lane masks (no HD-wide lane slices, no concatenate).
        q3 = q.reshape(B, S, D)
        k3 = k.reshape(B, S, D)
        v3 = v.reshape(B, S, D)
        qm = (q3[None] * qmask).astype(bf16).reshape(NHEAD * B, S, D)
        vm = (v3[None] * vmask).astype(bf16).reshape(NHEAD * B, S, D)
        km = jnp.broadcast_to(k3.astype(bf16)[None],
                              (NHEAD, B, S, D)).reshape(NHEAD * B, S, D)

        s = jnp.einsum('bqd,bkd->bqk', qm, km,
                       preferred_element_type=f32)                     # (H*B, S, S) f32
        s = s - jnp.max(s, axis=-1, keepdims=True)
        p = jnp.exp(s)
        p = p * pl.reciprocal(jnp.sum(p, axis=-1, keepdims=True), approx=True)
        a = jnp.einsum('bqk,bkd->bqd', p.astype(bf16), vm,
                       preferred_element_type=f32)                     # (H*B, S, D) f32

        # per-head outputs live in disjoint lane groups -> summing heads reconstructs the
        # concatenated multi-head output.
        attn3 = a[0:B]
        for hh in range(1, NHEAD):
            attn3 = attn3 + a[hh * B:(hh + 1) * B]
        attn = attn3.reshape(BS, D)
        attn = mm(attn.astype(bf16), wo_l) + bo_l                      # (BS, D) f32

        h = _layer_norm(h + attn, g1, be1)

        # feed-forward (ReLU), flattened 2-D matmuls
        ff = mm(h.astype(bf16), w1_l) + b1_l
        ff = jnp.maximum(ff, 0.0)
        ff = mm(ff.astype(bf16), w2_l) + b2_l

        h = _layer_norm(h + ff, g2, be2)

    # ---- output head on the last token (regression -> no activation) ----
    last = h.reshape(B, S, D)[:, S - 1, :]                             # (B, D)
    out = mm(last.astype(bf16), wout_ref[...].astype(bf16)) + bout_ref[0]
    out_ref[...] = out.astype(out_ref.dtype)


def transformer_net(x, params):
    (pe, wi, bi, wqkv, bqkv, wo, bo, ln1g, ln1b,
     w1, b1, w2, b2, ln2g, ln2b, wout, bout) = params

    # Wrapper-side layout plumbing (free, XLA-side): flatten (B, S), pre-tile the
    # positional encoding, and build per-head lane masks (q mask folds in 1/sqrt(HD)).
    x2 = x.reshape(BS, IN_F)
    pe_t = jnp.tile(pe, (B, 1))                                        # (BS, D)
    head_ids = jnp.arange(D, dtype=jnp.int32) // HD                    # (D,)
    one_hot = (head_ids[None, :] ==
               jnp.arange(NHEAD, dtype=jnp.int32)[:, None]).astype(jnp.float32)
    vmask = one_hot.reshape(NHEAD, 1, 1, D)
    qmask = vmask * (1.0 / math.sqrt(HD))

    args = (x2, pe_t, qmask, vmask, wi, bi, wqkv, bqkv, wo, bo,
            ln1g, ln1b, w1, b1, w2, b2, ln2g, ln2b, wout, bout)

    return pl.pallas_call(
        transformer_kernel,
        out_shape=jax.ShapeDtypeStruct((B, OUT_F), jnp.float32),
        in_specs=[pl.BlockSpec(memory_space=pltpu.MemorySpace.VMEM) for _ in args],
        out_specs=pl.BlockSpec(memory_space=pltpu.MemorySpace.VMEM),
    )(*args)


# ----------------------------- parameter construction (deterministic, synthetic) ----------------
def make_positional_encoding(max_len, d_model):
    position = jnp.arange(max_len, dtype=jnp.float32)[:, None]
    div_term = jnp.exp(jnp.arange(0, d_model, 2, dtype=jnp.float32)
                       * (-math.log(10000.0) / d_model))
    pe = jnp.zeros((max_len, d_model), dtype=jnp.float32)
    pe = pe.at[:, 0::2].set(jnp.sin(position * div_term))
    pe = pe.at[:, 1::2].set(jnp.cos(position * div_term))
    return pe


def make_params(key):
    ks = jax.random.split(key, 12)

    def w(k, shape, fan_in):
        return (jax.random.normal(k, shape, jnp.float32) / math.sqrt(fan_in)).astype(jnp.float32)

    pe = make_positional_encoding(S, D)
    wi = w(ks[0], (IN_F, D), IN_F)
    bi = w(ks[1], (1, D), D)
    wqkv = w(ks[2], (L, 3, D, D), D)        # split q/k/v weights: no 32/64 lane slices
    bqkv = w(ks[3], (L, 3, D), D)
    wo = w(ks[4], (L, D, D), D)
    bo = w(ks[5], (L, D), D)
    ln1g = jnp.ones((L, D), jnp.float32)
    ln1b = jnp.zeros((L, D), jnp.float32)
    w1 = w(ks[6], (L, D, FF), D)
    b1 = w(ks[7], (L, FF), D)
    w2 = w(ks[8], (L, FF, D), FF)
    b2 = w(ks[9], (L, D), FF)
    ln2g = jnp.ones((L, D), jnp.float32)
    ln2b = jnp.zeros((L, D), jnp.float32)
    wout = w(ks[10], (D, OUT_F), D)
    bout = w(ks[11], (1, OUT_F), D)
    return (pe, wi, bi, wqkv, bqkv, wo, bo, ln1g, ln1b,
            w1, b1, w2, b2, ln2g, ln2b, wout, bout)


# ----------------------------- pure-JAX f32 reference (PyTorch semantics) ------------------------
def reference(x, params):
    (pe, wi, bi, wqkv, bqkv, wo, bo, ln1g, ln1b,
     w1, b1, w2, b2, ln2g, ln2b, wout, bout) = params
    h = jnp.einsum('bsi,id->bsd', x, wi) + bi[0]
    h = h + pe[None]
    scale = 1.0 / math.sqrt(HD)
    for l in range(L):
        q = jnp.einsum('bsd,de->bse', h, wqkv[l, 0]) + bqkv[l, 0]
        k = jnp.einsum('bsd,de->bse', h, wqkv[l, 1]) + bqkv[l, 1]
        v = jnp.einsum('bsd,de->bse', h, wqkv[l, 2]) + bqkv[l, 2]
        outs = []
        for hh in range(NHEAD):
            sl = slice(hh * HD, (hh + 1) * HD)
            sc = jnp.einsum('bqd,bkd->bqk', q[:, :, sl], k[:, :, sl]) * scale
            p = jax.nn.softmax(sc, axis=-1)
            outs.append(jnp.einsum('bqk,bkd->bqd', p, v[:, :, sl]))
        attn = jnp.einsum('bsd,de->bse', jnp.concatenate(outs, -1), wo[l]) + bo[l]
        h = _layer_norm(h + attn, ln1g[l], ln1b[l])
        ff = jnp.maximum(jnp.einsum('bsd,df->bsf', h, w1[l]) + b1[l], 0.0)
        ff = jnp.einsum('bsf,fd->bsd', ff, w2[l]) + b2[l]
        h = _layer_norm(h + ff, ln2g[l], ln2b[l])
    return h[:, -1, :] @ wout + bout[0]


if __name__ == "__main__":
    key = jax.random.PRNGKey(0)
    kx, kp = jax.random.split(key)
    x = jax.random.normal(kx, (B, S, IN_F), jnp.float32)
    params = make_params(kp)

    out = jax.block_until_ready(transformer_net(x, params))
    ref = jax.block_until_ready(reference(x, params))

    assert out.shape == (B, OUT_F)
    # Kernel uses bf16 matmul operands (f32 accumulation) + approx softmax reciprocal,
    # compared against a pure-f32 reference -> bf16-appropriate tolerance. Structural
    # bugs (wrong head mixing, residuals, etc.) would show up as O(1) discrepancies.
    assert jnp.allclose(out, ref, atol=5e-2, rtol=5e-2), (out, ref)
    print("KERNEL_OK")
</pallas_src>

<mosaic_0001>
module attributes {stable_mosaic.version = 11 : i64} {
  func.func @transformer_kernel(%arg0: memref<16x16xf32, #tpu.memory_space<vmem>>, %arg1: memref<16x32xf32, #tpu.memory_space<vmem>>, %arg2: memref<4x1x1x32xf32, #tpu.memory_space<vmem>>, %arg3: memref<4x1x1x32xf32, #tpu.memory_space<vmem>>, %arg4: memref<16x32xf32, #tpu.memory_space<vmem>>, %arg5: memref<1x32xf32, #tpu.memory_space<vmem>>, %arg6: memref<2x3x32x32xf32, #tpu.memory_space<vmem>>, %arg7: memref<2x3x32xf32, #tpu.memory_space<vmem>>, %arg8: memref<2x32x32xf32, #tpu.memory_space<vmem>>, %arg9: memref<2x32xf32, #tpu.memory_space<vmem>>, %arg10: memref<2x32xf32, #tpu.memory_space<vmem>>, %arg11: memref<2x32xf32, #tpu.memory_space<vmem>>, %arg12: memref<2x32x64xf32, #tpu.memory_space<vmem>>, %arg13: memref<2x64xf32, #tpu.memory_space<vmem>>, %arg14: memref<2x64x32xf32, #tpu.memory_space<vmem>>, %arg15: memref<2x32xf32, #tpu.memory_space<vmem>>, %arg16: memref<2x32xf32, #tpu.memory_space<vmem>>, %arg17: memref<2x32xf32, #tpu.memory_space<vmem>>, %arg18: memref<32x4xf32, #tpu.memory_space<vmem>>, %arg19: memref<1x4xf32, #tpu.memory_space<vmem>>, %arg20: memref<2x4xf32, #tpu.memory_space<vmem>>) attributes {dimension_semantics = [], scalar_prefetch = 0 : i64, scratch_operands = 0 : i64, tpu.core_type = #tpu.core_type<tc>} {
    %c0 = arith.constant 0 : index
    %c0_0 = arith.constant 0 : index
    %c0_1 = arith.constant 0 : index
    %c0_2 = arith.constant 0 : index
    %0 = vector.load %arg2[%c0, %c0_0, %c0_1, %c0_2] : memref<4x1x1x32xf32, #tpu.memory_space<vmem>>, vector<4x1x1x32xf32>
    %c0_3 = arith.constant 0 : index
    %c0_4 = arith.constant 0 : index
    %c0_5 = arith.constant 0 : index
    %c0_6 = arith.constant 0 : index
    %1 = vector.load %arg3[%c0_3, %c0_4, %c0_5, %c0_6] : memref<4x1x1x32xf32, #tpu.memory_space<vmem>>, vector<4x1x1x32xf32>
    %c0_7 = arith.constant 0 : index
    %c0_8 = arith.constant 0 : index
    %2 = vector.load %arg0[%c0_7, %c0_8] : memref<16x16xf32, #tpu.memory_space<vmem>>, vector<16x16xf32>
    %3 = arith.truncf %2 : vector<16x16xf32> to vector<16x16xbf16>
    %c0_9 = arith.constant 0 : index
    %c0_10 = arith.constant 0 : index
    %4 = vector.load %arg4[%c0_9, %c0_10] : memref<16x32xf32, #tpu.memory_space<vmem>>, vector<16x32xf32>
    %5 = arith.truncf %4 : vector<16x32xf32> to vector<16x32xbf16>
    %cst = arith.constant dense<0.000000e+00> : vector<16x32xf32>
    %6 = tpu.matmul %3, %5, %cst {dimension_numbers = #tpu.dot_dimension_numbers<[1], [0], [0], [1], [0, 0, 1, 1], [], []>} : vector<16x16xbf16>, vector<16x32xbf16>, vector<16x32xf32> -> vector<16x32xf32>
    %c0_11 = arith.constant 0 : index
    %c0_12 = arith.constant 0 : index
    %7 = vector.load %arg5[%c0_11, %c0_12] : memref<1x32xf32, #tpu.memory_space<vmem>>, vector<1x32xf32>
    %8 = vector.shape_cast %7 : vector<1x32xf32> to vector<32xf32>
    %9 = vector.shape_cast %8 : vector<32xf32> to vector<1x32xf32>
    %10 = vector.broadcast %9 : vector<1x32xf32> to vector<16x32xf32>
    %11 = arith.addf %6, %10 : vector<16x32xf32>
    %c0_13 = arith.constant 0 : index
    %c0_14 = arith.constant 0 : index
    %12 = vector.load %arg1[%c0_13, %c0_14] : memref<16x32xf32, #tpu.memory_space<vmem>>, vector<16x32xf32>
    %13 = arith.addf %11, %12 : vector<16x32xf32>
    %c0_15 = arith.constant 0 : index
    %c0_16 = arith.constant 0 : index
    %c0_17 = arith.constant 0 : index
    %c0_18 = arith.constant 0 : index
    %14 = vector.load %arg6[%c0_15, %c0_16, %c0_17, %c0_18] : memref<2x3x32x32xf32, #tpu.memory_space<vmem>>, vector<1x1x32x32xf32>
    %15 = vector.shape_cast %14 : vector<1x1x32x32xf32> to vector<32x32xf32>
    %16 = arith.truncf %15 : vector<32x32xf32> to vector<32x32xbf16>
    %c0_19 = arith.constant 0 : index
    %c1 = arith.constant 1 : index
    %c0_20 = arith.constant 0 : index
    %c0_21 = arith.constant 0 : index
    %17 = vector.load %arg6[%c0_19, %c1, %c0_20, %c0_21] : memref<2x3x32x32xf32, #tpu.memory_space<vmem>>, vector<1x1x32x32xf32>
    %18 = vector.shape_cast %17 : vector<1x1x32x32xf32> to vector<32x32xf32>
    %19 = arith.truncf %18 : vector<32x32xf32> to vector<32x32xbf16>
    %c0_22 = arith.constant 0 : index
    %c2 = arith.constant 2 : index
    %c0_23 = arith.constant 0 : index
    %c0_24 = arith.constant 0 : index
    %20 = vector.load %arg6[%c0_22, %c2, %c0_23, %c0_24] : memref<2x3x32x32xf32, #tpu.memory_space<vmem>>, vector<1x1x32x32xf32>
    %21 = vector.shape_cast %20 : vector<1x1x32x32xf32> to vector<32x32xf32>
    %22 = arith.truncf %21 : vector<32x32xf32> to vector<32x32xbf16>
    %c0_25 = arith.constant 0 : index
    %c0_26 = arith.constant 0 : index
    %c0_27 = arith.constant 0 : index
    %23 = vector.load %arg7[%c0_25, %c0_26, %c0_27] : memref<2x3x32xf32, #tpu.memory_space<vmem>>, vector<1x1x32xf32>
    %24 = vector.shape_cast %23 : vector<1x1x32xf32> to vector<32xf32>
    %c0_28 = arith.constant 0 : index
    %c1_29 = arith.constant 1 : index
    %c0_30 = arith.constant 0 : index
    %25 = vector.load %arg7[%c0_28, %c1_29, %c0_30] : memref<2x3x32xf32, #tpu.memory_space<vmem>>, vector<1x1x32xf32>
    %26 = vector.shape_cast %25 : vector<1x1x32xf32> to vector<32xf32>
    %c0_31 = arith.constant 0 : index
    %c2_32 = arith.constant 2 : index
    %c0_33 = arith.constant 0 : index
    %27 = vector.load %arg7[%c0_31, %c2_32, %c0_33] : memref<2x3x32xf32, #tpu.memory_space<vmem>>, vector<1x1x32xf32>
    %28 = vector.shape_cast %27 : vector<1x1x32xf32> to vector<32xf32>
    %c0_34 = arith.constant 0 : index
    %c0_35 = arith.constant 0 : index
    %c0_36 = arith.constant 0 : index
    %29 = vector.load %arg8[%c0_34, %c0_35, %c0_36] : memref<2x32x32xf32, #tpu.memory_space<vmem>>, vector<1x32x32xf32>
    %30 = vector.shape_cast %29 : vector<1x32x32xf32> to vector<32x32xf32>
    %31 = arith.truncf %30 : vector<32x32xf32> to vector<32x32xbf16>
    %c0_37 = arith.constant 0 : index
    %c0_38 = arith.constant 0 : index
    %32 = vector.load %arg9[%c0_37, %c0_38] : memref<2x32xf32, #tpu.memory_space<vmem>>, vector<1x32xf32>
    %33 = vector.shape_cast %32 : vector<1x32xf32> to vector<32xf32>
    %c0_39 = arith.constant 0 : index
    %c0_40 = arith.constant 0 : index
    %c0_41 = arith.constant 0 : index
    %34 = vector.load %arg12[%c0_39, %c0_40, %c0_41] : memref<2x32x64xf32, #tpu.memory_space<vmem>>, vector<1x32x64xf32>
    %35 = vector.shape_cast %34 : vector<1x32x64xf32> to vector<32x64xf32>
    %36 = arith.truncf %35 : vector<32x64xf32> to vector<32x64xbf16>
    %c0_42 = arith.constant 0 : index
    %c0_43 = arith.constant 0 : index
    %37 = vector.load %arg13[%c0_42, %c0_43] : memref<2x64xf32, #tpu.memory_space<vmem>>, vector<1x64xf32>
    %38 = vector.shape_cast %37 : vector<1x64xf32> to vector<64xf32>
    %c0_44 = arith.constant 0 : index
    %c0_45 = arith.constant 0 : index
    %c0_46 = arith.constant 0 : index
    %39 = vector.load %arg14[%c0_44, %c0_45, %c0_46] : memref<2x64x32xf32, #tpu.memory_space<vmem>>, vector<1x64x32xf32>
    %40 = vector.shape_cast %39 : vector<1x64x32xf32> to vector<64x32xf32>
    %41 = arith.truncf %40 : vector<64x32xf32> to vector<64x32xbf16>
    %c0_47 = arith.constant 0 : index
    %c0_48 = arith.constant 0 : index
    %42 = vector.load %arg15[%c0_47, %c0_48] : memref<2x32xf32, #tpu.memory_space<vmem>>, vector<1x32xf32>
    %43 = vector.shape_cast %42 : vector<1x32xf32> to vector<32xf32>
    %c0_49 = arith.constant 0 : index
    %c0_50 = arith.constant 0 : index
    %44 = vector.load %arg10[%c0_49, %c0_50] : memref<2x32xf32, #tpu.memory_space<vmem>>, vector<1x32xf32>
    %45 = vector.shape_cast %44 : vector<1x32xf32> to vector<32xf32>
    %c0_51 = arith.constant 0 : index
    %c0_52 = arith.constant 0 : index
    %46 = vector.load %arg11[%c0_51, %c0_52] : memref<2x32xf32, #tpu.memory_space<vmem>>, vector<1x32xf32>
    %47 = vector.shape_cast %46 : vector<1x32xf32> to vector<32xf32>
    %c0_53 = arith.constant 0 : index
    %c0_54 = arith.constant 0 : index
    %48 = vector.load %arg16[%c0_53, %c0_54] : memref<2x32xf32, #tpu.memory_space<vmem>>, vector<1x32xf32>
    %49 = vector.shape_cast %48 : vector<1x32xf32> to vector<32xf32>
    %c0_55 = arith.constant 0 : index
    %c0_56 = arith.constant 0 : index
    %50 = vector.load %arg17[%c0_55, %c0_56] : memref<2x32xf32, #tpu.memory_space<vmem>>, vector<1x32xf32>
    %51 = vector.shape_cast %50 : vector<1x32xf32> to vector<32xf32>
    %52 = arith.truncf %13 : vector<16x32xf32> to vector<16x32xbf16>
    %cst_57 = arith.constant dense<0.000000e+00> : vector<16x32xf32>
    %53 = tpu.matmul %52, %16, %cst_57 {dimension_numbers = #tpu.dot_dimension_numbers<[1], [0], [0], [1], [0, 0, 1, 1], [], []>} : vector<16x32xbf16>, vector<32x32xbf16>, vector<16x32xf32> -> vector<16x32xf32>
    %54 = vector.shape_cast %24 : vector<32xf32> to vector<1x32xf32>
    %55 = vector.broadcast %54 : vector<1x32xf32> to vector<16x32xf32>
    %56 = arith.addf %53, %55 : vector<16x32xf32>
    %cst_58 = arith.constant dense<0.000000e+00> : vector<16x32xf32>
    %57 = tpu.matmul %52, %19, %cst_58 {dimension_numbers = #tpu.dot_dimension_numbers<[1], [0], [0], [1], [0, 0, 1, 1], [], []>} : vector<16x32xbf16>, vector<32x32xbf16>, vector<16x32xf32> -> vector<16x32xf32>
    %58 = vector.shape_cast %26 : vector<32xf32> to vector<1x32xf32>
    %59 = vector.broadcast %58 : vector<1x32xf32> to vector<16x32xf32>
    %60 = arith.addf %57, %59 : vector<16x32xf32>
    %cst_59 = arith.constant dense<0.000000e+00> : vector<16x32xf32>
    %61 = tpu.matmul %52, %22, %cst_59 {dimension_numbers = #tpu.dot_dimension_numbers<[1], [0], [0], [1], [0, 0, 1, 1], [], []>} : vector<16x32xbf16>, vector<32x32xbf16>, vector<16x32xf32> -> vector<16x32xf32>
    %62 = vector.shape_cast %28 : vector<32xf32> to vector<1x32xf32>
    %63 = vector.broadcast %62 : vector<1x32xf32> to vector<16x32xf32>
    %64 = arith.addf %61, %63 : vector<16x32xf32>
    %65 = vector.shape_cast %56 : vector<16x32xf32> to vector<2x8x32xf32>
    %66 = vector.shape_cast %60 : vector<16x32xf32> to vector<2x8x32xf32>
    %67 = vector.shape_cast %64 : vector<16x32xf32> to vector<2x8x32xf32>
    %68 = vector.shape_cast %65 : vector<2x8x32xf32> to vector<1x2x8x32xf32>
    %69 = vector.broadcast %68 : vector<1x2x8x32xf32> to vector<4x2x8x32xf32>
    %70 = vector.broadcast %0 : vector<4x1x1x32xf32> to vector<4x2x8x32xf32>
    %71 = arith.mulf %69, %70 : vector<4x2x8x32xf32>
    %72 = arith.truncf %71 : vector<4x2x8x32xf32> to vector<4x2x8x32xbf16>
    %73 = vector.shape_cast %72 : vector<4x2x8x32xbf16> to vector<8x8x32xbf16>
    %74 = vector.shape_cast %67 : vector<2x8x32xf32> to vector<1x2x8x32xf32>
    %75 = vector.broadcast %74 : vector<1x2x8x32xf32> to vector<4x2x8x32xf32>
    %76 = vector.broadcast %1 : vector<4x1x1x32xf32> to vector<4x2x8x32xf32>
    %77 = arith.mulf %75, %76 : vector<4x2x8x32xf32>
    %78 = arith.truncf %77 : vector<4x2x8x32xf32> to vector<4x2x8x32xbf16>
    %79 = vector.shape_cast %78 : vector<4x2x8x32xbf16> to vector<8x8x32xbf16>
    %80 = arith.truncf %66 : vector<2x8x32xf32> to vector<2x8x32xbf16>
    %81 = vector.shape_cast %80 : vector<2x8x32xbf16> to vector<1x2x8x32xbf16>
    %82 = vector.shape_cast %81 : vector<1x2x8x32xbf16> to vector<1x2x8x32xbf16>
    %83 = vector.broadcast %82 : vector<1x2x8x32xbf16> to vector<4x2x8x32xbf16>
    %84 = vector.shape_cast %83 : vector<4x2x8x32xbf16> to vector<8x8x32xbf16>
    "tpu.trace_start"() <{level = 10 : i32, message = "bqd,bkd->bqk"}> : () -> ()
    %cst_60 = arith.constant dense<0.000000e+00> : vector<8x8x8xf32>
    %85 = tpu.matmul %73, %84, %cst_60 {dimension_numbers = #tpu.dot_dimension_numbers<[2], [2], [1], [1], [0, 0, 0, 1, 1, 1], [0], [0]>} : vector<8x8x32xbf16>, vector<8x8x32xbf16>, vector<8x8x8xf32> -> vector<8x8x8xf32>
    "tpu.trace_stop"() : () -> ()
    %cst_61 = arith.constant dense<0xFF800000> : vector<8x8xf32>
    %86 = vector.multi_reduction <maximumf>, %85, %cst_61 [2] : vector<8x8x8xf32> to vector<8x8xf32>
    %87 = vector.shape_cast %86 : vector<8x8xf32> to vector<8x8x1xf32>
    %88 = vector.broadcast %87 : vector<8x8x1xf32> to vector<8x8x8xf32>
    %89 = arith.subf %85, %88 : vector<8x8x8xf32>
    %90 = math.exp %89 : vector<8x8x8xf32>
    %cst_62 = arith.constant dense<0.000000e+00> : vector<8x8xf32>
    %91 = vector.multi_reduction <add>, %90, %cst_62 [2] : vector<8x8x8xf32> to vector<8x8xf32>
    %92 = vector.shape_cast %91 : vector<8x8xf32> to vector<8x8x1xf32>
    %93 = tpu.reciprocal %92 {approx = true} : vector<8x8x1xf32> -> vector<8x8x1xf32>
    %94 = vector.broadcast %93 : vector<8x8x1xf32> to vector<8x8x8xf32>
    %95 = arith.mulf %90, %94 : vector<8x8x8xf32>
    %96 = arith.truncf %95 : vector<8x8x8xf32> to vector<8x8x8xbf16>
    "tpu.trace_start"() <{level = 10 : i32, message = "bqk,bkd->bqd"}> : () -> ()
    %cst_63 = arith.constant dense<0.000000e+00> : vector<8x8x32xf32>
    %97 = tpu.matmul %96, %79, %cst_63 {dimension_numbers = #tpu.dot_dimension_numbers<[2], [1], [1], [2], [0, 0, 0, 1, 1, 2], [0], [0]>} : vector<8x8x8xbf16>, vector<8x8x32xbf16>, vector<8x8x32xf32> -> vector<8x8x32xf32>
    "tpu.trace_stop"() : () -> ()
    %98 = vector.extract_strided_slice %97 {offsets = [0, 0, 0], sizes = [2, 8, 32], strides = [1, 1, 1]} : vector<8x8x32xf32> to vector<2x8x32xf32>
    %99 = vector.extract_strided_slice %97 {offsets = [2, 0, 0], sizes = [2, 8, 32], strides = [1, 1, 1]} : vector<8x8x32xf32> to vector<2x8x32xf32>
    %100 = arith.addf %98, %99 : vector<2x8x32xf32>
    %101 = vector.extract_strided_slice %97 {offsets = [4, 0, 0], sizes = [2, 8, 32], strides = [1, 1, 1]} : vector<8x8x32xf32> to vector<2x8x32xf32>
    %102 = arith.addf %100, %101 : vector<2x8x32xf32>
    %103 = vector.extract_strided_slice %97 {offsets = [6, 0, 0], sizes = [2, 8, 32], strides = [1, 1, 1]} : vector<8x8x32xf32> to vector<2x8x32xf32>
    %104 = arith.addf %102, %103 : vector<2x8x32xf32>
    %105 = vector.shape_cast %104 : vector<2x8x32xf32> to vector<16x32xf32>
    %106 = arith.truncf %105 : vector<16x32xf32> to vector<16x32xbf16>
    %cst_64 = arith.constant dense<0.000000e+00> : vector<16x32xf32>
    %107 = tpu.matmul %106, %31, %cst_64 {dimension_numbers = #tpu.dot_dimension_numbers<[1], [0], [0], [1], [0, 0, 1, 1], [], []>} : vector<16x32xbf16>, vector<32x32xbf16>, vector<16x32xf32> -> vector<16x32xf32>
    %108 = vector.shape_cast %33 : vector<32xf32> to vector<1x32xf32>
    %109 = vector.broadcast %108 : vector<1x32xf32> to vector<16x32xf32>
    %110 = arith.addf %107, %109 : vector<16x32xf32>
    %111 = arith.addf %13, %110 : vector<16x32xf32>
    %cst_65 = arith.constant dense<0.000000e+00> : vector<16xf32>
    %112 = vector.multi_reduction <add>, %111, %cst_65 [1] : vector<16x32xf32> to vector<16xf32>
    %113 = vector.shape_cast %112 : vector<16xf32> to vector<16x1xf32>
    %cst_66 = arith.constant 3.200000e+01 : f32
    %114 = vector.broadcast %cst_66 : f32 to vector<16x1xf32>
    %115 = arith.divf %113, %114 : vector<16x1xf32>
    %116 = vector.broadcast %115 : vector<16x1xf32> to vector<16x32xf32>
    %117 = arith.subf %111, %116 : vector<16x32xf32>
    %118 = arith.mulf %117, %117 : vector<16x32xf32>
    %cst_67 = arith.constant dense<0.000000e+00> : vector<16xf32>
    %119 = vector.multi_reduction <add>, %118, %cst_67 [1] : vector<16x32xf32> to vector<16xf32>
    %120 = vector.shape_cast %119 : vector<16xf32> to vector<16x1xf32>
    %cst_68 = arith.constant 3.200000e+01 : f32
    %121 = vector.broadcast %cst_68 : f32 to vector<16x1xf32>
    %122 = arith.divf %120, %121 : vector<16x1xf32>
    %123 = vector.broadcast %115 : vector<16x1xf32> to vector<16x32xf32>
    %124 = arith.subf %111, %123 : vector<16x32xf32>
    %cst_69 = arith.constant 9.99999974E-6 : f32
    %125 = vector.broadcast %cst_69 : f32 to vector<16x1xf32>
    %126 = arith.addf %122, %125 : vector<16x1xf32>
    %127 = math.rsqrt %126 : vector<16x1xf32>
    %128 = vector.broadcast %127 : vector<16x1xf32> to vector<16x32xf32>
    %129 = arith.mulf %124, %128 : vector<16x32xf32>
    %130 = vector.shape_cast %45 : vector<32xf32> to vector<1x32xf32>
    %131 = vector.broadcast %130 : vector<1x32xf32> to vector<16x32xf32>
    %132 = arith.mulf %129, %131 : vector<16x32xf32>
    %133 = vector.shape_cast %47 : vector<32xf32> to vector<1x32xf32>
    %134 = vector.broadcast %133 : vector<1x32xf32> to vector<16x32xf32>
    %135 = arith.addf %132, %134 : vector<16x32xf32>
    %136 = arith.truncf %135 : vector<16x32xf32> to vector<16x32xbf16>
    %cst_70 = arith.constant dense<0.000000e+00> : vector<16x64xf32>
    %137 = tpu.matmul %136, %36, %cst_70 {dimension_numbers = #tpu.dot_dimension_numbers<[1], [0], [0], [1], [0, 0, 1, 1], [], []>} : vector<16x32xbf16>, vector<32x64xbf16>, vector<16x64xf32> -> vector<16x64xf32>
    %138 = vector.shape_cast %38 : vector<64xf32> to vector<1x64xf32>
    %139 = vector.broadcast %138 : vector<1x64xf32> to vector<16x64xf32>
    %140 = arith.addf %137, %139 : vector<16x64xf32>
    %cst_71 = arith.constant 0.000000e+00 : f32
    %141 = vector.broadcast %cst_71 : f32 to vector<16x64xf32>
    %142 = arith.maximumf %140, %141 : vector<16x64xf32>
    %143 = arith.truncf %142 : vector<16x64xf32> to vector<16x64xbf16>
    %cst_72 = arith.constant dense<0.000000e+00> : vector<16x32xf32>
    %144 = tpu.matmul %143, %41, %cst_72 {dimension_numbers = #tpu.dot_dimension_numbers<[1], [0], [0], [1], [0, 0, 1, 1], [], []>} : vector<16x64xbf16>, vector<64x32xbf16>, vector<16x32xf32> -> vector<16x32xf32>
    %145 = vector.shape_cast %43 : vector<32xf32> to vector<1x32xf32>
    %146 = vector.broadcast %145 : vector<1x32xf32> to vector<16x32xf32>
    %147 = arith.addf %144, %146 : vector<16x32xf32>
    %148 = arith.addf %135, %147 : vector<16x32xf32>
    %cst_73 = arith.constant dense<0.000000e+00> : vector<16xf32>
    %149 = vector.multi_reduction <add>, %148, %cst_73 [1] : vector<16x32xf32> to vector<16xf32>
    %150 = vector.shape_cast %149 : vector<16xf32> to vector<16x1xf32>
    %cst_74 = arith.constant 3.200000e+01 : f32
    %151 = vector.broadcast %cst_74 : f32 to vector<16x1xf32>
    %152 = arith.divf %150, %151 : vector<16x1xf32>
    %153 = vector.broadcast %152 : vector<16x1xf32> to vector<16x32xf32>
    %154 = arith.subf %148, %153 : vector<16x32xf32>
    %155 = arith.mulf %154, %154 : vector<16x32xf32>
    %cst_75 = arith.constant dense<0.000000e+00> : vector<16xf32>
    %156 = vector.multi_reduction <add>, %155, %cst_75 [1] : vector<16x32xf32> to vector<16xf32>
    %157 = vector.shape_cast %156 : vector<16xf32> to vector<16x1xf32>
    %cst_76 = arith.constant 3.200000e+01 : f32
    %158 = vector.broadcast %cst_76 : f32 to vector<16x1xf32>
    %159 = arith.divf %157, %158 : vector<16x1xf32>
    %160 = vector.broadcast %152 : vector<16x1xf32> to vector<16x32xf32>
    %161 = arith.subf %148, %160 : vector<16x32xf32>
    %cst_77 = arith.constant 9.99999974E-6 : f32
    %162 = vector.broadcast %cst_77 : f32 to vector<16x1xf32>
    %163 = arith.addf %159, %162 : vector<16x1xf32>
    %164 = math.rsqrt %163 : vector<16x1xf32>
    %165 = vector.broadcast %164 : vector<16x1xf32> to vector<16x32xf32>
    %166 = arith.mulf %161, %165 : vector<16x32xf32>
    %167 = vector.shape_cast %49 : vector<32xf32> to vector<1x32xf32>
    %168 = vector.broadcast %167 : vector<1x32xf32> to vector<16x32xf32>
    %169 = arith.mulf %166, %168 : vector<16x32xf32>
    %170 = vector.shape_cast %51 : vector<32xf32> to vector<1x32xf32>
    %171 = vector.broadcast %170 : vector<1x32xf32> to vector<16x32xf32>
    %172 = arith.addf %169, %171 : vector<16x32xf32>
    %c1_78 = arith.constant 1 : index
    %c0_79 = arith.constant 0 : index
    %c0_80 = arith.constant 0 : index
    %c0_81 = arith.constant 0 : index
    %173 = vector.load %arg6[%c1_78, %c0_79, %c0_80, %c0_81] : memref<2x3x32x32xf32, #tpu.memory_space<vmem>>, vector<1x1x32x32xf32>
    %174 = vector.shape_cast %173 : vector<1x1x32x32xf32> to vector<32x32xf32>
    %175 = arith.truncf %174 : vector<32x32xf32> to vector<32x32xbf16>
    %c1_82 = arith.constant 1 : index
    %c1_83 = arith.constant 1 : index
    %c0_84 = arith.constant 0 : index
    %c0_85 = arith.constant 0 : index
    %176 = vector.load %arg6[%c1_82, %c1_83, %c0_84, %c0_85] : memref<2x3x32x32xf32, #tpu.memory_space<vmem>>, vector<1x1x32x32xf32>
    %177 = vector.shape_cast %176 : vector<1x1x32x32xf32> to vector<32x32xf32>
    %178 = arith.truncf %177 : vector<32x32xf32> to vector<32x32xbf16>
    %c1_86 = arith.constant 1 : index
    %c2_87 = arith.constant 2 : index
    %c0_88 = arith.constant 0 : index
    %c0_89 = arith.constant 0 : index
    %179 = vector.load %arg6[%c1_86, %c2_87, %c0_88, %c0_89] : memref<2x3x32x32xf32, #tpu.memory_space<vmem>>, vector<1x1x32x32xf32>
    %180 = vector.shape_cast %179 : vector<1x1x32x32xf32> to vector<32x32xf32>
    %181 = arith.truncf %180 : vector<32x32xf32> to vector<32x32xbf16>
    %c1_90 = arith.constant 1 : index
    %c0_91 = arith.constant 0 : index
    %c0_92 = arith.constant 0 : index
    %182 = vector.load %arg7[%c1_90, %c0_91, %c0_92] : memref<2x3x32xf32, #tpu.memory_space<vmem>>, vector<1x1x32xf32>
    %183 = vector.shape_cast %182 : vector<1x1x32xf32> to vector<32xf32>
    %c1_93 = arith.constant 1 : index
    %c1_94 = arith.constant 1 : index
    %c0_95 = arith.constant 0 : index
    %184 = vector.load %arg7[%c1_93, %c1_94, %c0_95] : memref<2x3x32xf32, #tpu.memory_space<vmem>>, vector<1x1x32xf32>
    %185 = vector.shape_cast %184 : vector<1x1x32xf32> to vector<32xf32>
    %c1_96 = arith.constant 1 : index
    %c2_97 = arith.constant 2 : index
    %c0_98 = arith.constant 0 : index
    %186 = vector.load %arg7[%c1_96, %c2_97, %c0_98] : memref<2x3x32xf32, #tpu.memory_space<vmem>>, vector<1x1x32xf32>
    %187 = vector.shape_cast %186 : vector<1x1x32xf32> to vector<32xf32>
    %c1_99 = arith.constant 1 : index
    %c0_100 = arith.constant 0 : index
    %c0_101 = arith.constant 0 : index
    %188 = vector.load %arg8[%c1_99, %c0_100, %c0_101] : memref<2x32x32xf32, #tpu.memory_space<vmem>>, vector<1x32x32xf32>
    %189 = vector.shape_cast %188 : vector<1x32x32xf32> to vector<32x32xf32>
    %190 = arith.truncf %189 : vector<32x32xf32> to vector<32x32xbf16>
    %c1_102 = arith.constant 1 : index
    %c0_103 = arith.constant 0 : index
    %191 = vector.load %arg9[%c1_102, %c0_103] : memref<2x32xf32, #tpu.memory_space<vmem>>, vector<1x32xf32>
    %192 = vector.shape_cast %191 : vector<1x32xf32> to vector<32xf32>
    %c1_104 = arith.constant 1 : index
    %c0_105 = arith.constant 0 : index
    %c0_106 = arith.constant 0 : index
    %193 = vector.load %arg12[%c1_104, %c0_105, %c0_106] : memref<2x32x64xf32, #tpu.memory_space<vmem>>, vector<1x32x64xf32>
    %194 = vector.shape_cast %193 : vector<1x32x64xf32> to vector<32x64xf32>
    %195 = arith.truncf %194 : vector<32x64xf32> to vector<32x64xbf16>
    %c1_107 = arith.constant 1 : index
    %c0_108 = arith.constant 0 : index
    %196 = vector.load %arg13[%c1_107, %c0_108] : memref<2x64xf32, #tpu.memory_space<vmem>>, vector<1x64xf32>
    %197 = vector.shape_cast %196 : vector<1x64xf32> to vector<64xf32>
    %c1_109 = arith.constant 1 : index
    %c0_110 = arith.constant 0 : index
    %c0_111 = arith.constant 0 : index
    %198 = vector.load %arg14[%c1_109, %c0_110, %c0_111] : memref<2x64x32xf32, #tpu.memory_space<vmem>>, vector<1x64x32xf32>
    %199 = vector.shape_cast %198 : vector<1x64x32xf32> to vector<64x32xf32>
    %200 = arith.truncf %199 : vector<64x32xf32> to vector<64x32xbf16>
    %c1_112 = arith.constant 1 : index
    %c0_113 = arith.constant 0 : index
    %201 = vector.load %arg15[%c1_112, %c0_113] : memref<2x32xf32, #tpu.memory_space<vmem>>, vector<1x32xf32>
    %202 = vector.shape_cast %201 : vector<1x32xf32> to vector<32xf32>
    %c1_114 = arith.constant 1 : index
    %c0_115 = arith.constant 0 : index
    %203 = vector.load %arg10[%c1_114, %c0_115] : memref<2x32xf32, #tpu.memory_space<vmem>>, vector<1x32xf32>
    %204 = vector.shape_cast %203 : vector<1x32xf32> to vector<32xf32>
    %c1_116 = arith.constant 1 : index
    %c0_117 = arith.constant 0 : index
    %205 = vector.load %arg11[%c1_116, %c0_117] : memref<2x32xf32, #tpu.memory_space<vmem>>, vector<1x32xf32>
    %206 = vector.shape_cast %205 : vector<1x32xf32> to vector<32xf32>
    %c1_118 = arith.constant 1 : index
    %c0_119 = arith.constant 0 : index
    %207 = vector.load %arg16[%c1_118, %c0_119] : memref<2x32xf32, #tpu.memory_space<vmem>>, vector<1x32xf32>
    %208 = vector.shape_cast %207 : vector<1x32xf32> to vector<32xf32>
    %c1_120 = arith.constant 1 : index
    %c0_121 = arith.constant 0 : index
    %209 = vector.load %arg17[%c1_120, %c0_121] : memref<2x32xf32, #tpu.memory_space<vmem>>, vector<1x32xf32>
    %210 = vector.shape_cast %209 : vector<1x32xf32> to vector<32xf32>
    %211 = arith.truncf %172 : vector<16x32xf32> to vector<16x32xbf16>
    %cst_122 = arith.constant dense<0.000000e+00> : vector<16x32xf32>
    %212 = tpu.matmul %211, %175, %cst_122 {dimension_numbers = #tpu.dot_dimension_numbers<[1], [0], [0], [1], [0, 0, 1, 1], [], []>} : vector<16x32xbf16>, vector<32x32xbf16>, vector<16x32xf32> -> vector<16x32xf32>
    %213 = vector.shape_cast %183 : vector<32xf32> to vector<1x32xf32>
    %214 = vector.broadcast %213 : vector<1x32xf32> to vector<16x32xf32>
    %215 = arith.addf %212, %214 : vector<16x32xf32>
    %cst_123 = arith.constant dense<0.000000e+00> : vector<16x32xf32>
    %216 = tpu.matmul %211, %178, %cst_123 {dimension_numbers = #tpu.dot_dimension_numbers<[1], [0], [0], [1], [0, 0, 1, 1], [], []>} : vector<16x32xbf16>, vector<32x32xbf16>, vector<16x32xf32> -> vector<16x32xf32>
    %217 = vector.shape_cast %185 : vector<32xf32> to vector<1x32xf32>
    %218 = vector.broadcast %217 : vector<1x32xf32> to vector<16x32xf32>
    %219 = arith.addf %216, %218 : vector<16x32xf32>
    %cst_124 = arith.constant dense<0.000000e+00> : vector<16x32xf32>
    %220 = tpu.matmul %211, %181, %cst_124 {dimension_numbers = #tpu.dot_dimension_numbers<[1], [0], [0], [1], [0, 0, 1, 1], [], []>} : vector<16x32xbf16>, vector<32x32xbf16>, vector<16x32xf32> -> vector<16x32xf32>
    %221 = vector.shape_cast %187 : vector<32xf32> to vector<1x32xf32>
    %222 = vector.broadcast %221 : vector<1x32xf32> to vector<16x32xf32>
    %223 = arith.addf %220, %222 : vector<16x32xf32>
    %224 = vector.shape_cast %215 : vector<16x32xf32> to vector<2x8x32xf32>
    %225 = vector.shape_cast %219 : vector<16x32xf32> to vector<2x8x32xf32>
    %226 = vector.shape_cast %223 : vector<16x32xf32> to vector<2x8x32xf32>
    %227 = vector.shape_cast %224 : vector<2x8x32xf32> to vector<1x2x8x32xf32>
    %228 = vector.broadcast %227 : vector<1x2x8x32xf32> to vector<4x2x8x32xf32>
    %229 = vector.broadcast %0 : vector<4x1x1x32xf32> to vector<4x2x8x32xf32>
    %230 = arith.mulf %228, %229 : vector<4x2x8x32xf32>
    %231 = arith.truncf %230 : vector<4x2x8x32xf32> to vector<4x2x8x32xbf16>
    %232 = vector.shape_cast %231 : vector<4x2x8x32xbf16> to vector<8x8x32xbf16>
    %233 = vector.shape_cast %226 : vector<2x8x32xf32> to vector<1x2x8x32xf32>
    %234 = vector.broadcast %233 : vector<1x2x8x32xf32> to vector<4x2x8x32xf32>
    %235 = vector.broadcast %1 : vector<4x1x1x32xf32> to vector<4x2x8x32xf32>
    %236 = arith.mulf %234, %235 : vector<4x2x8x32xf32>
    %237 = arith.truncf %236 : vector<4x2x8x32xf32> to vector<4x2x8x32xbf16>
    %238 = vector.shape_cast %237 : vector<4x2x8x32xbf16> to vector<8x8x32xbf16>
    %239 = arith.truncf %225 : vector<2x8x32xf32> to vector<2x8x32xbf16>
    %240 = vector.shape_cast %239 : vector<2x8x32xbf16> to vector<1x2x8x32xbf16>
    %241 = vector.shape_cast %240 : vector<1x2x8x32xbf16> to vector<1x2x8x32xbf16>
    %242 = vector.broadcast %241 : vector<1x2x8x32xbf16> to vector<4x2x8x32xbf16>
    %243 = vector.shape_cast %242 : vector<4x2x8x32xbf16> to vector<8x8x32xbf16>
    "tpu.trace_start"() <{level = 10 : i32, message = "bqd,bkd->bqk"}> : () -> ()
    %cst_125 = arith.constant dense<0.000000e+00> : vector<8x8x8xf32>
    %244 = tpu.matmul %232, %243, %cst_125 {dimension_numbers = #tpu.dot_dimension_numbers<[2], [2], [1], [1], [0, 0, 0, 1, 1, 1], [0], [0]>} : vector<8x8x32xbf16>, vector<8x8x32xbf16>, vector<8x8x8xf32> -> vector<8x8x8xf32>
    "tpu.trace_stop"() : () -> ()
    %cst_126 = arith.constant dense<0xFF800000> : vector<8x8xf32>
    %245 = vector.multi_reduction <maximumf>, %244, %cst_126 [2] : vector<8x8x8xf32> to vector<8x8xf32>
    %246 = vector.shape_cast %245 : vector<8x8xf32> to vector<8x8x1xf32>
    %247 = vector.broadcast %246 : vector<8x8x1xf32> to vector<8x8x8xf32>
    %248 = arith.subf %244, %247 : vector<8x8x8xf32>
    %249 = math.exp %248 : vector<8x8x8xf32>
    %cst_127 = arith.constant dense<0.000000e+00> : vector<8x8xf32>
    %250 = vector.multi_reduction <add>, %249, %cst_127 [2] : vector<8x8x8xf32> to vector<8x8xf32>
    %251 = vector.shape_cast %250 : vector<8x8xf32> to vector<8x8x1xf32>
    %252 = tpu.reciprocal %251 {approx = true} : vector<8x8x1xf32> -> vector<8x8x1xf32>
    %253 = vector.broadcast %252 : vector<8x8x1xf32> to vector<8x8x8xf32>
    %254 = arith.mulf %249, %253 : vector<8x8x8xf32>
    %255 = arith.truncf %254 : vector<8x8x8xf32> to vector<8x8x8xbf16>
    "tpu.trace_start"() <{level = 10 : i32, message = "bqk,bkd->bqd"}> : () -> ()
    %cst_128 = arith.constant dense<0.000000e+00> : vector<8x8x32xf32>
    %256 = tpu.matmul %255, %238, %cst_128 {dimension_numbers = #tpu.dot_dimension_numbers<[2], [1], [1], [2], [0, 0, 0, 1, 1, 2], [0], [0]>} : vector<8x8x8xbf16>, vector<8x8x32xbf16>, vector<8x8x32xf32> -> vector<8x8x32xf32>
    "tpu.trace_stop"() : () -> ()
    %257 = vector.extract_strided_slice %256 {offsets = [0, 0, 0], sizes = [2, 8, 32], strides = [1, 1, 1]} : vector<8x8x32xf32> to vector<2x8x32xf32>
    %258 = vector.extract_strided_slice %256 {offsets = [2, 0, 0], sizes = [2, 8, 32], strides = [1, 1, 1]} : vector<8x8x32xf32> to vector<2x8x32xf32>
    %259 = arith.addf %257, %258 : vector<2x8x32xf32>
    %260 = vector.extract_strided_slice %256 {offsets = [4, 0, 0], sizes = [2, 8, 32], strides = [1, 1, 1]} : vector<8x8x32xf32> to vector<2x8x32xf32>
    %261 = arith.addf %259, %260 : vector<2x8x32xf32>
    %262 = vector.extract_strided_slice %256 {offsets = [6, 0, 0], sizes = [2, 8, 32], strides = [1, 1, 1]} : vector<8x8x32xf32> to vector<2x8x32xf32>
    %263 = arith.addf %261, %262 : vector<2x8x32xf32>
    %264 = vector.shape_cast %263 : vector<2x8x32xf32> to vector<16x32xf32>
    %265 = arith.truncf %264 : vector<16x32xf32> to vector<16x32xbf16>
    %cst_129 = arith.constant dense<0.000000e+00> : vector<16x32xf32>
    %266 = tpu.matmul %265, %190, %cst_129 {dimension_numbers = #tpu.dot_dimension_numbers<[1], [0], [0], [1], [0, 0, 1, 1], [], []>} : vector<16x32xbf16>, vector<32x32xbf16>, vector<16x32xf32> -> vector<16x32xf32>
    %267 = vector.shape_cast %192 : vector<32xf32> to vector<1x32xf32>
    %268 = vector.broadcast %267 : vector<1x32xf32> to vector<16x32xf32>
    %269 = arith.addf %266, %268 : vector<16x32xf32>
    %270 = arith.addf %172, %269 : vector<16x32xf32>
    %cst_130 = arith.constant dense<0.000000e+00> : vector<16xf32>
    %271 = vector.multi_reduction <add>, %270, %cst_130 [1] : vector<16x32xf32> to vector<16xf32>
    %272 = vector.shape_cast %271 : vector<16xf32> to vector<16x1xf32>
    %cst_131 = arith.constant 3.200000e+01 : f32
    %273 = vector.broadcast %cst_131 : f32 to vector<16x1xf32>
    %274 = arith.divf %272, %273 : vector<16x1xf32>
    %275 = vector.broadcast %274 : vector<16x1xf32> to vector<16x32xf32>
    %276 = arith.subf %270, %275 : vector<16x32xf32>
    %277 = arith.mulf %276, %276 : vector<16x32xf32>
    %cst_132 = arith.constant dense<0.000000e+00> : vector<16xf32>
    %278 = vector.multi_reduction <add>, %277, %cst_132 [1] : vector<16x32xf32> to vector<16xf32>
    %279 = vector.shape_cast %278 : vector<16xf32> to vector<16x1xf32>
    %cst_133 = arith.constant 3.200000e+01 : f32
    %280 = vector.broadcast %cst_133 : f32 to vector<16x1xf32>
    %281 = arith.divf %279, %280 : vector<16x1xf32>
    %282 = vector.broadcast %274 : vector<16x1xf32> to vector<16x32xf32>
    %283 = arith.subf %270, %282 : vector<16x32xf32>
    %cst_134 = arith.constant 9.99999974E-6 : f32
    %284 = vector.broadcast %cst_134 : f32 to vector<16x1xf32>
    %285 = arith.addf %281, %284 : vector<16x1xf32>
    %286 = math.rsqrt %285 : vector<16x1xf32>
    %287 = vector.broadcast %286 : vector<16x1xf32> to vector<16x32xf32>
    %288 = arith.mulf %283, %287 : vector<16x32xf32>
    %289 = vector.shape_cast %204 : vector<32xf32> to vector<1x32xf32>
    %290 = vector.broadcast %289 : vector<1x32xf32> to vector<16x32xf32>
    %291 = arith.mulf %288, %290 : vector<16x32xf32>
    %292 = vector.shape_cast %206 : vector<32xf32> to vector<1x32xf32>
    %293 = vector.broadcast %292 : vector<1x32xf32> to vector<16x32xf32>
    %294 = arith.addf %291, %293 : vector<16x32xf32>
    %295 = arith.truncf %294 : vector<16x32xf32> to vector<16x32xbf16>
    %cst_135 = arith.constant dense<0.000000e+00> : vector<16x64xf32>
    %296 = tpu.matmul %295, %195, %cst_135 {dimension_numbers = #tpu.dot_dimension_numbers<[1], [0], [0], [1], [0, 0, 1, 1], [], []>} : vector<16x32xbf16>, vector<32x64xbf16>, vector<16x64xf32> -> vector<16x64xf32>
    %297 = vector.shape_cast %197 : vector<64xf32> to vector<1x64xf32>
    %298 = vector.broadcast %297 : vector<1x64xf32> to vector<16x64xf32>
    %299 = arith.addf %296, %298 : vector<16x64xf32>
    %cst_136 = arith.constant 0.000000e+00 : f32
    %300 = vector.broadcast %cst_136 : f32 to vector<16x64xf32>
    %301 = arith.maximumf %299, %300 : vector<16x64xf32>
    %302 = arith.truncf %301 : vector<16x64xf32> to vector<16x64xbf16>
    %cst_137 = arith.constant dense<0.000000e+00> : vector<16x32xf32>
    %303 = tpu.matmul %302, %200, %cst_137 {dimension_numbers = #tpu.dot_dimension_numbers<[1], [0], [0], [1], [0, 0, 1, 1], [], []>} : vector<16x64xbf16>, vector<64x32xbf16>, vector<16x32xf32> -> vector<16x32xf32>
    %304 = vector.shape_cast %202 : vector<32xf32> to vector<1x32xf32>
    %305 = vector.broadcast %304 : vector<1x32xf32> to vector<16x32xf32>
    %306 = arith.addf %303, %305 : vector<16x32xf32>
    %307 = arith.addf %294, %306 : vector<16x32xf32>
    %cst_138 = arith.constant dense<0.000000e+00> : vector<16xf32>
    %308 = vector.multi_reduction <add>, %307, %cst_138 [1] : vector<16x32xf32> to vector<16xf32>
    %309 = vector.shape_cast %308 : vector<16xf32> to vector<16x1xf32>
    %cst_139 = arith.constant 3.200000e+01 : f32
    %310 = vector.broadcast %cst_139 : f32 to vector<16x1xf32>
    %311 = arith.divf %309, %310 : vector<16x1xf32>
    %312 = vector.broadcast %311 : vector<16x1xf32> to vector<16x32xf32>
    %313 = arith.subf %307, %312 : vector<16x32xf32>
    %314 = arith.mulf %313, %313 : vector<16x32xf32>
    %cst_140 = arith.constant dense<0.000000e+00> : vector<16xf32>
    %315 = vector.multi_reduction <add>, %314, %cst_140 [1] : vector<16x32xf32> to vector<16xf32>
    %316 = vector.shape_cast %315 : vector<16xf32> to vector<16x1xf32>
    %cst_141 = arith.constant 3.200000e+01 : f32
    %317 = vector.broadcast %cst_141 : f32 to vector<16x1xf32>
    %318 = arith.divf %316, %317 : vector<16x1xf32>
    %319 = vector.broadcast %311 : vector<16x1xf32> to vector<16x32xf32>
    %320 = arith.subf %307, %319 : vector<16x32xf32>
    %cst_142 = arith.constant 9.99999974E-6 : f32
    %321 = vector.broadcast %cst_142 : f32 to vector<16x1xf32>
    %322 = arith.addf %318, %321 : vector<16x1xf32>
    %323 = math.rsqrt %322 : vector<16x1xf32>
    %324 = vector.broadcast %323 : vector<16x1xf32> to vector<16x32xf32>
    %325 = arith.mulf %320, %324 : vector<16x32xf32>
    %326 = vector.shape_cast %208 : vector<32xf32> to vector<1x32xf32>
    %327 = vector.broadcast %326 : vector<1x32xf32> to vector<16x32xf32>
    %328 = arith.mulf %325, %327 : vector<16x32xf32>
    %329 = vector.shape_cast %210 : vector<32xf32> to vector<1x32xf32>
    %330 = vector.broadcast %329 : vector<1x32xf32> to vector<16x32xf32>
    %331 = arith.addf %328, %330 : vector<16x32xf32>
    %332 = vector.shape_cast %331 : vector<16x32xf32> to vector<2x8x32xf32>
    %333 = vector.extract_strided_slice %332 {offsets = [0, 7, 0], sizes = [2, 1, 32], strides = [1, 1, 1]} : vector<2x8x32xf32> to vector<2x1x32xf32>
    %334 = vector.shape_cast %333 : vector<2x1x32xf32> to vector<2x32xf32>
    %335 = arith.truncf %334 : vector<2x32xf32> to vector<2x32xbf16>
    %c0_143 = arith.constant 0 : index
    %c0_144 = arith.constant 0 : index
    %336 = vector.load %arg18[%c0_143, %c0_144] : memref<32x4xf32, #tpu.memory_space<vmem>>, vector<32x4xf32>
    %337 = arith.truncf %336 : vector<32x4xf32> to vector<32x4xbf16>
    %cst_145 = arith.constant dense<0.000000e+00> : vector<2x4xf32>
    %338 = tpu.matmul %335, %337, %cst_145 {dimension_numbers = #tpu.dot_dimension_numbers<[1], [0], [0], [1], [0, 0, 1, 1], [], []>} : vector<2x32xbf16>, vector<32x4xbf16>, vector<2x4xf32> -> vector<2x4xf32>
    %c0_146 = arith.constant 0 : index
    %c0_147 = arith.constant 0 : index
    %339 = vector.load %arg19[%c0_146, %c0_147] : memref<1x4xf32, #tpu.memory_space<vmem>>, vector<1x4xf32>
    %340 = vector.shape_cast %339 : vector<1x4xf32> to vector<4xf32>
    %341 = vector.shape_cast %340 : vector<4xf32> to vector<1x4xf32>
    %342 = vector.broadcast %341 : vector<1x4xf32> to vector<2x4xf32>
    %343 = arith.addf %338, %342 : vector<2x4xf32>
    %c0_148 = arith.constant 0 : index
    %c0_149 = arith.constant 0 : index
    %344 = vector.load %arg20[%c0_148, %c0_149] : memref<2x4xf32, #tpu.memory_space<vmem>>, vector<2x4xf32>
    tpu.vector_store %arg20[%c0_148, %c0_149], %343 {strides = array<i32>} : memref<2x4xf32, #tpu.memory_space<vmem>>, vector<2x4xf32>,
    return
  }
}

</mosaic_0001>

<llo_original>
// kernel: tpu_custom_call.1
$region0: #{tpu_custom_call.1}
  #allocation0 [shape = 'u32[]', space=smem, size = 0x4, offset = 0x4, fixed_abs, tag = 'smem constant byte address 0x4 - core index']
  #allocation1 [shape = 'u32[144,128]{1,0:T(1,128)}', space=vmem, size = 0x12000, scoped, tag = 'internal scratch']
  %s0 = inlined_call_operand.vmem [shape: f32[16,16], index: 0, kind: input, shape index: {}]
  %s1 = inlined_call_operand.vmem [shape: f32[16,32], index: 1, kind: input, shape index: {}]
  %s2 = inlined_call_operand.vmem [shape: f32[4,1,1,32], index: 2, kind: input, shape index: {}]
  %s3 = inlined_call_operand.hbm [shape: f32[4,1,1,32], index: 3, kind: input, shape index: {}]
  %s4 = inlined_call_operand.hbm [shape: f32[16,32], index: 4, kind: input, shape index: {}]
  %s5 = inlined_call_operand.hbm [shape: f32[1,32], index: 5, kind: input, shape index: {}]
  %s6 = inlined_call_operand.vmem [shape: f32[2,3,32,32], index: 6, kind: input, shape index: {}]
  %s7 = inlined_call_operand.vmem [shape: f32[2,3,32], index: 7, kind: input, shape index: {}]
  %s8 = inlined_call_operand.hbm [shape: f32[2,32,32], index: 8, kind: input, shape index: {}]
  %s9 = inlined_call_operand.vmem [shape: f32[2,32], index: 9, kind: input, shape index: {}]
  %s10 = inlined_call_operand.hbm [shape: f32[2,32], index: 10, kind: input, shape index: {}]
  %s11 = inlined_call_operand.hbm [shape: f32[2,32], index: 11, kind: input, shape index: {}]
  %s12 = inlined_call_operand.hbm [shape: f32[2,32,64], index: 12, kind: input, shape index: {}]
  %s13 = inlined_call_operand.hbm [shape: f32[2,64], index: 13, kind: input, shape index: {}]
  %s14 = inlined_call_operand.vmem [shape: f32[2,64,32], index: 14, kind: input, shape index: {}]
  %s15 = inlined_call_operand.hbm [shape: f32[2,32], index: 15, kind: input, shape index: {}]
  %s16 = inlined_call_operand.vmem [shape: f32[2,32], index: 16, kind: input, shape index: {}]
  %s17 = inlined_call_operand.vmem [shape: f32[2,32], index: 17, kind: input, shape index: {}]
  %s18 = inlined_call_operand.vmem [shape: f32[32,4], index: 18, kind: input, shape index: {}]
  %s19 = inlined_call_operand.vmem [shape: f32[1,4], index: 19, kind: input, shape index: {}]
  %s20 = inlined_call_operand.hbm [shape: f32[2,4], index: 20, kind: output, shape index: {}]
  %s21 = sld [smem:[#allocation0]]
  $region126: #{tpu_custom_call.1} parent=0
    _
  %s23 = ssub.s32 1, %s21
  %s24 = scalar_select 0, %s23, %s21
  $region1: #{tpu_custom_call.1} parent=0
    #allocation2 [shape = 'u8[2048]{0}', space=vmem, size = 0x800, scoped, tag = 'input window, operand 3, single buffered']
    #allocation3 [shape = 's32[1]{0}', space=sflag, size = 0x4, scoped, tag = 'scoped memory for tpu_custom_call.1']
    #allocation4 [shape = 's32[1]{0}', space=sflag, size = 0x4, scoped, tag = 'scoped memory for tpu_custom_call.1']
    #allocation5 [shape = 'u8[8192]{0}', space=vmem, size = 0x2000, scoped, tag = 'input window, operand 4, single buffered']
    #allocation6 [shape = 's32[1]{0}', space=sflag, size = 0x4, scoped, tag = 'scoped memory for tpu_custom_call.1']
    #allocation7 [shape = 'u8[512]{0}', space=vmem, size = 0x400, scoped, tag = 'input window, operand 5, single buffered']
    #allocation8 [shape = 'u8[32768]{0}', space=vmem, size = 0x8000, scoped, tag = 'input window, operand 8, single buffered']
    #allocation9 [shape = 's32[1]{0}', space=sflag, size = 0x4, scoped, tag = 'scoped memory for tpu_custom_call.1']
    #allocation10 [shape = 'u8[1024]{0}', space=vmem, size = 0x400, scoped, tag = 'input window, operand 10, single buffered']
    #allocation11 [shape = 'u8[1024]{0}', space=vmem, size = 0x400, scoped, tag = 'input window, operand 11, single buffered']
    #allocation12 [shape = 's32[1]{0}', space=sflag, size = 0x4, scoped, tag = 'scoped memory for tpu_custom_call.1']
    #allocation13 [shape = 'u8[32768]{0}', space=vmem, size = 0x8000, scoped, tag = 'input window, operand 12, single buffered']
    #allocation14 [shape = 'u8[1024]{0}', space=vmem, size = 0x400, scoped, tag = 'input window, operand 13, single buffered']
    #allocation15 [shape = 's32[1]{0}', space=sflag, size = 0x4, scoped, tag = 'scoped memory for tpu_custom_call.1']
    #allocation16 [shape = 'u8[1024]{0}', space=vmem, size = 0x400, scoped, tag = 'input window, operand 15, single buffered']
    #allocation17 [shape = 'u8[1024]{0}', space=vmem, size = 0x400, scoped, tag = 'output window, operand 0, single buffered']
    %25 = vsyncpa [#allocation3], 0
    %26 = vsyncpa [#allocation6], 0
    %27 = vsyncpa [#allocation9], 0
    %28 = vsyncpa [#allocation12], 0
    %29 = vsyncpa [#allocation15], 0
    %30 = vsyncpa [#allocation4], 0
    // Predicated region
    $region2: #{tpu_custom_call.1} parent=1 // pred_check
      _
    $region3: #{tpu_custom_call.1} parent=1 // pred_check_branch
      %32 = sbr.rel (0) target = $region5
    $region4: #{tpu_custom_call.1} parent=1 // pred_region
      _
    $region5: #{tpu_custom_call.1} parent=1 // pred_fallthru
      _
    // Predicated region
    $region6: #{tpu_custom_call.1} parent=1 // pred_check
      _
    $region7: #{tpu_custom_call.1} parent=1 // pred_check_branch
      %34 = sbr.rel (0) target = $region9
    $region8: #{tpu_custom_call.1} parent=1 // pred_region
      _
    $region9: #{tpu_custom_call.1} parent=1 // pred_fallthru
      _
    // Predicated region
    $region10: #{tpu_custom_call.1} parent=1 // pred_check
      _
    $region11: #{tpu_custom_call.1} parent=1 // pred_check_branch
      %36 = sbr.rel (0) target = $region13
    $region12: #{tpu_custom_call.1} parent=1 // pred_region
      _
    $region13: #{tpu_custom_call.1} parent=1 // pred_fallthru
      _
    // Predicated region
    $region14: #{tpu_custom_call.1} parent=1 // pred_check
      _
    $region15: #{tpu_custom_call.1} parent=1 // pred_check_branch
      %38 = sbr.rel (0) target = $region17
    $region16: #{tpu_custom_call.1} parent=1 // pred_region
      %s40 = ssub.s32 64, 64
      %41 = vsyncadd [#allocation3], %s40
      %s42 = sshll.u32 [#allocation2], 4
      %s43 = int_to_ptr.vmem [resolvable:$true] %s42
      %48 = dma.hbm_to_vmem [thread:$0]  %s3, 64, %s43, [#allocation3], 16, 16, 1
    $region17: #{tpu_custom_call.1} parent=1 // pred_fallthru
      _
    // Predicated region
    $region18: #{tpu_custom_call.1} parent=1 // pred_check
      _
    $region19: #{tpu_custom_call.1} parent=1 // pred_check_branch
      %50 = sbr.rel (0) target = $region21
    $region20: #{tpu_custom_call.1} parent=1 // pred_region
      %s52 = ssub.s32 256, 256
      %53 = vsyncadd [#allocation6], %s52
      %s54 = sshll.u32 [#allocation5], 4
      %s55 = int_to_ptr.vmem [resolvable:$true] %s54
      %60 = dma.hbm_to_vmem [thread:$0]  %s4, 256, %s55, [#allocation6], 128, 128, 8
    $region21: #{tpu_custom_call.1} parent=1 // pred_fallthru
      _
    // Predicated region
    $region22: #{tpu_custom_call.1} parent=1 // pred_check
      _
    $region23: #{tpu_custom_call.1} parent=1 // pred_check_branch
      %62 = sbr.rel (0) target = $region25
    $region24: #{tpu_custom_call.1} parent=1 // pred_region
      %s64 = ssub.s32 16, 16
      %65 = vsyncadd [#allocation6], %s64
      %s67 = sshll.u32 [#allocation7], 4
      %s68 = int_to_ptr.vmem [resolvable:$true] %s67
      %70 = dma.hbm_to_vmem [thread:$0]  %s5, 16, %s68, [#allocation6]
    $region25: #{tpu_custom_call.1} parent=1 // pred_fallthru
      _
    // Predicated region
    $region26: #{tpu_custom_call.1} parent=1 // pred_check
      _
    $region27: #{tpu_custom_call.1} parent=1 // pred_check_branch
      %72 = sbr.rel (0) target = $region29
    $region28: #{tpu_custom_call.1} parent=1 // pred_region
      _
    $region29: #{tpu_custom_call.1} parent=1 // pred_fallthru
      _
    // Predicated region
    $region30: #{tpu_custom_call.1} parent=1 // pred_check
      _
    $region31: #{tpu_custom_call.1} parent=1 // pred_check_branch
      %74 = sbr.rel (0) target = $region33
    $region32: #{tpu_custom_call.1} parent=1 // pred_region
      _
    $region33: #{tpu_custom_call.1} parent=1 // pred_fallthru
      _
    // Predicated region
    $region34: #{tpu_custom_call.1} parent=1 // pred_check
      _
    $region35: #{tpu_custom_call.1} parent=1 // pred_check_branch
      %76 = sbr.rel (0) target = $region37
    $region36: #{tpu_custom_call.1} parent=1 // pred_region
      %s78 = ssub.s32 1024, 1024
      %79 = vsyncadd [#allocation9], %s78
      %s80 = sshll.u32 [#allocation8], 4
      %s81 = int_to_ptr.vmem [resolvable:$true] %s80
      %86 = dma.hbm_to_vmem [thread:$0]  %s8, 1024, %s81, [#allocation9], 128, 128, 8
    $region37: #{tpu_custom_call.1} parent=1 // pred_fallthru
      _
    // Predicated region
    $region38: #{tpu_custom_call.1} parent=1 // pred_check
      _
    $region39: #{tpu_custom_call.1} parent=1 // pred_check_branch
      %88 = sbr.rel (0) target = $region41
    $region40: #{tpu_custom_call.1} parent=1 // pred_region
      _
    $region41: #{tpu_custom_call.1} parent=1 // pred_fallthru
      _
    // Predicated region
    $region42: #{tpu_custom_call.1} parent=1 // pred_check
      _
    $region43: #{tpu_custom_call.1} parent=1 // pred_check_branch
      %90 = sbr.rel (0) target = $region45
    $region44: #{tpu_custom_call.1} parent=1 // pred_region
      %s92 = ssub.s32 32, 32
      %93 = vsyncadd [#allocation9], %s92
      %s95 = sshll.u32 [#allocation10], 4
      %s96 = int_to_ptr.vmem [resolvable:$true] %s95
      %98 = dma.hbm_to_vmem [thread:$0]  %s10, 32, %s96, [#allocation9]
    $region45: #{tpu_custom_call.1} parent=1 // pred_fallthru
      _
    // Predicated region
    $region46: #{tpu_custom_call.1} parent=1 // pred_check
      _
    $region47: #{tpu_custom_call.1} parent=1 // pred_check_branch
      %100 = sbr.rel (0) target = $region49
    $region48: #{tpu_custom_call.1} parent=1 // pred_region
      %s102 = ssub.s32 32, 32
      %103 = vsyncadd [#allocation12], %s102
      %s105 = sshll.u32 [#allocation11], 4
      %s106 = int_to_ptr.vmem [resolvable:$true] %s105
      %108 = dma.hbm_to_vmem [thread:$0]  %s11, 32, %s106, [#allocation12]
    $region49: #{tpu_custom_call.1} parent=1 // pred_fallthru
      _
    // Predicated region
    $region50: #{tpu_custom_call.1} parent=1 // pred_check
      _
    $region51: #{tpu_custom_call.1} parent=1 // pred_check_branch
      %110 = sbr.rel (0) target = $region53
    $region52: #{tpu_custom_call.1} parent=1 // pred_region
      %s112 = ssub.s32 1024, 1024
      %113 = vsyncadd [#allocation12], %s112
      %s114 = sshll.u32 [#allocation13], 4
      %s115 = int_to_ptr.vmem [resolvable:$true] %s114
      %120 = dma.hbm_to_vmem [thread:$0]  %s12, 1024, %s115, [#allocation12], 128, 128, 8
    $region53: #{tpu_custom_call.1} parent=1 // pred_fallthru
      _
    // Predicated region
    $region54: #{tpu_custom_call.1} parent=1 // pred_check
      _
    $region55: #{tpu_custom_call.1} parent=1 // pred_check_branch
      %122 = sbr.rel (0) target = $region57
    $region56: #{tpu_custom_call.1} parent=1 // pred_region
      %s124 = ssub.s32 32, 32
      %125 = vsyncadd [#allocation15], %s124
      %s127 = sshll.u32 [#allocation14], 4
      %s128 = int_to_ptr.vmem [resolvable:$true] %s127
      %130 = dma.hbm_to_vmem [thread:$0]  %s13, 32, %s128, [#allocation15]
    $region57: #{tpu_custom_call.1} parent=1 // pred_fallthru
      _
    // Predicated region
    $region58: #{tpu_custom_call.1} parent=1 // pred_check
      _
    $region59: #{tpu_custom_call.1} parent=1 // pred_check_branch
      %132 = sbr.rel (0) target = $region61
    $region60: #{tpu_custom_call.1} parent=1 // pred_region
      _
    $region61: #{tpu_custom_call.1} parent=1 // pred_fallthru
      _
    // Predicated region
    $region62: #{tpu_custom_call.1} parent=1 // pred_check
      _
    $region63: #{tpu_custom_call.1} parent=1 // pred_check_branch
      %134 = sbr.rel (0) target = $region65
    $region64: #{tpu_custom_call.1} parent=1 // pred_region
      %s136 = ssub.s32 32, 32
      %137 = vsyncadd [#allocation15], %s136
      %s139 = sshll.u32 [#allocation16], 4
      %s140 = int_to_ptr.vmem [resolvable:$true] %s139
      %142 = dma.hbm_to_vmem [thread:$0]  %s15, 32, %s140, [#allocation15]
    $region65: #{tpu_custom_call.1} parent=1 // pred_fallthru
      _
    // Predicated region
    $region66: #{tpu_custom_call.1} parent=1 // pred_check
      _
    $region67: #{tpu_custom_call.1} parent=1 // pred_check_branch
      %144 = sbr.rel (0) target = $region69
    $region68: #{tpu_custom_call.1} parent=1 // pred_region
      _
    $region69: #{tpu_custom_call.1} parent=1 // pred_fallthru
      _
    // Predicated region
    $region70: #{tpu_custom_call.1} parent=1 // pred_check
      _
    $region71: #{tpu_custom_call.1} parent=1 // pred_check_branch
      %146 = sbr.rel (0) target = $region73
    $region72: #{tpu_custom_call.1} parent=1 // pred_region
      _
    $region73: #{tpu_custom_call.1} parent=1 // pred_fallthru
      _
    // Predicated region
    $region74: #{tpu_custom_call.1} parent=1 // pred_check
      _
    $region75: #{tpu_custom_call.1} parent=1 // pred_check_branch
      %148 = sbr.rel (0) target = $region77
    $region76: #{tpu_custom_call.1} parent=1 // pred_region
      _
    $region77: #{tpu_custom_call.1} parent=1 // pred_fallthru
      _
    // Predicated region
    $region78: #{tpu_custom_call.1} parent=1 // pred_check
      _
    $region79: #{tpu_custom_call.1} parent=1 // pred_check_branch
      %150 = sbr.rel (0) target = $region81
    $region80: #{tpu_custom_call.1} parent=1 // pred_region
      _
    $region81: #{tpu_custom_call.1} parent=1 // pred_fallthru
      _
    // Predicated region
    $region82: #{tpu_custom_call.1} parent=1 // pred_check
      _
    $region83: #{tpu_custom_call.1} parent=1 // pred_check_branch
      %152 = sbr.rel (0) target = $region85
    $region84: #{tpu_custom_call.1} parent=1 // pred_region
      %153 = dma.done [#allocation3], 64
    $region85: #{tpu_custom_call.1} parent=1 // pred_fallthru
      _
    // Predicated region
    $region86: #{tpu_custom_call.1} parent=1 // pred_check
      _
    $region87: #{tpu_custom_call.1} parent=1 // pred_check_branch
      %155 = sbr.rel (0) target = $region89
    $region88: #{tpu_custom_call.1} parent=1 // pred_region
      %156 = dma.done [#allocation6], 256
    $region89: #{tpu_custom_call.1} parent=1 // pred_fallthru
      _
    // Predicated region
    $region90: #{tpu_custom_call.1} parent=1 // pred_check
      _
    $region91: #{tpu_custom_call.1} parent=1 // pred_check_branch
      %158 = sbr.rel (0) target = $region93
    $region92: #{tpu_custom_call.1} parent=1 // pred_region
      %159 = dma.done [#allocation6], 16
    $region93: #{tpu_custom_call.1} parent=1 // pred_fallthru
      _
    // Predicated region
    $region94: #{tpu_custom_call.1} parent=1 // pred_check
      _
    $region95: #{tpu_custom_call.1} parent=1 // pred_check_branch
      %161 = sbr.rel (0) target = $region97
    $region96: #{tpu_custom_call.1} parent=1 // pred_region
      %162 = dma.done [#allocation9], 1024
    $region97: #{tpu_custom_call.1} parent=1 // pred_fallthru
      _
    // Predicated region
    $region98: #{tpu_custom_call.1} parent=1 // pred_check
      _
    $region99: #{tpu_custom_call.1} parent=1 // pred_check_branch
      %164 = sbr.rel (0) target = $region101
    $region100: #{tpu_custom_call.1} parent=1 // pred_region
      %165 = dma.done [#allocation9], 32
    $region101: #{tpu_custom_call.1} parent=1 // pred_fallthru
      _
    // Predicated region
    $region102: #{tpu_custom_call.1} parent=1 // pred_check
      _
    $region103: #{tpu_custom_call.1} parent=1 // pred_check_branch
      %167 = sbr.rel (0) target = $region105
    $region104: #{tpu_custom_call.1} parent=1 // pred_region
      %168 = dma.done [#allocation12], 32
    $region105: #{tpu_custom_call.1} parent=1 // pred_fallthru
      _
    // Predicated region
    $region106: #{tpu_custom_call.1} parent=1 // pred_check
      _
    $region107: #{tpu_custom_call.1} parent=1 // pred_check_branch
      %170 = sbr.rel (0) target = $region109
    $region108: #{tpu_custom_call.1} parent=1 // pred_region
      %171 = dma.done [#allocation12], 1024
    $region109: #{tpu_custom_call.1} parent=1 // pred_fallthru
      _
    // Predicated region
    $region110: #{tpu_custom_call.1} parent=1 // pred_check
      _
    $region111: #{tpu_custom_call.1} parent=1 // pred_check_branch
      %173 = sbr.rel (0) target = $region113
    $region112: #{tpu_custom_call.1} parent=1 // pred_region
      %174 = dma.done [#allocation15], 32
    $region113: #{tpu_custom_call.1} parent=1 // pred_fallthru
      _
    // Predicated region
    $region114: #{tpu_custom_call.1} parent=1 // pred_check
      _
    $region115: #{tpu_custom_call.1} parent=1 // pred_check_branch
      %176 = sbr.rel (0) target = $region117
    $region116: #{tpu_custom_call.1} parent=1 // pred_region
      %177 = dma.done [#allocation15], 32
    $region117: #{tpu_custom_call.1} parent=1 // pred_fallthru
      _
    %v179 = vld [vmem:[%s2] sm:$0x1]
    %v180 = vld [vmem:[%s2 + $0x1] sm:$0x1]
    %v181 = vld [vmem:[%s2 + $0x2] sm:$0x1]
    %v182 = vld [vmem:[%s2 + $0x3] sm:$0x1]
    %v183 = vld [vmem:[#allocation2] sm:$0x1]
    %v184 = vld [vmem:[#allocation2 + $0x1] sm:$0x1]
    %v185 = vld [vmem:[#allocation2 + $0x2] sm:$0x1]
    %v186 = vld [vmem:[#allocation2 + $0x3] sm:$0x1]
    %v187 = vld [vmem:[%s0] sm:$0xff]
    %v188 = vld [vmem:[%s0 + $0x8] sm:$0xff]
    %v189 = vpack.c.bf16 %v188, %v187
    %v190 = vld [vmem:[#allocation5] sm:$0xff]
    %v191 = vld [vmem:[#allocation5 + $0x8] sm:$0xff]
    %v192 = vpack.c.bf16 %v191, %v190
    %v193 = vld [vmem:[#allocation7] sm:$0x1]
    %v195 = vlaneseq
    %v196 = vshrl.u32 %v195, 7
    %v197 = vsub.s32 0, %v196
    %v198 = vrot.slane %v193, %v197
    %vm200 = vcmask 130048
    %v202 = vsel %vm200, %v189, 0
    %204 = vmatprep.subr.bf16.mxu0 0
    %205 = vmatpush1.bf16.msra.mxu0 %v192
    %206 = vmatprep.subr.bf16.mxu0 0
    %207 = vmatpush1.bf16.msra.mxu0 0
    %208 = vmatprep.subr.bf16.mxu0 0
    %209 = vmatpush1.bf16.msra.mxu0 0
    %210 = vmatprep.subr.bf16.mxu0 0
    %211 = vmatpush1.bf16.msra.mxu0 0
    %212 = vmatprep.subr.bf16.mxu0 0
    %213 = vmatpush1.bf16.msra.mxu0 0
    %214 = vmatprep.subr.bf16.mxu0 0
    %215 = vmatpush1.bf16.msra.mxu0 0
    %216 = vmatprep.subr.bf16.mxu0 0
    %217 = vmatpush1.bf16.msra.mxu0 0
    %218 = vmatprep.subr.bf16.mxu0 0
    %219 = vmatpush1.bf16.msra.mxu0 0
    %220 = vmatprep.subr.bf16.mxu0 0
    %221 = vmatpush1.bf16.msra.mxu0 0
    %222 = vmatprep.subr.bf16.mxu0 0
    %223 = vmatpush1.bf16.msra.mxu0 0
    %224 = vmatprep.subr.bf16.mxu0 0
    %225 = vmatpush1.bf16.msra.mxu0 0
    %226 = vmatprep.subr.bf16.mxu0 0
    %227 = vmatpush1.bf16.msra.mxu0 0
    %228 = vmatprep.subr.bf16.mxu0 0
    %229 = vmatpush1.bf16.msra.mxu0 0
    %230 = vmatprep.subr.bf16.mxu0 0
    %231 = vmatpush1.bf16.msra.mxu0 0
    %232 = vmatprep.subr.bf16.mxu0 0
    %233 = vmatpush1.bf16.msra.mxu0 0
    %234 = vmatprep.subr.bf16.mxu0 0
    %235 = vmatpush1.bf16.msra.mxu0 0
    %236 = vmatprep.mubr.bf16.mxu0 0
    %237 = vmatmul.mubr.bf16.gmra.mrb[0].mxu0 %v202
    %v238 = vpop.f32.mrb[0].mxu0
    %v239 = vadd.f32 %v198, %v238
    %v240 = vpop.f32.mrb[0].mxu0
    %v241 = vpop.f32.mrb[0].mxu0
    %v242 = vadd.f32 %v198, %v241
    %v243 = vpop.f32.mrb[0].mxu0
    %244 = vdwg.mxu0
    %v245 = vld [vmem:[%s1] sm:$0xff]
    %v246 = vld [vmem:[%s1 + $0x8] sm:$0xff]
    %v247 = vadd.f32 %v239, %v245
    %v248 = vadd.f32 %v242, %v246
    %v249 = vld [vmem:[%s6] sm:$0xff]
    %v250 = vld [vmem:[%s6 + $0x8] sm:$0xff]
    %v251 = vld [vmem:[%s6 + $0x10] sm:$0xff]
    %v252 = vld [vmem:[%s6 + $0x18] sm:$0xff]
    %v253 = vpack.c.bf16 %v250, %v249
    %v254 = vpack.c.bf16 %v252, %v251
    %s255 = scalar_lea.vmem %s6, 32
    %v256 = vld [vmem:[%s255] sm:$0xff]
    %v257 = vld [vmem:[%s255 + $0x8] sm:$0xff]
    %v258 = vld [vmem:[%s255 + $0x10] sm:$0xff]
    %v259 = vld [vmem:[%s255 + $0x18] sm:$0xff]
    %v260 = vpack.c.bf16 %v257, %v256
    %v261 = vpack.c.bf16 %v259, %v258
    %s262 = scalar_lea.vmem %s6, 64
    %v263 = vld [vmem:[%s262] sm:$0xff]
    %v264 = vld [vmem:[%s262 + $0x8] sm:$0xff]
    %v265 = vld [vmem:[%s262 + $0x10] sm:$0xff]
    %v266 = vld [vmem:[%s262 + $0x18] sm:$0xff]
    %v267 = vpack.c.bf16 %v264, %v263
    %v268 = vpack.c.bf16 %v266, %v265
    %v269 = vld [vmem:[%s7] sm:$0x1]
    %v270 = vld [vmem:[%s7 + $0x1] sm:$0x1]
    %v271 = vld [vmem:[%s7 + $0x2] sm:$0x1]
    %v272 = vld [vmem:[#allocation8] sm:$0xff]
    %v273 = vld [vmem:[#allocation8 + $0x8] sm:$0xff]
    %v274 = vld [vmem:[#allocation8 + $0x10] sm:$0xff]
    %v275 = vld [vmem:[#allocation8 + $0x18] sm:$0xff]
    %v276 = vpack.c.bf16 %v273, %v272
    %v277 = vpack.c.bf16 %v275, %v274
    %v278 = vld [vmem:[%s9] sm:$0x1]
    %v279 = vld [vmem:[#allocation13] sm:$0xff]
    %v280 = vld [vmem:[#allocation13 + $0x8] sm:$0xff]
    %v281 = vld [vmem:[#allocation13 + $0x10] sm:$0xff]
    %v282 = vld [vmem:[#allocation13 + $0x18] sm:$0xff]
    %v283 = vpack.c.bf16 %v280, %v279
    %v284 = vpack.c.bf16 %v282, %v281
    %v285 = vld [vmem:[#allocation14] sm:$0x1]
    %v286 = vld [vmem:[%s14] sm:$0xff]
    %v287 = vld [vmem:[%s14 + $0x8] sm:$0xff]
    %v288 = vld [vmem:[%s14 + $0x10] sm:$0xff]
    %v289 = vld [vmem:[%s14 + $0x18] sm:$0xff]
    %v290 = vld [vmem:[%s14 + $0x20] sm:$0xff]
    %v291 = vld [vmem:[%s14 + $0x28] sm:$0xff]
    %v292 = vld [vmem:[%s14 + $0x30] sm:$0xff]
    %v293 = vld [vmem:[%s14 + $0x38] sm:$0xff]
    %v294 = vpack.c.bf16 %v287, %v286
    %v295 = vpack.c.bf16 %v289, %v288
    %v296 = vpack.c.bf16 %v291, %v290
    %v297 = vpack.c.bf16 %v293, %v292
    %v298 = vld [vmem:[#allocation16] sm:$0x1]
    %v299 = vld [vmem:[#allocation10] sm:$0x1]
    %v300 = vld [vmem:[#allocation11] sm:$0x1]
    %v301 = vld [vmem:[%s16] sm:$0x1]
    %v302 = vld [vmem:[%s17] sm:$0x1]
    %v303 = vpack.c.bf16 %v248, %v247
    %v304 = vlaneseq
    %v305 = vshrl.u32 %v304, 7
    %v306 = vsub.s32 0, %v305
    %v307 = vrot.slane %v269, %v306
    %vm308 = vcmask 261120
    %v310 = vsel %vm308, %v303, 0
    %312 = vmatprep.subr.bf16.mxu0 0
    %313 = vmatpush1.bf16.msra.mxu0 %v253
    %314 = vmatprep.subr.bf16.mxu0 0
    %315 = vmatpush1.bf16.msra.mxu0 %v254
    %316 = vmatprep.subr.bf16.mxu0 0
    %317 = vmatpush1.bf16.msra.mxu0 0
    %318 = vmatprep.subr.bf16.mxu0 0
    %319 = vmatpush1.bf16.msra.mxu0 0
    %320 = vmatprep.subr.bf16.mxu0 0
    %321 = vmatpush1.bf16.msra.mxu0 0
    %322 = vmatprep.subr.bf16.mxu0 0
    %323 = vmatpush1.bf16.msra.mxu0 0
    %324 = vmatprep.subr.bf16.mxu0 0
    %325 = vmatpush1.bf16.msra.mxu0 0
    %326 = vmatprep.subr.bf16.mxu0 0
    %327 = vmatpush1.bf16.msra.mxu0 0
    %328 = vmatprep.subr.bf16.mxu0 0
    %329 = vmatpush1.bf16.msra.mxu0 0
    %330 = vmatprep.subr.bf16.mxu0 0
    %331 = vmatpush1.bf16.msra.mxu0 0
    %332 = vmatprep.subr.bf16.mxu0 0
    %333 = vmatpush1.bf16.msra.mxu0 0
    %334 = vmatprep.subr.bf16.mxu0 0
    %335 = vmatpush1.bf16.msra.mxu0 0
    %336 = vmatprep.subr.bf16.mxu0 0
    %337 = vmatpush1.bf16.msra.mxu0 0
    %338 = vmatprep.subr.bf16.mxu0 0
    %339 = vmatpush1.bf16.msra.mxu0 0
    %340 = vmatprep.subr.bf16.mxu0 0
    %341 = vmatpush1.bf16.msra.mxu0 0
    %342 = vmatprep.subr.bf16.mxu0 0
    %343 = vmatpush1.bf16.msra.mxu0 0
    %344 = vmatprep.mubr.bf16.mxu0 0
    %345 = vmatmul.mubr.bf16.gmra.mrb[0].mxu0 %v310
    %v346 = vpop.f32.mrb[0].mxu0
    %v347 = vadd.f32 %v307, %v346
    %v348 = vpop.f32.mrb[0].mxu0
    %v349 = vpop.f32.mrb[0].mxu0
    %v350 = vadd.f32 %v307, %v349
    %v351 = vpop.f32.mrb[0].mxu0
    %352 = vdwg.mxu0
    %v353 = vlaneseq
    %v354 = vshrl.u32 %v353, 7
    %v355 = vsub.s32 0, %v354
    %v356 = vrot.slane %v270, %v355
    %357 = vmatprep.subr.bf16.mxu0 0
    %358 = vmatpush1.bf16.msra.mxu0 %v260
    %359 = vmatprep.subr.bf16.mxu0 0
    %360 = vmatpush1.bf16.msra.mxu0 %v261
    %361 = vmatprep.subr.bf16.mxu0 0
    %362 = vmatpush1.bf16.msra.mxu0 0
    %363 = vmatprep.subr.bf16.mxu0 0
    %364 = vmatpush1.bf16.msra.mxu0 0
    %365 = vmatprep.subr.bf16.mxu0 0
    %366 = vmatpush1.bf16.msra.mxu0 0
    %367 = vmatprep.subr.bf16.mxu0 0
    %368 = vmatpush1.bf16.msra.mxu0 0
    %369 = vmatprep.subr.bf16.mxu0 0
    %370 = vmatpush1.bf16.msra.mxu0 0
    %371 = vmatprep.subr.bf16.mxu0 0
    %372 = vmatpush1.bf16.msra.mxu0 0
    %373 = vmatprep.subr.bf16.mxu0 0
    %374 = vmatpush1.bf16.msra.mxu0 0
    %375 = vmatprep.subr.bf16.mxu0 0
    %376 = vmatpush1.bf16.msra.mxu0 0
    %377 = vmatprep.subr.bf16.mxu0 0
    %378 = vmatpush1.bf16.msra.mxu0 0
    %379 = vmatprep.subr.bf16.mxu0 0
    %380 = vmatpush1.bf16.msra.mxu0 0
    %381 = vmatprep.subr.bf16.mxu0 0
    %382 = vmatpush1.bf16.msra.mxu0 0
    %383 = vmatprep.subr.bf16.mxu0 0
    %384 = vmatpush1.bf16.msra.mxu0 0
    %385 = vmatprep.subr.bf16.mxu0 0
    %386 = vmatpush1.bf16.msra.mxu0 0
    %387 = vmatprep.subr.bf16.mxu0 0
    %388 = vmatpush1.bf16.msra.mxu0 0
    %389 = vmatprep.mubr.bf16.mxu0 0
    %390 = vmatmul.mubr.bf16.gmra.mrb[0].mxu0 %v310
    %v391 = vpop.f32.mrb[0].mxu0
    %v392 = vadd.f32 %v356, %v391
    %v393 = vpop.f32.mrb[0].mxu0
    %v394 = vpop.f32.mrb[0].mxu0
    %v395 = vadd.f32 %v356, %v394
    %v396 = vpop.f32.mrb[0].mxu0
    %397 = vdwg.mxu0
    %v398 = vlaneseq
    %v399 = vshrl.u32 %v398, 7
    %v400 = vsub.s32 0, %v399
    %v401 = vrot.slane %v271, %v400
    %402 = vmatprep.subr.bf16.mxu0 0
    %403 = vmatpush1.bf16.msra.mxu0 %v267
    %404 = vmatprep.subr.bf16.mxu0 0
    %405 = vmatpush1.bf16.msra.mxu0 %v268
    %406 = vmatprep.subr.bf16.mxu0 0
    %407 = vmatpush1.bf16.msra.mxu0 0
    %408 = vmatprep.subr.bf16.mxu0 0
    %409 = vmatpush1.bf16.msra.mxu0 0
    %410 = vmatprep.subr.bf16.mxu0 0
    %411 = vmatpush1.bf16.msra.mxu0 0
    %412 = vmatprep.subr.bf16.mxu0 0
    %413 = vmatpush1.bf16.msra.mxu0 0
    %414 = vmatprep.subr.bf16.mxu0 0
    %415 = vmatpush1.bf16.msra.mxu0 0
    %416 = vmatprep.subr.bf16.mxu0 0
    %417 = vmatpush1.bf16.msra.mxu0 0
    %418 = vmatprep.subr.bf16.mxu0 0
    %419 = vmatpush1.bf16.msra.mxu0 0
    %420 = vmatprep.subr.bf16.mxu0 0
    %421 = vmatpush1.bf16.msra.mxu0 0
    %422 = vmatprep.subr.bf16.mxu0 0
    %423 = vmatpush1.bf16.msra.mxu0 0
    %424 = vmatprep.subr.bf16.mxu0 0
    %425 = vmatpush1.bf16.msra.mxu0 0
    %426 = vmatprep.subr.bf16.mxu0 0
    %427 = vmatpush1.bf16.msra.mxu0 0
    %428 = vmatprep.subr.bf16.mxu0 0
    %429 = vmatpush1.bf16.msra.mxu0 0
    %430 = vmatprep.subr.bf16.mxu0 0
    %431 = vmatpush1.bf16.msra.mxu0 0
    %432 = vmatprep.subr.bf16.mxu0 0
    %433 = vmatpush1.bf16.msra.mxu0 0
    %434 = vmatprep.mubr.bf16.mxu0 0
    %435 = vmatmul.mubr.bf16.gmra.mrb[0].mxu0 %v310
    %v436 = vpop.f32.mrb[0].mxu0
    %v437 = vadd.f32 %v401, %v436
    %v438 = vpop.f32.mrb[0].mxu0
    %v439 = vpop.f32.mrb[0].mxu0
    %v440 = vadd.f32 %v401, %v439
    %v441 = vpop.f32.mrb[0].mxu0
    %442 = vdwg.mxu0
    %v447 = vlaneseq
    %v448 = vshrl.u32 %v447, 7
    %v449 = vsub.s32 0, %v448
    %v450 = vrot.slane %v179, %v449
    %v451 = vlaneseq
    %v452 = vshrl.u32 %v451, 7
    %v453 = vsub.s32 0, %v452
    %v454 = vrot.slane %v180, %v453
    %v455 = vlaneseq
    %v456 = vshrl.u32 %v455, 7
    %v457 = vsub.s32 0, %v456
    %v458 = vrot.slane %v181, %v457
    %v459 = vlaneseq
    %v460 = vshrl.u32 %v459, 7
    %v461 = vsub.s32 0, %v460
    %v462 = vrot.slane %v182, %v461
    %v467 = vmul.f32 %v347, %v450
    %v468 = vmul.f32 %v350, %v450
    %v469 = vmul.f32 %v347, %v454
    %v470 = vmul.f32 %v350, %v454
    %v471 = vmul.f32 %v347, %v458
    %v472 = vmul.f32 %v350, %v458
    %v473 = vmul.f32 %v347, %v462
    %v474 = vmul.f32 %v350, %v462
    %v475 = vpack.c.bf16 %v467, %v467
    %v476 = vpack.c.bf16 %v468, %v468
    %v477 = vpack.c.bf16 %v469, %v469
    %v478 = vpack.c.bf16 %v470, %v470
    %v479 = vpack.c.bf16 %v471, %v471
    %v480 = vpack.c.bf16 %v472, %v472
    %v481 = vpack.c.bf16 %v473, %v473
    %v482 = vpack.c.bf16 %v474, %v474
    %v487 = vlaneseq
    %v488 = vshrl.u32 %v487, 7
    %v489 = vsub.s32 0, %v488
    %v490 = vrot.slane %v183, %v489
    %v491 = vlaneseq
    %v492 = vshrl.u32 %v491, 7
    %v493 = vsub.s32 0, %v492
    %v494 = vrot.slane %v184, %v493
    %v495 = vlaneseq
    %v496 = vshrl.u32 %v495, 7
    %v497 = vsub.s32 0, %v496
    %v498 = vrot.slane %v185, %v497
    %v499 = vlaneseq
    %v500 = vshrl.u32 %v499, 7
    %v501 = vsub.s32 0, %v500
    %v502 = vrot.slane %v186, %v501
    %v507 = vmul.f32 %v437, %v490
    %v508 = vmul.f32 %v440, %v490
    %v509 = vmul.f32 %v437, %v494
    %v510 = vmul.f32 %v440, %v494
    %v511 = vmul.f32 %v437, %v498
    %v512 = vmul.f32 %v440, %v498
    %v513 = vmul.f32 %v437, %v502
    %v514 = vmul.f32 %v440, %v502
    %v515 = vpack.c.bf16 %v507, %v507
    %v516 = vpack.c.bf16 %v508, %v508
    %v517 = vpack.c.bf16 %v509, %v509
    %v518 = vpack.c.bf16 %v510, %v510
    %v519 = vpack.c.bf16 %v511, %v511
    %v520 = vpack.c.bf16 %v512, %v512
    %v521 = vpack.c.bf16 %v513, %v513
    %v522 = vpack.c.bf16 %v514, %v514
    %v523 = vpack.c.bf16 %v392, %v392
    %v524 = vpack.c.bf16 %v395, %v395
    %v526 = vsel %vm308, %v475, 0
    %v529 = vsel %vm308, %v523, 0
    %531 = vmatprep.subr.bf16.mxu0 0
    %532 = vmatpush1.bf16.xpose.msra.mxu0 %v529
    %533 = vmatprep.subr.bf16.mxu0 0
    %534 = vmatpush1.bf16.xpose.msra.mxu0 0
    %535 = vmatprep.subr.bf16.mxu0 0
    %536 = vmatpush1.bf16.xpose.msra.mxu0 0
    %537 = vmatprep.subr.bf16.mxu0 0
    %538 = vmatpush1.bf16.xpose.msra.mxu0 0
    %539 = vmatprep.subr.bf16.mxu0 0
    %540 = vmatpush1.bf16.xpose.msra.mxu0 0
    %541 = vmatprep.subr.bf16.mxu0 0
    %542 = vmatpush1.bf16.xpose.msra.mxu0 0
    %543 = vmatprep.subr.bf16.mxu0 0
    %544 = vmatpush1.bf16.xpose.msra.mxu0 0
    %545 = vmatprep.subr.bf16.mxu0 0
    %546 = vmatpush1.bf16.xpose.msra.mxu0 0
    %547 = vmatprep.subr.bf16.mxu0 0
    %548 = vmatpush1.bf16.xpose.msra.mxu0 0
    %549 = vmatprep.subr.bf16.mxu0 0
    %550 = vmatpush1.bf16.xpose.msra.mxu0 0
    %551 = vmatprep.subr.bf16.mxu0 0
    %552 = vmatpush1.bf16.xpose.msra.mxu0 0
    %553 = vmatprep.subr.bf16.mxu0 0
    %554 = vmatpush1.bf16.xpose.msra.mxu0 0
    %555 = vmatprep.subr.bf16.mxu0 0
    %556 = vmatpush1.bf16.xpose.msra.mxu0 0
    %557 = vmatprep.subr.bf16.mxu0 0
    %558 = vmatpush1.bf16.xpose.msra.mxu0 0
    %559 = vmatprep.subr.bf16.mxu0 0
    %560 = vmatpush1.bf16.xpose.msra.mxu0 0
    %561 = vmatprep.subr.bf16.mxu0 0
    %562 = vmatpush1.bf16.xpose.msra.mxu0 0
    %563 = vmatprep.mubr.bf16.mxu0 0
    %564 = vmatmul.mubr.bf16.gmra.mrb[0].mxu0 %v526
    %v565 = vpop.f32.mrb[0].mxu0
    %v566 = vadd.f32 0.0, %v565
    %v567 = vpop.f32.mrb[0].mxu0
    %v568 = vpop.f32.mrb[0].mxu0
    %v569 = vpop.f32.mrb[0].mxu0
    %570 = vdwg.mxu0
    %v572 = vsel %vm308, %v476, 0
    %v575 = vsel %vm308, %v524, 0
    %577 = vmatprep.subr.bf16.mxu0 0
    %578 = vmatpush1.bf16.xpose.msra.mxu0 %v575
    %579 = vmatprep.subr.bf16.mxu0 0
    %580 = vmatpush1.bf16.xpose.msra.mxu0 0
    %581 = vmatprep.subr.bf16.mxu0 0
    %582 = vmatpush1.bf16.xpose.msra.mxu0 0
    %583 = vmatprep.subr.bf16.mxu0 0
    %584 = vmatpush1.bf16.xpose.msra.mxu0 0
    %585 = vmatprep.subr.bf16.mxu0 0
    %586 = vmatpush1.bf16.xpose.msra.mxu0 0
    %587 = vmatprep.subr.bf16.mxu0 0
    %588 = vmatpush1.bf16.xpose.msra.mxu0 0
    %589 = vmatprep.subr.bf16.mxu0 0
    %590 = vmatpush1.bf16.xpose.msra.mxu0 0
    %591 = vmatprep.subr.bf16.mxu0 0
    %592 = vmatpush1.bf16.xpose.msra.mxu0 0
    %593 = vmatprep.subr.bf16.mxu0 0
    %594 = vmatpush1.bf16.xpose.msra.mxu0 0
    %595 = vmatprep.subr.bf16.mxu0 0
    %596 = vmatpush1.bf16.xpose.msra.mxu0 0
    %597 = vmatprep.subr.bf16.mxu0 0
    %598 = vmatpush1.bf16.xpose.msra.mxu0 0
    %599 = vmatprep.subr.bf16.mxu0 0
    %600 = vmatpush1.bf16.xpose.msra.mxu0 0
    %601 = vmatprep.subr.bf16.mxu0 0
    %602 = vmatpush1.bf16.xpose.msra.mxu0 0
    %603 = vmatprep.subr.bf16.mxu0 0
    %604 = vmatpush1.bf16.xpose.msra.mxu0 0
    %605 = vmatprep.subr.bf16.mxu0 0
    %606 = vmatpush1.bf16.xpose.msra.mxu0 0
    %607 = vmatprep.subr.bf16.mxu0 0
    %608 = vmatpush1.bf16.xpose.msra.mxu0 0
    %609 = vmatprep.mubr.bf16.mxu0 0
    %610 = vmatmul.mubr.bf16.gmra.mrb[0].mxu0 %v572
    %v611 = vpop.f32.mrb[0].mxu0
    %v612 = vadd.f32 0.0, %v611
    %v613 = vpop.f32.mrb[0].mxu0
    %v614 = vpop.f32.mrb[0].mxu0
    %v615 = vpop.f32.mrb[0].mxu0
    %616 = vdwg.mxu0
    %v618 = vsel %vm308, %v477, 0
    %620 = vmatprep.subr.bf16.mxu0 0
    %621 = vmatpush1.bf16.xpose.msra.mxu0 %v529
    %622 = vmatprep.subr.bf16.mxu0 0
    %623 = vmatpush1.bf16.xpose.msra.mxu0 0
    %624 = vmatprep.subr.bf16.mxu0 0
    %625 = vmatpush1.bf16.xpose.msra.mxu0 0
    %626 = vmatprep.subr.bf16.mxu0 0
    %627 = vmatpush1.bf16.xpose.msra.mxu0 0
    %628 = vmatprep.subr.bf16.mxu0 0
    %629 = vmatpush1.bf16.xpose.msra.mxu0 0
    %630 = vmatprep.subr.bf16.mxu0 0
    %631 = vmatpush1.bf16.xpose.msra.mxu0 0
    %632 = vmatprep.subr.bf16.mxu0 0
    %633 = vmatpush1.bf16.xpose.msra.mxu0 0
    %634 = vmatprep.subr.bf16.mxu0 0
    %635 = vmatpush1.bf16.xpose.msra.mxu0 0
    %636 = vmatprep.subr.bf16.mxu0 0
    %637 = vmatpush1.bf16.xpose.msra.mxu0 0
    %638 = vmatprep.subr.bf16.mxu0 0
    %639 = vmatpush1.bf16.xpose.msra.mxu0 0
    %640 = vmatprep.subr.bf16.mxu0 0
    %641 = vmatpush1.bf16.xpose.msra.mxu0 0
    %642 = vmatprep.subr.bf16.mxu0 0
    %643 = vmatpush1.bf16.xpose.msra.mxu0 0
    %644 = vmatprep.subr.bf16.mxu0 0
    %645 = vmatpush1.bf16.xpose.msra.mxu0 0
    %646 = vmatprep.subr.bf16.mxu0 0
    %647 = vmatpush1.bf16.xpose.msra.mxu0 0
    %648 = vmatprep.subr.bf16.mxu0 0
    %649 = vmatpush1.bf16.xpose.msra.mxu0 0
    %650 = vmatprep.subr.bf16.mxu0 0
    %651 = vmatpush1.bf16.xpose.msra.mxu0 0
    %652 = vmatprep.mubr.bf16.mxu0 0
    %653 = vmatmul.mubr.bf16.gmra.mrb[0].mxu0 %v618
    %v654 = vpop.f32.mrb[0].mxu0
    %v655 = vadd.f32 0.0, %v654
    %v656 = vpop.f32.mrb[0].mxu0
    %v657 = vpop.f32.mrb[0].mxu0
    %v658 = vpop.f32.mrb[0].mxu0
    %659 = vdwg.mxu0
    %v661 = vsel %vm308, %v478, 0
    %663 = vmatprep.subr.bf16.mxu0 0
    %664 = vmatpush1.bf16.xpose.msra.mxu0 %v575
    %665 = vmatprep.subr.bf16.mxu0 0
    %666 = vmatpush1.bf16.xpose.msra.mxu0 0
    %667 = vmatprep.subr.bf16.mxu0 0
    %668 = vmatpush1.bf16.xpose.msra.mxu0 0
    %669 = vmatprep.subr.bf16.mxu0 0
    %670 = vmatpush1.bf16.xpose.msra.mxu0 0
    %671 = vmatprep.subr.bf16.mxu0 0
    %672 = vmatpush1.bf16.xpose.msra.mxu0 0
    %673 = vmatprep.subr.bf16.mxu0 0
    %674 = vmatpush1.bf16.xpose.msra.mxu0 0
    %675 = vmatprep.subr.bf16.mxu0 0
    %676 = vmatpush1.bf16.xpose.msra.mxu0 0
    %677 = vmatprep.subr.bf16.mxu0 0
    %678 = vmatpush1.bf16.xpose.msra.mxu0 0
    %679 = vmatprep.subr.bf16.mxu0 0
    %680 = vmatpush1.bf16.xpose.msra.mxu0 0
    %681 = vmatprep.subr.bf16.mxu0 0
    %682 = vmatpush1.bf16.xpose.msra.mxu0 0
    %683 = vmatprep.subr.bf16.mxu0 0
    %684 = vmatpush1.bf16.xpose.msra.mxu0 0
    %685 = vmatprep.subr.bf16.mxu0 0
    %686 = vmatpush1.bf16.xpose.msra.mxu0 0
    %687 = vmatprep.subr.bf16.mxu0 0
    %688 = vmatpush1.bf16.xpose.msra.mxu0 0
    %689 = vmatprep.subr.bf16.mxu0 0
    %690 = vmatpush1.bf16.xpose.msra.mxu0 0
    %691 = vmatprep.subr.bf16.mxu0 0
    %692 = vmatpush1.bf16.xpose.msra.mxu0 0
    %693 = vmatprep.subr.bf16.mxu0 0
    %694 = vmatpush1.bf16.xpose.msra.mxu0 0
    %695 = vmatprep.mubr.bf16.mxu0 0
    %696 = vmatmul.mubr.bf16.gmra.mrb[0].mxu0 %v661
    %v697 = vpop.f32.mrb[0].mxu0
    %v698 = vadd.f32 0.0, %v697
    %v699 = vpop.f32.mrb[0].mxu0
    %v700 = vpop.f32.mrb[0].mxu0
    %v701 = vpop.f32.mrb[0].mxu0
    %702 = vdwg.mxu0
    %v704 = vsel %vm308, %v479, 0
    %706 = vmatprep.subr.bf16.mxu0 0
    %707 = vmatpush1.bf16.xpose.msra.mxu0 %v529
    %708 = vmatprep.subr.bf16.mxu0 0
    %709 = vmatpush1.bf16.xpose.msra.mxu0 0
    %710 = vmatprep.subr.bf16.mxu0 0
    %711 = vmatpush1.bf16.xpose.msra.mxu0 0
    %712 = vmatprep.subr.bf16.mxu0 0
    %713 = vmatpush1.bf16.xpose.msra.mxu0 0
    %714 = vmatprep.subr.bf16.mxu0 0
    %715 = vmatpush1.bf16.xpose.msra.mxu0 0
    %716 = vmatprep.subr.bf16.mxu0 0
    %717 = vmatpush1.bf16.xpose.msra.mxu0 0
    %718 = vmatprep.subr.bf16.mxu0 0
    %719 = vmatpush1.bf16.xpose.msra.mxu0 0
    %720 = vmatprep.subr.bf16.mxu0 0
    %721 = vmatpush1.bf16.xpose.msra.mxu0 0
    %722 = vmatprep.subr.bf16.mxu0 0
    %723 = vmatpush1.bf16.xpose.msra.mxu0 0
    %724 = vmatprep.subr.bf16.mxu0 0
    %725 = vmatpush1.bf16.xpose.msra.mxu0 0
    %726 = vmatprep.subr.bf16.mxu0 0
    %727 = vmatpush1.bf16.xpose.msra.mxu0 0
    %728 = vmatprep.subr.bf16.mxu0 0
    %729 = vmatpush1.bf16.xpose.msra.mxu0 0
    %730 = vmatprep.subr.bf16.mxu0 0
    %731 = vmatpush1.bf16.xpose.msra.mxu0 0
    %732 = vmatprep.subr.bf16.mxu0 0
    %733 = vmatpush1.bf16.xpose.msra.mxu0 0
    %734 = vmatprep.subr.bf16.mxu0 0
    %735 = vmatpush1.bf16.xpose.msra.mxu0 0
    %736 = vmatprep.subr.bf16.mxu0 0
    %737 = vmatpush1.bf16.xpose.msra.mxu0 0
    %738 = vmatprep.mubr.bf16.mxu0 0
    %739 = vmatmul.mubr.bf16.gmra.mrb[0].mxu0 %v704
    %v740 = vpop.f32.mrb[0].mxu0
    %v741 = vadd.f32 0.0, %v740
    %v742 = vpop.f32.mrb[0].mxu0
    %v743 = vpop.f32.mrb[0].mxu0
    %v744 = vpop.f32.mrb[0].mxu0
    %745 = vdwg.mxu0
    %v747 = vsel %vm308, %v480, 0
    %749 = vmatprep.subr.bf16.mxu0 0
    %750 = vmatpush1.bf16.xpose.msra.mxu0 %v575
    %751 = vmatprep.subr.bf16.mxu0 0
    %752 = vmatpush1.bf16.xpose.msra.mxu0 0
    %753 = vmatprep.subr.bf16.mxu0 0
    %754 = vmatpush1.bf16.xpose.msra.mxu0 0
    %755 = vmatprep.subr.bf16.mxu0 0
    %756 = vmatpush1.bf16.xpose.msra.mxu0 0
    %757 = vmatprep.subr.bf16.mxu0 0
    %758 = vmatpush1.bf16.xpose.msra.mxu0 0
    %759 = vmatprep.subr.bf16.mxu0 0
    %760 = vmatpush1.bf16.xpose.msra.mxu0 0
    %761 = vmatprep.subr.bf16.mxu0 0
    %762 = vmatpush1.bf16.xpose.msra.mxu0 0
    %763 = vmatprep.subr.bf16.mxu0 0
    %764 = vmatpush1.bf16.xpose.msra.mxu0 0
    %765 = vmatprep.subr.bf16.mxu0 0
    %766 = vmatpush1.bf16.xpose.msra.mxu0 0
    %767 = vmatprep.subr.bf16.mxu0 0
    %768 = vmatpush1.bf16.xpose.msra.mxu0 0
    %769 = vmatprep.subr.bf16.mxu0 0
    %770 = vmatpush1.bf16.xpose.msra.mxu0 0
    %771 = vmatprep.subr.bf16.mxu0 0
    %772 = vmatpush1.bf16.xpose.msra.mxu0 0
    %773 = vmatprep.subr.bf16.mxu0 0
    %774 = vmatpush1.bf16.xpose.msra.mxu0 0
    %775 = vmatprep.subr.bf16.mxu0 0
    %776 = vmatpush1.bf16.xpose.msra.mxu0 0
    %777 = vmatprep.subr.bf16.mxu0 0
    %778 = vmatpush1.bf16.xpose.msra.mxu0 0
    %779 = vmatprep.subr.bf16.mxu0 0
    %780 = vmatpush1.bf16.xpose.msra.mxu0 0
    %781 = vmatprep.mubr.bf16.mxu0 0
    %782 = vmatmul.mubr.bf16.gmra.mrb[0].mxu0 %v747
    %v783 = vpop.f32.mrb[0].mxu0
    %v784 = vadd.f32 0.0, %v783
    %v785 = vpop.f32.mrb[0].mxu0
    %v786 = vpop.f32.mrb[0].mxu0
    %v787 = vpop.f32.mrb[0].mxu0
    %788 = vdwg.mxu0
    %v790 = vsel %vm308, %v481, 0
    %792 = vmatprep.subr.bf16.mxu0 0
    %793 = vmatpush1.bf16.xpose.msra.mxu0 %v529
    %794 = vmatprep.subr.bf16.mxu0 0
    %795 = vmatpush1.bf16.xpose.msra.mxu0 0
    %796 = vmatprep.subr.bf16.mxu0 0
    %797 = vmatpush1.bf16.xpose.msra.mxu0 0
    %798 = vmatprep.subr.bf16.mxu0 0
    %799 = vmatpush1.bf16.xpose.msra.mxu0 0
    %800 = vmatprep.subr.bf16.mxu0 0
    %801 = vmatpush1.bf16.xpose.msra.mxu0 0
    %802 = vmatprep.subr.bf16.mxu0 0
    %803 = vmatpush1.bf16.xpose.msra.mxu0 0
    %804 = vmatprep.subr.bf16.mxu0 0
    %805 = vmatpush1.bf16.xpose.msra.mxu0 0
    %806 = vmatprep.subr.bf16.mxu0 0
    %807 = vmatpush1.bf16.xpose.msra.mxu0 0
    %808 = vmatprep.subr.bf16.mxu0 0
    %809 = vmatpush1.bf16.xpose.msra.mxu0 0
    %810 = vmatprep.subr.bf16.mxu0 0
    %811 = vmatpush1.bf16.xpose.msra.mxu0 0
    %812 = vmatprep.subr.bf16.mxu0 0
    %813 = vmatpush1.bf16.xpose.msra.mxu0 0
    %814 = vmatprep.subr.bf16.mxu0 0
    %815 = vmatpush1.bf16.xpose.msra.mxu0 0
    %816 = vmatprep.subr.bf16.mxu0 0
    %817 = vmatpush1.bf16.xpose.msra.mxu0 0
    %818 = vmatprep.subr.bf16.mxu0 0
    %819 = vmatpush1.bf16.xpose.msra.mxu0 0
    %820 = vmatprep.subr.bf16.mxu0 0
    %821 = vmatpush1.bf16.xpose.msra.mxu0 0
    %822 = vmatprep.subr.bf16.mxu0 0
    %823 = vmatpush1.bf16.xpose.msra.mxu0 0
    %824 = vmatprep.mubr.bf16.mxu0 0
    %825 = vmatmul.mubr.bf16.gmra.mrb[0].mxu0 %v790
    %v826 = vpop.f32.mrb[0].mxu0
    %v827 = vadd.f32 0.0, %v826
    %v828 = vpop.f32.mrb[0].mxu0
    %v829 = vpop.f32.mrb[0].mxu0
    %v830 = vpop.f32.mrb[0].mxu0
    %831 = vdwg.mxu0
    %v833 = vsel %vm308, %v482, 0
    %835 = vmatprep.subr.bf16.mxu0 0
    %836 = vmatpush1.bf16.xpose.msra.mxu0 %v575
    %837 = vmatprep.subr.bf16.mxu0 0
    %838 = vmatpush1.bf16.xpose.msra.mxu0 0
    %839 = vmatprep.subr.bf16.mxu0 0
    %840 = vmatpush1.bf16.xpose.msra.mxu0 0
    %841 = vmatprep.subr.bf16.mxu0 0
    %842 = vmatpush1.bf16.xpose.msra.mxu0 0
    %843 = vmatprep.subr.bf16.mxu0 0
    %844 = vmatpush1.bf16.xpose.msra.mxu0 0
    %845 = vmatprep.subr.bf16.mxu0 0
    %846 = vmatpush1.bf16.xpose.msra.mxu0 0
    %847 = vmatprep.subr.bf16.mxu0 0
    %848 = vmatpush1.bf16.xpose.msra.mxu0 0
    %849 = vmatprep.subr.bf16.mxu0 0
    %850 = vmatpush1.bf16.xpose.msra.mxu0 0
    %851 = vmatprep.subr.bf16.mxu0 0
    %852 = vmatpush1.bf16.xpose.msra.mxu0 0
    %853 = vmatprep.subr.bf16.mxu0 0
    %854 = vmatpush1.bf16.xpose.msra.mxu0 0
    %855 = vmatprep.subr.bf16.mxu0 0
    %856 = vmatpush1.bf16.xpose.msra.mxu0 0
    %857 = vmatprep.subr.bf16.mxu0 0
    %858 = vmatpush1.bf16.xpose.msra.mxu0 0
    %859 = vmatprep.subr.bf16.mxu0 0
    %860 = vmatpush1.bf16.xpose.msra.mxu0 0
    %861 = vmatprep.subr.bf16.mxu0 0
    %862 = vmatpush1.bf16.xpose.msra.mxu0 0
    %863 = vmatprep.subr.bf16.mxu0 0
    %864 = vmatpush1.bf16.xpose.msra.mxu0 0
    %865 = vmatprep.subr.bf16.mxu0 0
    %866 = vmatpush1.bf16.xpose.msra.mxu0 0
    %867 = vmatprep.mubr.bf16.mxu0 0
    %868 = vmatmul.mubr.bf16.gmra.mrb[0].mxu0 %v833
    %v869 = vpop.f32.mrb[0].mxu0
    %v870 = vadd.f32 0.0, %v869
    %v871 = vpop.f32.mrb[0].mxu0
    %v872 = vpop.f32.mrb[0].mxu0
    %v873 = vpop.f32.mrb[0].mxu0
    %874 = vdwg.mxu0
    %vm875 = vcmask 64512
    %v876 = vsel %vm875, %v566, -inf
    %877 = vmax.xlane.f32.xlu0 %v876
    %v878 = vpop.xlane.xlu0 %877
    %v879 = vsel %vm875, %v612, -inf
    %880 = vmax.xlane.f32.xlu0 %v879
    %v881 = vpop.xlane.xlu0 %880
    %v882 = vsel %vm875, %v655, -inf
    %883 = vmax.xlane.f32.xlu0 %v882
    %v884 = vpop.xlane.xlu0 %883
    %v885 = vsel %vm875, %v698, -inf
    %886 = vmax.xlane.f32.xlu0 %v885
    %v887 = vpop.xlane.xlu0 %886
    %v888 = vsel %vm875, %v741, -inf
    %889 = vmax.xlane.f32.xlu0 %v888
    %v890 = vpop.xlane.xlu0 %889
    %v891 = vsel %vm875, %v784, -inf
    %892 = vmax.xlane.f32.xlu0 %v891
    %v893 = vpop.xlane.xlu0 %892
    %v894 = vsel %vm875, %v827, -inf
    %895 = vmax.xlane.f32.xlu0 %v894
    %v896 = vpop.xlane.xlu0 %895
    %v897 = vsel %vm875, %v870, -inf
    %898 = vmax.xlane.f32.xlu0 %v897
    %v899 = vpop.xlane.xlu0 %898
    %v900 = vsub.f32 %v566, %v878
    %v901 = vsub.f32 %v612, %v881
    %v902 = vsub.f32 %v655, %v884
    %v903 = vsub.f32 %v698, %v887
    %v904 = vsub.f32 %v741, %v890
    %v905 = vsub.f32 %v784, %v893
    %v906 = vsub.f32 %v827, %v896
    %v907 = vsub.f32 %v870, %v899
    %v908 = vmul.f32 %v900, 1.442695
    %v909 = vpow.pop %v908
    %v910 = vmul.f32 %v901, 1.442695
    %v911 = vpow.pop %v910
    %v912 = vmul.f32 %v902, 1.442695
    %v913 = vpow.pop %v912
    %v914 = vmul.f32 %v903, 1.442695
    %v915 = vpow.pop %v914
    %v916 = vmul.f32 %v904, 1.442695
    %v917 = vpow.pop %v916
    %v918 = vmul.f32 %v905, 1.442695
    %v919 = vpow.pop %v918
    %v920 = vmul.f32 %v906, 1.442695
    %v921 = vpow.pop %v920
    %v922 = vmul.f32 %v907, 1.442695
    %v923 = vpow.pop %v922
    %v924 = vsel %vm875, %v909, 0.0
    %925 = vadd.xlane.f32.xlu0 %v924
    %v926 = vpop.xlane.xlu0 %925
    %v927 = vsel %vm875, %v911, 0.0
    %928 = vadd.xlane.f32.xlu0 %v927
    %v929 = vpop.xlane.xlu0 %928
    %v930 = vsel %vm875, %v913, 0.0
    %931 = vadd.xlane.f32.xlu0 %v930
    %v932 = vpop.xlane.xlu0 %931
    %v933 = vsel %vm875, %v915, 0.0
    %934 = vadd.xlane.f32.xlu0 %v933
    %v935 = vpop.xlane.xlu0 %934
    %v936 = vsel %vm875, %v917, 0.0
    %937 = vadd.xlane.f32.xlu0 %v936
    %v938 = vpop.xlane.xlu0 %937
    %v939 = vsel %vm875, %v919, 0.0
    %940 = vadd.xlane.f32.xlu0 %v939
    %v941 = vpop.xlane.xlu0 %940
    %v942 = vsel %vm875, %v921, 0.0
    %943 = vadd.xlane.f32.xlu0 %v942
    %v944 = vpop.xlane.xlu0 %943
    %v945 = vsel %vm875, %v923, 0.0
    %946 = vadd.xlane.f32.xlu0 %v945
    %v947 = vpop.xlane.xlu0 %946
    %v948 = vrcp.pop %v926
    %v949 = vrcp.pop %v929
    %v950 = vrcp.pop %v932
    %v951 = vrcp.pop %v935
    %v952 = vrcp.pop %v938
    %v953 = vrcp.pop %v941
    %v954 = vrcp.pop %v944
    %v955 = vrcp.pop %v947
    %v956 = vmul.f32 %v909, %v948
    %v957 = vmul.f32 %v911, %v949
    %v958 = vmul.f32 %v913, %v950
    %v959 = vmul.f32 %v915, %v951
    %v960 = vmul.f32 %v917, %v952
    %v961 = vmul.f32 %v919, %v953
    %v962 = vmul.f32 %v921, %v954
    %v963 = vmul.f32 %v923, %v955
    %v964 = vpack.c.bf16 %v956, %v956
    %v965 = vpack.c.bf16 %v957, %v957
    %v966 = vpack.c.bf16 %v958, %v958
    %v967 = vpack.c.bf16 %v959, %v959
    %v968 = vpack.c.bf16 %v960, %v960
    %v969 = vpack.c.bf16 %v961, %v961
    %v970 = vpack.c.bf16 %v962, %v962
    %v971 = vpack.c.bf16 %v963, %v963
    %v973 = vsel %vm875, %v964, 0
    %vm975 = vcmask 1043456
    %v977 = vsel %vm975, %v515, 0
    %979 = vmatprep.subr.bf16.mxu0 0
    %980 = vmatpush1.bf16.msra.mxu0 %v977
    %981 = vmatprep.subr.bf16.mxu0 0
    %982 = vmatpush1.bf16.msra.mxu0 0
    %983 = vmatprep.subr.bf16.mxu0 0
    %984 = vmatpush1.bf16.msra.mxu0 0
    %985 = vmatprep.subr.bf16.mxu0 0
    %986 = vmatpush1.bf16.msra.mxu0 0
    %987 = vmatprep.subr.bf16.mxu0 0
    %988 = vmatpush1.bf16.msra.mxu0 0
    %989 = vmatprep.subr.bf16.mxu0 0
    %990 = vmatpush1.bf16.msra.mxu0 0
    %991 = vmatprep.subr.bf16.mxu0 0
    %992 = vmatpush1.bf16.msra.mxu0 0
    %993 = vmatprep.subr.bf16.mxu0 0
    %994 = vmatpush1.bf16.msra.mxu0 0
    %995 = vmatprep.subr.bf16.mxu0 0
    %996 = vmatpush1.bf16.msra.mxu0 0
    %997 = vmatprep.subr.bf16.mxu0 0
    %998 = vmatpush1.bf16.msra.mxu0 0
    %999 = vmatprep.subr.bf16.mxu0 0
    %1000 = vmatpush1.bf16.msra.mxu0 0
    %1001 = vmatprep.subr.bf16.mxu0 0
    %1002 = vmatpush1.bf16.msra.mxu0 0
    %1003 = vmatprep.subr.bf16.mxu0 0
    %1004 = vmatpush1.bf16.msra.mxu0 0
    %1005 = vmatprep.subr.bf16.mxu0 0
    %1006 = vmatpush1.bf16.msra.mxu0 0
    %1007 = vmatprep.subr.bf16.mxu0 0
    %1008 = vmatpush1.bf16.msra.mxu0 0
    %1009 = vmatprep.subr.bf16.mxu0 0
    %1010 = vmatpush1.bf16.msra.mxu0 0
    %1011 = vmatprep.mubr.bf16.mxu0 0
    %1012 = vmatmul.mubr.bf16.gmra.mrb[0].mxu0 %v973
    %v1013 = vpop.f32.mrb[0].mxu0
    %v1014 = vadd.f32 0.0, %v1013
    %v1015 = vpop.f32.mrb[0].mxu0
    %v1016 = vpop.f32.mrb[0].mxu0
    %v1017 = vpop.f32.mrb[0].mxu0
    %1018 = vdwg.mxu0
    %v1020 = vsel %vm875, %v965, 0
    %v1023 = vsel %vm975, %v516, 0
    %1025 = vmatprep.subr.bf16.mxu0 0
    %1026 = vmatpush1.bf16.msra.mxu0 %v1023
    %1027 = vmatprep.subr.bf16.mxu0 0
    %1028 = vmatpush1.bf16.msra.mxu0 0
    %1029 = vmatprep.subr.bf16.mxu0 0
    %1030 = vmatpush1.bf16.msra.mxu0 0
    %1031 = vmatprep.subr.bf16.mxu0 0
    %1032 = vmatpush1.bf16.msra.mxu0 0
    %1033 = vmatprep.subr.bf16.mxu0 0
    %1034 = vmatpush1.bf16.msra.mxu0 0
    %1035 = vmatprep.subr.bf16.mxu0 0
    %1036 = vmatpush1.bf16.msra.mxu0 0
    %1037 = vmatprep.subr.bf16.mxu0 0
    %1038 = vmatpush1.bf16.msra.mxu0 0
    %1039 = vmatprep.subr.bf16.mxu0 0
    %1040 = vmatpush1.bf16.msra.mxu0 0
    %1041 = vmatprep.subr.bf16.mxu0 0
    %1042 = vmatpush1.bf16.msra.mxu0 0
    %1043 = vmatprep.subr.bf16.mxu0 0
    %1044 = vmatpush1.bf16.msra.mxu0 0
    %1045 = vmatprep.subr.bf16.mxu0 0
    %1046 = vmatpush1.bf16.msra.mxu0 0
    %1047 = vmatprep.subr.bf16.mxu0 0
    %1048 = vmatpush1.bf16.msra.mxu0 0
    %1049 = vmatprep.subr.bf16.mxu0 0
    %1050 = vmatpush1.bf16.msra.mxu0 0
    %1051 = vmatprep.subr.bf16.mxu0 0
    %1052 = vmatpush1.bf16.msra.mxu0 0
    %1053 = vmatprep.subr.bf16.mxu0 0
    %1054 = vmatpush1.bf16.msra.mxu0 0
    %1055 = vmatprep.subr.bf16.mxu0 0
    %1056 = vmatpush1.bf16.msra.mxu0 0
    %1057 = vmatprep.mubr.bf16.mxu0 0
    %1058 = vmatmul.mubr.bf16.gmra.mrb[0].mxu0 %v1020
    %v1059 = vpop.f32.mrb[0].mxu0
    %v1060 = vadd.f32 0.0, %v1059
    %v1061 = vpop.f32.mrb[0].mxu0
    %v1062 = vpop.f32.mrb[0].mxu0
    %v1063 = vpop.f32.mrb[0].mxu0
    %1064 = vdwg.mxu0
    %v1066 = vsel %vm875, %v966, 0
    %v1069 = vsel %vm975, %v517, 0
    %1071 = vmatprep.subr.bf16.mxu0 0
    %1072 = vmatpush1.bf16.msra.mxu0 %v1069
    %1073 = vmatprep.subr.bf16.mxu0 0
    %1074 = vmatpush1.bf16.msra.mxu0 0
    %1075 = vmatprep.subr.bf16.mxu0 0
    %1076 = vmatpush1.bf16.msra.mxu0 0
    %1077 = vmatprep.subr.bf16.mxu0 0
    %1078 = vmatpush1.bf16.msra.mxu0 0
    %1079 = vmatprep.subr.bf16.mxu0 0
    %1080 = vmatpush1.bf16.msra.mxu0 0
    %1081 = vmatprep.subr.bf16.mxu0 0
    %1082 = vmatpush1.bf16.msra.mxu0 0
    %1083 = vmatprep.subr.bf16.mxu0 0
    %1084 = vmatpush1.bf16.msra.mxu0 0
    %1085 = vmatprep.subr.bf16.mxu0 0
    %1086 = vmatpush1.bf16.msra.mxu0 0
    %1087 = vmatprep.subr.bf16.mxu0 0
    %1088 = vmatpush1.bf16.msra.mxu0 0
    %1089 = vmatprep.subr.bf16.mxu0 0
    %1090 = vmatpush1.bf16.msra.mxu0 0
    %1091 = vmatprep.subr.bf16.mxu0 0
    %1092 = vmatpush1.bf16.msra.mxu0 0
    %1093 = vmatprep.subr.bf16.mxu0 0
    %1094 = vmatpush1.bf16.msra.mxu0 0
    %1095 = vmatprep.subr.bf16.mxu0 0
    %1096 = vmatpush1.bf16.msra.mxu0 0
    %1097 = vmatprep.subr.bf16.mxu0 0
    %1098 = vmatpush1.bf16.msra.mxu0 0
    %1099 = vmatprep.subr.bf16.mxu0 0
    %1100 = vmatpush1.bf16.msra.mxu0 0
    %1101 = vmatprep.subr.bf16.mxu0 0
    %1102 = vmatpush1.bf16.msra.mxu0 0
    %1103 = vmatprep.mubr.bf16.mxu0 0
    %1104 = vmatmul.mubr.bf16.gmra.mrb[0].mxu0 %v1066
    %v1105 = vpop.f32.mrb[0].mxu0
    %v1106 = vadd.f32 0.0, %v1105
    %v1107 = vpop.f32.mrb[0].mxu0
    %v1108 = vpop.f32.mrb[0].mxu0
    %v1109 = vpop.f32.mrb[0].mxu0
    %1110 = vdwg.mxu0
    %v1112 = vsel %vm875, %v967, 0
    %v1115 = vsel %vm975, %v518, 0
    %1117 = vmatprep.subr.bf16.mxu0 0
    %1118 = vmatpush1.bf16.msra.mxu0 %v1115
    %1119 = vmatprep.subr.bf16.mxu0 0
    %1120 = vmatpush1.bf16.msra.mxu0 0
    %1121 = vmatprep.subr.bf16.mxu0 0
    %1122 = vmatpush1.bf16.msra.mxu0 0
    %1123 = vmatprep.subr.bf16.mxu0 0
    %1124 = vmatpush1.bf16.msra.mxu0 0
    %1125 = vmatprep.subr.bf16.mxu0 0
    %1126 = vmatpush1.bf16.msra.mxu0 0
    %1127 = vmatprep.subr.bf16.mxu0 0
    %1128 = vmatpush1.bf16.msra.mxu0 0
    %1129 = vmatprep.subr.bf16.mxu0 0
    %1130 = vmatpush1.bf16.msra.mxu0 0
    %1131 = vmatprep.subr.bf16.mxu0 0
    %1132 = vmatpush1.bf16.msra.mxu0 0
    %1133 = vmatprep.subr.bf16.mxu0 0
    %1134 = vmatpush1.bf16.msra.mxu0 0
    %1135 = vmatprep.subr.bf16.mxu0 0
    %1136 = vmatpush1.bf16.msra.mxu0 0
    %1137 = vmatprep.subr.bf16.mxu0 0
    %1138 = vmatpush1.bf16.msra.mxu0 0
    %1139 = vmatprep.subr.bf16.mxu0 0
    %1140 = vmatpush1.bf16.msra.mxu0 0
    %1141 = vmatprep.subr.bf16.mxu0 0
    %1142 = vmatpush1.bf16.msra.mxu0 0
    %1143 = vmatprep.subr.bf16.mxu0 0
    %1144 = vmatpush1.bf16.msra.mxu0 0
    %1145 = vmatprep.subr.bf16.mxu0 0
    %1146 = vmatpush1.bf16.msra.mxu0 0
    %1147 = vmatprep.subr.bf16.mxu0 0
    %1148 = vmatpush1.bf16.msra.mxu0 0
    %1149 = vmatprep.mubr.bf16.mxu0 0
    %1150 = vmatmul.mubr.bf16.gmra.mrb[0].mxu0 %v1112
    %v1151 = vpop.f32.mrb[0].mxu0
    %v1152 = vadd.f32 0.0, %v1151
    %v1153 = vpop.f32.mrb[0].mxu0
    %v1154 = vpop.f32.mrb[0].mxu0
    %v1155 = vpop.f32.mrb[0].mxu0
    %1156 = vdwg.mxu0
    %v1158 = vsel %vm875, %v968, 0
    %v1161 = vsel %vm975, %v519, 0
    %1163 = vmatprep.subr.bf16.mxu0 0
    %1164 = vmatpush1.bf16.msra.mxu0 %v1161
    %1165 = vmatprep.subr.bf16.mxu0 0
    %1166 = vmatpush1.bf16.msra.mxu0 0
    %1167 = vmatprep.subr.bf16.mxu0 0
    %1168 = vmatpush1.bf16.msra.mxu0 0
    %1169 = vmatprep.subr.bf16.mxu0 0
    %1170 = vmatpush1.bf16.msra.mxu0 0
    %1171 = vmatprep.subr.bf16.mxu0 0
    %1172 = vmatpush1.bf16.msra.mxu0 0
    %1173 = vmatprep.subr.bf16.mxu0 0
    %1174 = vmatpush1.bf16.msra.mxu0 0
    %1175 = vmatprep.subr.bf16.mxu0 0
    %1176 = vmatpush1.bf16.msra.mxu0 0
    %1177 = vmatprep.subr.bf16.mxu0 0
    %1178 = vmatpush1.bf16.msra.mxu0 0
    %1179 = vmatprep.subr.bf16.mxu0 0
    %1180 = vmatpush1.bf16.msra.mxu0 0
    %1181 = vmatprep.subr.bf16.mxu0 0
    %1182 = vmatpush1.bf16.msra.mxu0 0
    %1183 = vmatprep.subr.bf16.mxu0 0
    %1184 = vmatpush1.bf16.msra.mxu0 0
    %1185 = vmatprep.subr.bf16.mxu0 0
    %1186 = vmatpush1.bf16.msra.mxu0 0
    %1187 = vmatprep.subr.bf16.mxu0 0
    %1188 = vmatpush1.bf16.msra.mxu0 0
    %1189 = vmatprep.subr.bf16.mxu0 0
    %1190 = vmatpush1.bf16.msra.mxu0 0
    %1191 = vmatprep.subr.bf16.mxu0 0
    %1192 = vmatpush1.bf16.msra.mxu0 0
    %1193 = vmatprep.subr.bf16.mxu0 0
    %1194 = vmatpush1.bf16.msra.mxu0 0
    %1195 = vmatprep.mubr.bf16.mxu0 0
    %1196 = vmatmul.mubr.bf16.gmra.mrb[0].mxu0 %v1158
    %v1197 = vpop.f32.mrb[0].mxu0
    %v1198 = vadd.f32 0.0, %v1197
    %v1199 = vpop.f32.mrb[0].mxu0
    %v1200 = vpop.f32.mrb[0].mxu0
    %v1201 = vpop.f32.mrb[0].mxu0
    %1202 = vdwg.mxu0
    %v1204 = vsel %vm875, %v969, 0
    %v1207 = vsel %vm975, %v520, 0
    %1209 = vmatprep.subr.bf16.mxu0 0
    %1210 = vmatpush1.bf16.msra.mxu0 %v1207
    %1211 = vmatprep.subr.bf16.mxu0 0
    %1212 = vmatpush1.bf16.msra.mxu0 0
    %1213 = vmatprep.subr.bf16.mxu0 0
    %1214 = vmatpush1.bf16.msra.mxu0 0
    %1215 = vmatprep.subr.bf16.mxu0 0
    %1216 = vmatpush1.bf16.msra.mxu0 0
    %1217 = vmatprep.subr.bf16.mxu0 0
    %1218 = vmatpush1.bf16.msra.mxu0 0
    %1219 = vmatprep.subr.bf16.mxu0 0
    %1220 = vmatpush1.bf16.msra.mxu0 0
    %1221 = vmatprep.subr.bf16.mxu0 0
    %1222 = vmatpush1.bf16.msra.mxu0 0
    %1223 = vmatprep.subr.bf16.mxu0 0
    %1224 = vmatpush1.bf16.msra.mxu0 0
    %1225 = vmatprep.subr.bf16.mxu0 0
    %1226 = vmatpush1.bf16.msra.mxu0 0
    %1227 = vmatprep.subr.bf16.mxu0 0
    %1228 = vmatpush1.bf16.msra.mxu0 0
    %1229 = vmatprep.subr.bf16.mxu0 0
    %1230 = vmatpush1.bf16.msra.mxu0 0
    %1231 = vmatprep.subr.bf16.mxu0 0
    %1232 = vmatpush1.bf16.msra.mxu0 0
    %1233 = vmatprep.subr.bf16.mxu0 0
    %1234 = vmatpush1.bf16.msra.mxu0 0
    %1235 = vmatprep.subr.bf16.mxu0 0
    %1236 = vmatpush1.bf16.msra.mxu0 0
    %1237 = vmatprep.subr.bf16.mxu0 0
    %1238 = vmatpush1.bf16.msra.mxu0 0
    %1239 = vmatprep.subr.bf16.mxu0 0
    %1240 = vmatpush1.bf16.msra.mxu0 0
    %1241 = vmatprep.mubr.bf16.mxu0 0
    %1242 = vmatmul.mubr.bf16.gmra.mrb[0].mxu0 %v1204
    %v1243 = vpop.f32.mrb[0].mxu0
    %v1244 = vadd.f32 0.0, %v1243
    %v1245 = vpop.f32.mrb[0].mxu0
    %v1246 = vpop.f32.mrb[0].mxu0
    %v1247 = vpop.f32.mrb[0].mxu0
    %1248 = vdwg.mxu0
    %v1250 = vsel %vm875, %v970, 0
    %v1253 = vsel %vm975, %v521, 0
    %1255 = vmatprep.subr.bf16.mxu0 0
    %1256 = vmatpush1.bf16.msra.mxu0 %v1253
    %1257 = vmatprep.subr.bf16.mxu0 0
    %1258 = vmatpush1.bf16.msra.mxu0 0
    %1259 = vmatprep.subr.bf16.mxu0 0
    %1260 = vmatpush1.bf16.msra.mxu0 0
    %1261 = vmatprep.subr.bf16.mxu0 0
    %1262 = vmatpush1.bf16.msra.mxu0 0
    %1263 = vmatprep.subr.bf16.mxu0 0
    %1264 = vmatpush1.bf16.msra.mxu0 0
    %1265 = vmatprep.subr.bf16.mxu0 0
    %1266 = vmatpush1.bf16.msra.mxu0 0
    %1267 = vmatprep.subr.bf16.mxu0 0
    %1268 = vmatpush1.bf16.msra.mxu0 0
    %1269 = vmatprep.subr.bf16.mxu0 0
    %1270 = vmatpush1.bf16.msra.mxu0 0
    %1271 = vmatprep.subr.bf16.mxu0 0
    %1272 = vmatpush1.bf16.msra.mxu0 0
    %1273 = vmatprep.subr.bf16.mxu0 0
    %1274 = vmatpush1.bf16.msra.mxu0 0
    %1275 = vmatprep.subr.bf16.mxu0 0
    %1276 = vmatpush1.bf16.msra.mxu0 0
    %1277 = vmatprep.subr.bf16.mxu0 0
    %1278 = vmatpush1.bf16.msra.mxu0 0
    %1279 = vmatprep.subr.bf16.mxu0 0
    %1280 = vmatpush1.bf16.msra.mxu0 0
    %1281 = vmatprep.subr.bf16.mxu0 0
    %1282 = vmatpush1.bf16.msra.mxu0 0
    %1283 = vmatprep.subr.bf16.mxu0 0
    %1284 = vmatpush1.bf16.msra.mxu0 0
    %1285 = vmatprep.subr.bf16.mxu0 0
    %1286 = vmatpush1.bf16.msra.mxu0 0
    %1287 = vmatprep.mubr.bf16.mxu0 0
    %1288 = vmatmul.mubr.bf16.gmra.mrb[0].mxu0 %v1250
    %v1289 = vpop.f32.mrb[0].mxu0
    %v1290 = vadd.f32 0.0, %v1289
    %v1291 = vpop.f32.mrb[0].mxu0
    %v1292 = vpop.f32.mrb[0].mxu0
    %v1293 = vpop.f32.mrb[0].mxu0
    %1294 = vdwg.mxu0
    %v1296 = vsel %vm875, %v971, 0
    %v1299 = vsel %vm975, %v522, 0
    %1301 = vmatprep.subr.bf16.mxu0 0
    %1302 = vmatpush1.bf16.msra.mxu0 %v1299
    %1303 = vmatprep.subr.bf16.mxu0 0
    %1304 = vmatpush1.bf16.msra.mxu0 0
    %1305 = vmatprep.subr.bf16.mxu0 0
    %1306 = vmatpush1.bf16.msra.mxu0 0
    %1307 = vmatprep.subr.bf16.mxu0 0
    %1308 = vmatpush1.bf16.msra.mxu0 0
    %1309 = vmatprep.subr.bf16.mxu0 0
    %1310 = vmatpush1.bf16.msra.mxu0 0
    %1311 = vmatprep.subr.bf16.mxu0 0
    %1312 = vmatpush1.bf16.msra.mxu0 0
    %1313 = vmatprep.subr.bf16.mxu0 0
    %1314 = vmatpush1.bf16.msra.mxu0 0
    %1315 = vmatprep.subr.bf16.mxu0 0
    %1316 = vmatpush1.bf16.msra.mxu0 0
    %1317 = vmatprep.subr.bf16.mxu0 0
    %1318 = vmatpush1.bf16.msra.mxu0 0
    %1319 = vmatprep.subr.bf16.mxu0 0
    %1320 = vmatpush1.bf16.msra.mxu0 0
    %1321 = vmatprep.subr.bf16.mxu0 0
    %1322 = vmatpush1.bf16.msra.mxu0 0
    %1323 = vmatprep.subr.bf16.mxu0 0
    %1324 = vmatpush1.bf16.msra.mxu0 0
    %1325 = vmatprep.subr.bf16.mxu0 0
    %1326 = vmatpush1.bf16.msra.mxu0 0
    %1327 = vmatprep.subr.bf16.mxu0 0
    %1328 = vmatpush1.bf16.msra.mxu0 0
    %1329 = vmatprep.subr.bf16.mxu0 0
    %1330 = vmatpush1.bf16.msra.mxu0 0
    %1331 = vmatprep.subr.bf16.mxu0 0
    %1332 = vmatpush1.bf16.msra.mxu0 0
    %1333 = vmatprep.mubr.bf16.mxu0 0
    %1334 = vmatmul.mubr.bf16.gmra.mrb[0].mxu0 %v1296
    %v1335 = vpop.f32.mrb[0].mxu0
    %v1336 = vadd.f32 0.0, %v1335
    %v1337 = vpop.f32.mrb[0].mxu0
    %v1338 = vpop.f32.mrb[0].mxu0
    %v1339 = vpop.f32.mrb[0].mxu0
    %1340 = vdwg.mxu0
    %v1341 = vadd.f32 %v1014, %v1106
    %v1342 = vadd.f32 %v1060, %v1152
    %v1343 = vadd.f32 %v1341, %v1198
    %v1344 = vadd.f32 %v1342, %v1244
    %v1345 = vadd.f32 %v1343, %v1290
    %v1346 = vadd.f32 %v1344, %v1336
    %v1347 = vpack.c.bf16 %v1346, %v1345
    %v1348 = vlaneseq
    %v1349 = vshrl.u32 %v1348, 7
    %v1350 = vsub.s32 0, %v1349
    %v1351 = vrot.slane %v278, %v1350
    %v1353 = vsel %vm308, %v1347, 0
    %1355 = vmatprep.subr.bf16.mxu0 0
    %1356 = vmatpush1.bf16.msra.mxu0 %v276
    %1357 = vmatprep.subr.bf16.mxu0 0
    %1358 = vmatpush1.bf16.msra.mxu0 %v277
    %1359 = vmatprep.subr.bf16.mxu0 0
    %1360 = vmatpush1.bf16.msra.mxu0 0
    %1361 = vmatprep.subr.bf16.mxu0 0
    %1362 = vmatpush1.bf16.msra.mxu0 0
    %1363 = vmatprep.subr.bf16.mxu0 0
    %1364 = vmatpush1.bf16.msra.mxu0 0
    %1365 = vmatprep.subr.bf16.mxu0 0
    %1366 = vmatpush1.bf16.msra.mxu0 0
    %1367 = vmatprep.subr.bf16.mxu0 0
    %1368 = vmatpush1.bf16.msra.mxu0 0
    %1369 = vmatprep.subr.bf16.mxu0 0
    %1370 = vmatpush1.bf16.msra.mxu0 0
    %1371 = vmatprep.subr.bf16.mxu0 0
    %1372 = vmatpush1.bf16.msra.mxu0 0
    %1373 = vmatprep.subr.bf16.mxu0 0
    %1374 = vmatpush1.bf16.msra.mxu0 0
    %1375 = vmatprep.subr.bf16.mxu0 0
    %1376 = vmatpush1.bf16.msra.mxu0 0
    %1377 = vmatprep.subr.bf16.mxu0 0
    %1378 = vmatpush1.bf16.msra.mxu0 0
    %1379 = vmatprep.subr.bf16.mxu0 0
    %1380 = vmatpush1.bf16.msra.mxu0 0
    %1381 = vmatprep.subr.bf16.mxu0 0
    %1382 = vmatpush1.bf16.msra.mxu0 0
    %1383 = vmatprep.subr.bf16.mxu0 0
    %1384 = vmatpush1.bf16.msra.mxu0 0
    %1385 = vmatprep.subr.bf16.mxu0 0
    %1386 = vmatpush1.bf16.msra.mxu0 0
    %1387 = vmatprep.mubr.bf16.mxu0 0
    %1388 = vmatmul.mubr.bf16.gmra.mrb[0].mxu0 %v1353
    %v1389 = vpop.f32.mrb[0].mxu0
    %v1390 = vadd.f32 %v1351, %v1389
    %v1391 = vpop.f32.mrb[0].mxu0
    %v1392 = vpop.f32.mrb[0].mxu0
    %v1393 = vadd.f32 %v1351, %v1392
    %v1394 = vpop.f32.mrb[0].mxu0
    %1395 = vdwg.mxu0
    %v1396 = vadd.f32 %v247, %v1390
    %v1397 = vadd.f32 %v248, %v1393
    %v1398 = vsel %vm308, %v1396, 0.0
    %1399 = vadd.xlane.f32.xlu0 %v1398
    %v1400 = vpop.xlane.xlu0 %1399
    %v1401 = vsel %vm308, %v1397, 0.0
    %1402 = vadd.xlane.f32.xlu0 %v1401
    %v1403 = vpop.xlane.xlu0 %1402
    %v1404 = vrcp.pop 32.0
    %v1405 = vmul.f32 %v1400, %v1404
    %v1406 = vmul.f32 %v1403, %v1404
    %v1407 = vsub.f32 %v1396, %v1405
    %v1408 = vsub.f32 %v1397, %v1406
    %v1409 = vmul.f32 %v1407, %v1407
    %v1410 = vmul.f32 %v1408, %v1408
    %v1411 = vsel %vm308, %v1409, 0.0
    %1412 = vadd.xlane.f32.xlu0 %v1411
    %v1413 = vpop.xlane.xlu0 %1412
    %v1414 = vsel %vm308, %v1410, 0.0
    %1415 = vadd.xlane.f32.xlu0 %v1414
    %v1416 = vpop.xlane.xlu0 %1415
    %v1417 = vmul.f32 %v1413, %v1404
    %v1418 = vmul.f32 %v1416, %v1404
    %v1419 = vadd.f32 %v1417, 1e-05
    %v1420 = vadd.f32 %v1418, 1e-05
    %v1421 = vrsqrt.pop %v1419
    %v1422 = vrsqrt.pop %v1420
    %v1423 = vmul.f32 %v1407, %v1421
    %v1424 = vmul.f32 %v1408, %v1422
    %v1425 = vlaneseq
    %v1426 = vshrl.u32 %v1425, 7
    %v1427 = vsub.s32 0, %v1426
    %v1428 = vrot.slane %v299, %v1427
    %v1429 = vmul.f32 %v1423, %v1428
    %v1430 = vmul.f32 %v1424, %v1428
    %v1431 = vlaneseq
    %v1432 = vshrl.u32 %v1431, 7
    %v1433 = vsub.s32 0, %v1432
    %v1434 = vrot.slane %v300, %v1433
    %v1435 = vadd.f32 %v1429, %v1434
    %v1436 = vadd.f32 %v1430, %v1434
    %v1437 = vpack.c.bf16 %v1436, %v1435
    %v1438 = vlaneseq
    %v1439 = vshrl.u32 %v1438, 7
    %v1440 = vsub.s32 0, %v1439
    %v1441 = vrot.slane %v285, %v1440
    %v1443 = vsel %vm308, %v1437, 0
    %1445 = vmatprep.subr.bf16.mxu0 0
    %1446 = vmatpush1.bf16.msra.mxu0 %v283
    %1447 = vmatprep.subr.bf16.mxu0 0
    %1448 = vmatpush1.bf16.msra.mxu0 %v284
    %1449 = vmatprep.subr.bf16.mxu0 0
    %1450 = vmatpush1.bf16.msra.mxu0 0
    %1451 = vmatprep.subr.bf16.mxu0 0
    %1452 = vmatpush1.bf16.msra.mxu0 0
    %1453 = vmatprep.subr.bf16.mxu0 0
    %1454 = vmatpush1.bf16.msra.mxu0 0
    %1455 = vmatprep.subr.bf16.mxu0 0
    %1456 = vmatpush1.bf16.msra.mxu0 0
    %1457 = vmatprep.subr.bf16.mxu0 0
    %1458 = vmatpush1.bf16.msra.mxu0 0
    %1459 = vmatprep.subr.bf16.mxu0 0
    %1460 = vmatpush1.bf16.msra.mxu0 0
    %1461 = vmatprep.subr.bf16.mxu0 0
    %1462 = vmatpush1.bf16.msra.mxu0 0
    %1463 = vmatprep.subr.bf16.mxu0 0
    %1464 = vmatpush1.bf16.msra.mxu0 0
    %1465 = vmatprep.subr.bf16.mxu0 0
    %1466 = vmatpush1.bf16.msra.mxu0 0
    %1467 = vmatprep.subr.bf16.mxu0 0
    %1468 = vmatpush1.bf16.msra.mxu0 0
    %1469 = vmatprep.subr.bf16.mxu0 0
    %1470 = vmatpush1.bf16.msra.mxu0 0
    %1471 = vmatprep.subr.bf16.mxu0 0
    %1472 = vmatpush1.bf16.msra.mxu0 0
    %1473 = vmatprep.subr.bf16.mxu0 0
    %1474 = vmatpush1.bf16.msra.mxu0 0
    %1475 = vmatprep.subr.bf16.mxu0 0
    %1476 = vmatpush1.bf16.msra.mxu0 0
    %1477 = vmatprep.mubr.bf16.mxu0 0
    %1478 = vmatmul.mubr.bf16.gmra.mrb[0].mxu0 %v1443
    %v1479 = vpop.f32.mrb[0].mxu0
    %v1480 = vadd.f32 %v1441, %v1479
    %v1481 = vpop.f32.mrb[0].mxu0
    %v1482 = vpop.f32.mrb[0].mxu0
    %v1483 = vadd.f32 %v1441, %v1482
    %v1484 = vpop.f32.mrb[0].mxu0
    %1485 = vdwg.mxu0
    %v1486 = vmax.f32 %v1480, 0.0
    %v1487 = vmax.f32 %v1483, 0.0
    %v1488 = vpack.c.bf16 %v1487, %v1486
    %v1489 = vlaneseq
    %v1490 = vshrl.u32 %v1489, 7
    %v1491 = vsub.s32 0, %v1490
    %v1492 = vrot.slane %v298, %v1491
    %vm1493 = vcmask 523264
    %v1495 = vsel %vm1493, %v1488, 0
    %1497 = vmatprep.subr.bf16.mxu0 0
    %1498 = vmatpush1.bf16.msra.mxu0 %v294
    %1499 = vmatprep.subr.bf16.mxu0 0
    %1500 = vmatpush1.bf16.msra.mxu0 %v295
    %1501 = vmatprep.subr.bf16.mxu0 0
    %1502 = vmatpush1.bf16.msra.mxu0 %v296
    %1503 = vmatprep.subr.bf16.mxu0 0
    %1504 = vmatpush1.bf16.msra.mxu0 %v297
    %1505 = vmatprep.subr.bf16.mxu0 0
    %1506 = vmatpush1.bf16.msra.mxu0 0
    %1507 = vmatprep.subr.bf16.mxu0 0
    %1508 = vmatpush1.bf16.msra.mxu0 0
    %1509 = vmatprep.subr.bf16.mxu0 0
    %1510 = vmatpush1.bf16.msra.mxu0 0
    %1511 = vmatprep.subr.bf16.mxu0 0
    %1512 = vmatpush1.bf16.msra.mxu0 0
    %1513 = vmatprep.subr.bf16.mxu0 0
    %1514 = vmatpush1.bf16.msra.mxu0 0
    %1515 = vmatprep.subr.bf16.mxu0 0
    %1516 = vmatpush1.bf16.msra.mxu0 0
    %1517 = vmatprep.subr.bf16.mxu0 0
    %1518 = vmatpush1.bf16.msra.mxu0 0
    %1519 = vmatprep.subr.bf16.mxu0 0
    %1520 = vmatpush1.bf16.msra.mxu0 0
    %1521 = vmatprep.subr.bf16.mxu0 0
    %1522 = vmatpush1.bf16.msra.mxu0 0
    %1523 = vmatprep.subr.bf16.mxu0 0
    %1524 = vmatpush1.bf16.msra.mxu0 0
    %1525 = vmatprep.subr.bf16.mxu0 0
    %1526 = vmatpush1.bf16.msra.mxu0 0
    %1527 = vmatprep.subr.bf16.mxu0 0
    %1528 = vmatpush1.bf16.msra.mxu0 0
    %1529 = vmatprep.mubr.bf16.mxu0 0
    %1530 = vmatmul.mubr.bf16.gmra.mrb[0].mxu0 %v1495
    %v1531 = vpop.f32.mrb[0].mxu0
    %v1532 = vadd.f32 %v1492, %v1531
    %v1533 = vpop.f32.mrb[0].mxu0
    %v1534 = vpop.f32.mrb[0].mxu0
    %v1535 = vadd.f32 %v1492, %v1534
    %v1536 = vpop.f32.mrb[0].mxu0
    %1537 = vdwg.mxu0
    %v1538 = vadd.f32 %v1435, %v1532
    %v1539 = vadd.f32 %v1436, %v1535
    %v1540 = vsel %vm308, %v1538, 0.0
    %1541 = vadd.xlane.f32.xlu0 %v1540
    %v1542 = vpop.xlane.xlu0 %1541
    %v1543 = vsel %vm308, %v1539, 0.0
    %1544 = vadd.xlane.f32.xlu0 %v1543
    %v1545 = vpop.xlane.xlu0 %1544
    %v1546 = vmul.f32 %v1542, %v1404
    %v1547 = vmul.f32 %v1545, %v1404
    %v1548 = vsub.f32 %v1538, %v1546
    %v1549 = vsub.f32 %v1539, %v1547
    %v1550 = vmul.f32 %v1548, %v1548
    %v1551 = vmul.f32 %v1549, %v1549
    %v1552 = vsel %vm308, %v1550, 0.0
    %1553 = vadd.xlane.f32.xlu0 %v1552
    %v1554 = vpop.xlane.xlu0 %1553
    %v1555 = vsel %vm308, %v1551, 0.0
    %1556 = vadd.xlane.f32.xlu0 %v1555
    %v1557 = vpop.xlane.xlu0 %1556
    %v1558 = vmul.f32 %v1554, %v1404
    %v1559 = vmul.f32 %v1557, %v1404
    %v1560 = vadd.f32 %v1558, 1e-05
    %v1561 = vadd.f32 %v1559, 1e-05
    %v1562 = vrsqrt.pop %v1560
    %v1563 = vrsqrt.pop %v1561
    %v1564 = vmul.f32 %v1548, %v1562
    %v1565 = vmul.f32 %v1549, %v1563
    %v1566 = vlaneseq
    %v1567 = vshrl.u32 %v1566, 7
    %v1568 = vsub.s32 0, %v1567
    %v1569 = vrot.slane %v301, %v1568
    %v1570 = vmul.f32 %v1564, %v1569
    %v1571 = vmul.f32 %v1565, %v1569
    %v1572 = vlaneseq
    %v1573 = vshrl.u32 %v1572, 7
    %v1574 = vsub.s32 0, %v1573
    %v1575 = vrot.slane %v302, %v1574
    %v1576 = vadd.f32 %v1570, %v1575
    %v1577 = vadd.f32 %v1571, %v1575
    %s1578 = scalar_lea.vmem %s6, 96
    %v1579 = vld [vmem:[%s1578] sm:$0xff]
    %v1580 = vld [vmem:[%s1578 + $0x8] sm:$0xff]
    %v1581 = vld [vmem:[%s1578 + $0x10] sm:$0xff]
    %v1582 = vld [vmem:[%s1578 + $0x18] sm:$0xff]
    %v1583 = vpack.c.bf16 %v1580, %v1579
    %v1584 = vpack.c.bf16 %v1582, %v1581
    %s1585 = scalar_lea.vmem %s6, 128
    %v1586 = vld [vmem:[%s1585] sm:$0xff]
    %v1587 = vld [vmem:[%s1585 + $0x8] sm:$0xff]
    %v1588 = vld [vmem:[%s1585 + $0x10] sm:$0xff]
    %v1589 = vld [vmem:[%s1585 + $0x18] sm:$0xff]
    %v1590 = vpack.c.bf16 %v1587, %v1586
    %v1591 = vpack.c.bf16 %v1589, %v1588
    %s1592 = scalar_lea.vmem %s6, 160
    %v1593 = vld [vmem:[%s1592] sm:$0xff]
    %v1594 = vld [vmem:[%s1592 + $0x8] sm:$0xff]
    %v1595 = vld [vmem:[%s1592 + $0x10] sm:$0xff]
    %v1596 = vld [vmem:[%s1592 + $0x18] sm:$0xff]
    %v1597 = vpack.c.bf16 %v1594, %v1593
    %v1598 = vpack.c.bf16 %v1596, %v1595
    %s1599 = scalar_lea.vmem %s7, 4
    %v1600 = vld [vmem:[%s1599] sm:$0x1]
    %v1601 = vld [vmem:[%s1599 + $0x1] sm:$0x1]
    %v1602 = vld [vmem:[%s1599 + $0x2] sm:$0x1]
    %s1603 = scalar_lea.vmem [#allocation8], 32
    %v1604 = vld [vmem:[%s1603] sm:$0xff]
    %v1605 = vld [vmem:[%s1603 + $0x8] sm:$0xff]
    %v1606 = vld [vmem:[%s1603 + $0x10] sm:$0xff]
    %v1607 = vld [vmem:[%s1603 + $0x18] sm:$0xff]
    %v1608 = vpack.c.bf16 %v1605, %v1604
    %v1609 = vpack.c.bf16 %v1607, %v1606
    %v1610 = vld [vmem:[%s9 + $0x1] sm:$0x1]
    %s1611 = scalar_lea.vmem [#allocation13], 32
    %v1612 = vld [vmem:[%s1611] sm:$0xff]
    %v1613 = vld [vmem:[%s1611 + $0x8] sm:$0xff]
    %v1614 = vld [vmem:[%s1611 + $0x10] sm:$0xff]
    %v1615 = vld [vmem:[%s1611 + $0x18] sm:$0xff]
    %v1616 = vpack.c.bf16 %v1613, %v1612
    %v1617 = vpack.c.bf16 %v1615, %v1614
    %v1618 = vld [vmem:[#allocation14 + $0x1] sm:$0x1]
    %s1619 = scalar_lea.vmem %s14, 64
    %v1620 = vld [vmem:[%s1619] sm:$0xff]
    %v1621 = vld [vmem:[%s1619 + $0x8] sm:$0xff]
    %v1622 = vld [vmem:[%s1619 + $0x10] sm:$0xff]
    %v1623 = vld [vmem:[%s1619 + $0x18] sm:$0xff]
    %v1624 = vld [vmem:[%s1619 + $0x20] sm:$0xff]
    %v1625 = vld [vmem:[%s1619 + $0x28] sm:$0xff]
    %v1626 = vld [vmem:[%s1619 + $0x30] sm:$0xff]
    %v1627 = vld [vmem:[%s1619 + $0x38] sm:$0xff]
    %v1628 = vpack.c.bf16 %v1621, %v1620
    %v1629 = vpack.c.bf16 %v1623, %v1622
    %v1630 = vpack.c.bf16 %v1625, %v1624
    %v1631 = vpack.c.bf16 %v1627, %v1626
    %v1632 = vld [vmem:[#allocation16 + $0x1] sm:$0x1]
    %v1633 = vld [vmem:[#allocation10 + $0x1] sm:$0x1]
    %v1634 = vld [vmem:[#allocation11 + $0x1] sm:$0x1]
    %v1635 = vld [vmem:[%s16 + $0x1] sm:$0x1]
    %v1636 = vld [vmem:[%s17 + $0x1] sm:$0x1]
    %v1637 = vpack.c.bf16 %v1577, %v1576
    %v1638 = vlaneseq
    %v1639 = vshrl.u32 %v1638, 7
    %v1640 = vsub.s32 0, %v1639
    %v1641 = vrot.slane %v1600, %v1640
    %v1643 = vsel %vm308, %v1637, 0
    %1645 = vmatprep.subr.bf16.mxu0 0
    %1646 = vmatpush1.bf16.msra.mxu0 %v1583
    %1647 = vmatprep.subr.bf16.mxu0 0
    %1648 = vmatpush1.bf16.msra.mxu0 %v1584
    %1649 = vmatprep.subr.bf16.mxu0 0
    %1650 = vmatpush1.bf16.msra.mxu0 0
    %1651 = vmatprep.subr.bf16.mxu0 0
    %1652 = vmatpush1.bf16.msra.mxu0 0
    %1653 = vmatprep.subr.bf16.mxu0 0
    %1654 = vmatpush1.bf16.msra.mxu0 0
    %1655 = vmatprep.subr.bf16.mxu0 0
    %1656 = vmatpush1.bf16.msra.mxu0 0
    %1657 = vmatprep.subr.bf16.mxu0 0
    %1658 = vmatpush1.bf16.msra.mxu0 0
    %1659 = vmatprep.subr.bf16.mxu0 0
    %1660 = vmatpush1.bf16.msra.mxu0 0
    %1661 = vmatprep.subr.bf16.mxu0 0
    %1662 = vmatpush1.bf16.msra.mxu0 0
    %1663 = vmatprep.subr.bf16.mxu0 0
    %1664 = vmatpush1.bf16.msra.mxu0 0
    %1665 = vmatprep.subr.bf16.mxu0 0
    %1666 = vmatpush1.bf16.msra.mxu0 0
    %1667 = vmatprep.subr.bf16.mxu0 0
    %1668 = vmatpush1.bf16.msra.mxu0 0
    %1669 = vmatprep.subr.bf16.mxu0 0
    %1670 = vmatpush1.bf16.msra.mxu0 0
    %1671 = vmatprep.subr.bf16.mxu0 0
    %1672 = vmatpush1.bf16.msra.mxu0 0
    %1673 = vmatprep.subr.bf16.mxu0 0
    %1674 = vmatpush1.bf16.msra.mxu0 0
    %1675 = vmatprep.subr.bf16.mxu0 0
    %1676 = vmatpush1.bf16.msra.mxu0 0
    %1677 = vmatprep.mubr.bf16.mxu0 0
    %1678 = vmatmul.mubr.bf16.gmra.mrb[0].mxu0 %v1643
    %v1679 = vpop.f32.mrb[0].mxu0
    %v1680 = vadd.f32 %v1641, %v1679
    %v1681 = vpop.f32.mrb[0].mxu0
    %v1682 = vpop.f32.mrb[0].mxu0
    %v1683 = vadd.f32 %v1641, %v1682
    %v1684 = vpop.f32.mrb[0].mxu0
    %1685 = vdwg.mxu0
    %v1686 = vlaneseq
    %v1687 = vshrl.u32 %v1686, 7
    %v1688 = vsub.s32 0, %v1687
    %v1689 = vrot.slane %v1601, %v1688
    %1690 = vmatprep.subr.bf16.mxu0 0
    %1691 = vmatpush1.bf16.msra.mxu0 %v1590
    %1692 = vmatprep.subr.bf16.mxu0 0
    %1693 = vmatpush1.bf16.msra.mxu0 %v1591
    %1694 = vmatprep.subr.bf16.mxu0 0
    %1695 = vmatpush1.bf16.msra.mxu0 0
    %1696 = vmatprep.subr.bf16.mxu0 0
    %1697 = vmatpush1.bf16.msra.mxu0 0
    %1698 = vmatprep.subr.bf16.mxu0 0
    %1699 = vmatpush1.bf16.msra.mxu0 0
    %1700 = vmatprep.subr.bf16.mxu0 0
    %1701 = vmatpush1.bf16.msra.mxu0 0
    %1702 = vmatprep.subr.bf16.mxu0 0
    %1703 = vmatpush1.bf16.msra.mxu0 0
    %1704 = vmatprep.subr.bf16.mxu0 0
    %1705 = vmatpush1.bf16.msra.mxu0 0
    %1706 = vmatprep.subr.bf16.mxu0 0
    %1707 = vmatpush1.bf16.msra.mxu0 0
    %1708 = vmatprep.subr.bf16.mxu0 0
    %1709 = vmatpush1.bf16.msra.mxu0 0
    %1710 = vmatprep.subr.bf16.mxu0 0
    %1711 = vmatpush1.bf16.msra.mxu0 0
    %1712 = vmatprep.subr.bf16.mxu0 0
    %1713 = vmatpush1.bf16.msra.mxu0 0
    %1714 = vmatprep.subr.bf16.mxu0 0
    %1715 = vmatpush1.bf16.msra.mxu0 0
    %1716 = vmatprep.subr.bf16.mxu0 0
    %1717 = vmatpush1.bf16.msra.mxu0 0
    %1718 = vmatprep.subr.bf16.mxu0 0
    %1719 = vmatpush1.bf16.msra.mxu0 0
    %1720 = vmatprep.subr.bf16.mxu0 0
    %1721 = vmatpush1.bf16.msra.mxu0 0
    %1722 = vmatprep.mubr.bf16.mxu0 0
    %1723 = vmatmul.mubr.bf16.gmra.mrb[0].mxu0 %v1643
    %v1724 = vpop.f32.mrb[0].mxu0
    %v1725 = vadd.f32 %v1689, %v1724
    %v1726 = vpop.f32.mrb[0].mxu0
    %v1727 = vpop.f32.mrb[0].mxu0
    %v1728 = vadd.f32 %v1689, %v1727
    %v1729 = vpop.f32.mrb[0].mxu0
    %1730 = vdwg.mxu0
    %v1731 = vlaneseq
    %v1732 = vshrl.u32 %v1731, 7
    %v1733 = vsub.s32 0, %v1732
    %v1734 = vrot.slane %v1602, %v1733
    %1735 = vmatprep.subr.bf16.mxu0 0
    %1736 = vmatpush1.bf16.msra.mxu0 %v1597
    %1737 = vmatprep.subr.bf16.mxu0 0
    %1738 = vmatpush1.bf16.msra.mxu0 %v1598
    %1739 = vmatprep.subr.bf16.mxu0 0
    %1740 = vmatpush1.bf16.msra.mxu0 0
    %1741 = vmatprep.subr.bf16.mxu0 0
    %1742 = vmatpush1.bf16.msra.mxu0 0
    %1743 = vmatprep.subr.bf16.mxu0 0
    %1744 = vmatpush1.bf16.msra.mxu0 0
    %1745 = vmatprep.subr.bf16.mxu0 0
    %1746 = vmatpush1.bf16.msra.mxu0 0
    %1747 = vmatprep.subr.bf16.mxu0 0
    %1748 = vmatpush1.bf16.msra.mxu0 0
    %1749 = vmatprep.subr.bf16.mxu0 0
    %1750 = vmatpush1.bf16.msra.mxu0 0
    %1751 = vmatprep.subr.bf16.mxu0 0
    %1752 = vmatpush1.bf16.msra.mxu0 0
    %1753 = vmatprep.subr.bf16.mxu0 0
    %1754 = vmatpush1.bf16.msra.mxu0 0
    %1755 = vmatprep.subr.bf16.mxu0 0
    %1756 = vmatpush1.bf16.msra.mxu0 0
    %1757 = vmatprep.subr.bf16.mxu0 0
    %1758 = vmatpush1.bf16.msra.mxu0 0
    %1759 = vmatprep.subr.bf16.mxu0 0
    %1760 = vmatpush1.bf16.msra.mxu0 0
    %1761 = vmatprep.subr.bf16.mxu0 0
    %1762 = vmatpush1.bf16.msra.mxu0 0
    %1763 = vmatprep.subr.bf16.mxu0 0
    %1764 = vmatpush1.bf16.msra.mxu0 0
    %1765 = vmatprep.subr.bf16.mxu0 0
    %1766 = vmatpush1.bf16.msra.mxu0 0
    %1767 = vmatprep.mubr.bf16.mxu0 0
    %1768 = vmatmul.mubr.bf16.gmra.mrb[0].mxu0 %v1643
    %v1769 = vpop.f32.mrb[0].mxu0
    %v1770 = vadd.f32 %v1734, %v1769
    %v1771 = vpop.f32.mrb[0].mxu0
    %v1772 = vpop.f32.mrb[0].mxu0
    %v1773 = vadd.f32 %v1734, %v1772
    %v1774 = vpop.f32.mrb[0].mxu0
    %1775 = vdwg.mxu0
    %v1776 = vmul.f32 %v1680, %v450
    %v1777 = vmul.f32 %v1683, %v450
    %v1778 = vmul.f32 %v1680, %v454
    %v1779 = vmul.f32 %v1683, %v454
    %v1780 = vmul.f32 %v1680, %v458
    %v1781 = vmul.f32 %v1683, %v458
    %v1782 = vmul.f32 %v1680, %v462
    %v1783 = vmul.f32 %v1683, %v462
    %v1784 = vpack.c.bf16 %v1776, %v1776
    %v1785 = vpack.c.bf16 %v1777, %v1777
    %v1786 = vpack.c.bf16 %v1778, %v1778
    %v1787 = vpack.c.bf16 %v1779, %v1779
    %v1788 = vpack.c.bf16 %v1780, %v1780
    %v1789 = vpack.c.bf16 %v1781, %v1781
    %v1790 = vpack.c.bf16 %v1782, %v1782
    %v1791 = vpack.c.bf16 %v1783, %v1783
    %v1792 = vmul.f32 %v1770, %v490
    %v1793 = vmul.f32 %v1773, %v490
    %v1794 = vmul.f32 %v1770, %v494
    %v1795 = vmul.f32 %v1773, %v494
    %v1796 = vmul.f32 %v1770, %v498
    %v1797 = vmul.f32 %v1773, %v498
    %v1798 = vmul.f32 %v1770, %v502
    %v1799 = vmul.f32 %v1773, %v502
    %v1800 = vpack.c.bf16 %v1792, %v1792
    %v1801 = vpack.c.bf16 %v1793, %v1793
    %v1802 = vpack.c.bf16 %v1794, %v1794
    %v1803 = vpack.c.bf16 %v1795, %v1795
    %v1804 = vpack.c.bf16 %v1796, %v1796
    %v1805 = vpack.c.bf16 %v1797, %v1797
    %v1806 = vpack.c.bf16 %v1798, %v1798
    %v1807 = vpack.c.bf16 %v1799, %v1799
    %v1808 = vpack.c.bf16 %v1725, %v1725
    %v1809 = vpack.c.bf16 %v1728, %v1728
    %v1811 = vsel %vm308, %v1784, 0
    %v1814 = vsel %vm308, %v1808, 0
    %1816 = vmatprep.subr.bf16.mxu0 0
    %1817 = vmatpush1.bf16.xpose.msra.mxu0 %v1814
    %1818 = vmatprep.subr.bf16.mxu0 0
    %1819 = vmatpush1.bf16.xpose.msra.mxu0 0
    %1820 = vmatprep.subr.bf16.mxu0 0
    %1821 = vmatpush1.bf16.xpose.msra.mxu0 0
    %1822 = vmatprep.subr.bf16.mxu0 0
    %1823 = vmatpush1.bf16.xpose.msra.mxu0 0
    %1824 = vmatprep.subr.bf16.mxu0 0
    %1825 = vmatpush1.bf16.xpose.msra.mxu0 0
    %1826 = vmatprep.subr.bf16.mxu0 0
    %1827 = vmatpush1.bf16.xpose.msra.mxu0 0
    %1828 = vmatprep.subr.bf16.mxu0 0
    %1829 = vmatpush1.bf16.xpose.msra.mxu0 0
    %1830 = vmatprep.subr.bf16.mxu0 0
    %1831 = vmatpush1.bf16.xpose.msra.mxu0 0
    %1832 = vmatprep.subr.bf16.mxu0 0
    %1833 = vmatpush1.bf16.xpose.msra.mxu0 0
    %1834 = vmatprep.subr.bf16.mxu0 0
    %1835 = vmatpush1.bf16.xpose.msra.mxu0 0
    %1836 = vmatprep.subr.bf16.mxu0 0
    %1837 = vmatpush1.bf16.xpose.msra.mxu0 0
    %1838 = vmatprep.subr.bf16.mxu0 0
    %1839 = vmatpush1.bf16.xpose.msra.mxu0 0
    %1840 = vmatprep.subr.bf16.mxu0 0
    %1841 = vmatpush1.bf16.xpose.msra.mxu0 0
    %1842 = vmatprep.subr.bf16.mxu0 0
    %1843 = vmatpush1.bf16.xpose.msra.mxu0 0
    %1844 = vmatprep.subr.bf16.mxu0 0
    %1845 = vmatpush1.bf16.xpose.msra.mxu0 0
    %1846 = vmatprep.subr.bf16.mxu0 0
    %1847 = vmatpush1.bf16.xpose.msra.mxu0 0
    %1848 = vmatprep.mubr.bf16.mxu0 0
    %1849 = vmatmul.mubr.bf16.gmra.mrb[0].mxu0 %v1811
    %v1850 = vpop.f32.mrb[0].mxu0
    %v1851 = vadd.f32 0.0, %v1850
    %v1852 = vpop.f32.mrb[0].mxu0
    %v1853 = vpop.f32.mrb[0].mxu0
    %v1854 = vpop.f32.mrb[0].mxu0
    %1855 = vdwg.mxu0
    %v1857 = vsel %vm308, %v1785, 0
    %v1860 = vsel %vm308, %v1809, 0
    %1862 = vmatprep.subr.bf16.mxu0 0
    %1863 = vmatpush1.bf16.xpose.msra.mxu0 %v1860
    %1864 = vmatprep.subr.bf16.mxu0 0
    %1865 = vmatpush1.bf16.xpose.msra.mxu0 0
    %1866 = vmatprep.subr.bf16.mxu0 0
    %1867 = vmatpush1.bf16.xpose.msra.mxu0 0
    %1868 = vmatprep.subr.bf16.mxu0 0
    %1869 = vmatpush1.bf16.xpose.msra.mxu0 0
    %1870 = vmatprep.subr.bf16.mxu0 0
    %1871 = vmatpush1.bf16.xpose.msra.mxu0 0
    %1872 = vmatprep.subr.bf16.mxu0 0
    %1873 = vmatpush1.bf16.xpose.msra.mxu0 0
    %1874 = vmatprep.subr.bf16.mxu0 0
    %1875 = vmatpush1.bf16.xpose.msra.mxu0 0
    %1876 = vmatprep.subr.bf16.mxu0 0
    %1877 = vmatpush1.bf16.xpose.msra.mxu0 0
    %1878 = vmatprep.subr.bf16.mxu0 0
    %1879 = vmatpush1.bf16.xpose.msra.mxu0 0
    %1880 = vmatprep.subr.bf16.mxu0 0
    %1881 = vmatpush1.bf16.xpose.msra.mxu0 0
    %1882 = vmatprep.subr.bf16.mxu0 0
    %1883 = vmatpush1.bf16.xpose.msra.mxu0 0
    %1884 = vmatprep.subr.bf16.mxu0 0
    %1885 = vmatpush1.bf16.xpose.msra.mxu0 0
    %1886 = vmatprep.subr.bf16.mxu0 0
    %1887 = vmatpush1.bf16.xpose.msra.mxu0 0
    %1888 = vmatprep.subr.bf16.mxu0 0
    %1889 = vmatpush1.bf16.xpose.msra.mxu0 0
    %1890 = vmatprep.subr.bf16.mxu0 0
    %1891 = vmatpush1.bf16.xpose.msra.mxu0 0
    %1892 = vmatprep.subr.bf16.mxu0 0
    %1893 = vmatpush1.bf16.xpose.msra.mxu0 0
    %1894 = vmatprep.mubr.bf16.mxu0 0
    %1895 = vmatmul.mubr.bf16.gmra.mrb[0].mxu0 %v1857
    %v1896 = vpop.f32.mrb[0].mxu0
    %v1897 = vadd.f32 0.0, %v1896
    %v1898 = vpop.f32.mrb[0].mxu0
    %v1899 = vpop.f32.mrb[0].mxu0
    %v1900 = vpop.f32.mrb[0].mxu0
    %1901 = vdwg.mxu0
    %v1903 = vsel %vm308, %v1786, 0
    %1905 = vmatprep.subr.bf16.mxu0 0
    %1906 = vmatpush1.bf16.xpose.msra.mxu0 %v1814
    %1907 = vmatprep.subr.bf16.mxu0 0
    %1908 = vmatpush1.bf16.xpose.msra.mxu0 0
    %1909 = vmatprep.subr.bf16.mxu0 0
    %1910 = vmatpush1.bf16.xpose.msra.mxu0 0
    %1911 = vmatprep.subr.bf16.mxu0 0
    %1912 = vmatpush1.bf16.xpose.msra.mxu0 0
    %1913 = vmatprep.subr.bf16.mxu0 0
    %1914 = vmatpush1.bf16.xpose.msra.mxu0 0
    %1915 = vmatprep.subr.bf16.mxu0 0
    %1916 = vmatpush1.bf16.xpose.msra.mxu0 0
    %1917 = vmatprep.subr.bf16.mxu0 0
    %1918 = vmatpush1.bf16.xpose.msra.mxu0 0
    %1919 = vmatprep.subr.bf16.mxu0 0
    %1920 = vmatpush1.bf16.xpose.msra.mxu0 0
    %1921 = vmatprep.subr.bf16.mxu0 0
    %1922 = vmatpush1.bf16.xpose.msra.mxu0 0
    %1923 = vmatprep.subr.bf16.mxu0 0
    %1924 = vmatpush1.bf16.xpose.msra.mxu0 0
    %1925 = vmatprep.subr.bf16.mxu0 0
    %1926 = vmatpush1.bf16.xpose.msra.mxu0 0
    %1927 = vmatprep.subr.bf16.mxu0 0
    %1928 = vmatpush1.bf16.xpose.msra.mxu0 0
    %1929 = vmatprep.subr.bf16.mxu0 0
    %1930 = vmatpush1.bf16.xpose.msra.mxu0 0
    %1931 = vmatprep.subr.bf16.mxu0 0
    %1932 = vmatpush1.bf16.xpose.msra.mxu0 0
    %1933 = vmatprep.subr.bf16.mxu0 0
    %1934 = vmatpush1.bf16.xpose.msra.mxu0 0
    %1935 = vmatprep.subr.bf16.mxu0 0
    %1936 = vmatpush1.bf16.xpose.msra.mxu0 0
    %1937 = vmatprep.mubr.bf16.mxu0 0
    %1938 = vmatmul.mubr.bf16.gmra.mrb[0].mxu0 %v1903
    %v1939 = vpop.f32.mrb[0].mxu0
    %v1940 = vadd.f32 0.0, %v1939
    %v1941 = vpop.f32.mrb[0].mxu0
    %v1942 = vpop.f32.mrb[0].mxu0
    %v1943 = vpop.f32.mrb[0].mxu0
    %1944 = vdwg.mxu0
    %v1946 = vsel %vm308, %v1787, 0
    %1948 = vmatprep.subr.bf16.mxu0 0
    %1949 = vmatpush1.bf16.xpose.msra.mxu0 %v1860
    %1950 = vmatprep.subr.bf16.mxu0 0
    %1951 = vmatpush1.bf16.xpose.msra.mxu0 0
    %1952 = vmatprep.subr.bf16.mxu0 0
    %1953 = vmatpush1.bf16.xpose.msra.mxu0 0
    %1954 = vmatprep.subr.bf16.mxu0 0
    %1955 = vmatpush1.bf16.xpose.msra.mxu0 0
    %1956 = vmatprep.subr.bf16.mxu0 0
    %1957 = vmatpush1.bf16.xpose.msra.mxu0 0
    %1958 = vmatprep.subr.bf16.mxu0 0
    %1959 = vmatpush1.bf16.xpose.msra.mxu0 0
    %1960 = vmatprep.subr.bf16.mxu0 0
    %1961 = vmatpush1.bf16.xpose.msra.mxu0 0
    %1962 = vmatprep.subr.bf16.mxu0 0
    %1963 = vmatpush1.bf16.xpose.msra.mxu0 0
    %1964 = vmatprep.subr.bf16.mxu0 0
    %1965 = vmatpush1.bf16.xpose.msra.mxu0 0
    %1966 = vmatprep.subr.bf16.mxu0 0
    %1967 = vmatpush1.bf16.xpose.msra.mxu0 0
    %1968 = vmatprep.subr.bf16.mxu0 0
    %1969 = vmatpush1.bf16.xpose.msra.mxu0 0
    %1970 = vmatprep.subr.bf16.mxu0 0
    %1971 = vmatpush1.bf16.xpose.msra.mxu0 0
    %1972 = vmatprep.subr.bf16.mxu0 0
    %1973 = vmatpush1.bf16.xpose.msra.mxu0 0
    %1974 = vmatprep.subr.bf16.mxu0 0
    %1975 = vmatpush1.bf16.xpose.msra.mxu0 0
    %1976 = vmatprep.subr.bf16.mxu0 0
    %1977 = vmatpush1.bf16.xpose.msra.mxu0 0
    %1978 = vmatprep.subr.bf16.mxu0 0
    %1979 = vmatpush1.bf16.xpose.msra.mxu0 0
    %1980 = vmatprep.mubr.bf16.mxu0 0
    %1981 = vmatmul.mubr.bf16.gmra.mrb[0].mxu0 %v1946
    %v1982 = vpop.f32.mrb[0].mxu0
    %v1983 = vadd.f32 0.0, %v1982
    %v1984 = vpop.f32.mrb[0].mxu0
    %v1985 = vpop.f32.mrb[0].mxu0
    %v1986 = vpop.f32.mrb[0].mxu0
    %1987 = vdwg.mxu0
    %v1989 = vsel %vm308, %v1788, 0
    %1991 = vmatprep.subr.bf16.mxu0 0
    %1992 = vmatpush1.bf16.xpose.msra.mxu0 %v1814
    %1993 = vmatprep.subr.bf16.mxu0 0
    %1994 = vmatpush1.bf16.xpose.msra.mxu0 0
    %1995 = vmatprep.subr.bf16.mxu0 0
    %1996 = vmatpush1.bf16.xpose.msra.mxu0 0
    %1997 = vmatprep.subr.bf16.mxu0 0
    %1998 = vmatpush1.bf16.xpose.msra.mxu0 0
    %1999 = vmatprep.subr.bf16.mxu0 0
    %2000 = vmatpush1.bf16.xpose.msra.mxu0 0
    %2001 = vmatprep.subr.bf16.mxu0 0
    %2002 = vmatpush1.bf16.xpose.msra.mxu0 0
    %2003 = vmatprep.subr.bf16.mxu0 0
    %2004 = vmatpush1.bf16.xpose.msra.mxu0 0
    %2005 = vmatprep.subr.bf16.mxu0 0
    %2006 = vmatpush1.bf16.xpose.msra.mxu0 0
    %2007 = vmatprep.subr.bf16.mxu0 0
    %2008 = vmatpush1.bf16.xpose.msra.mxu0 0
    %2009 = vmatprep.subr.bf16.mxu0 0
    %2010 = vmatpush1.bf16.xpose.msra.mxu0 0
    %2011 = vmatprep.subr.bf16.mxu0 0
    %2012 = vmatpush1.bf16.xpose.msra.mxu0 0
    %2013 = vmatprep.subr.bf16.mxu0 0
    %2014 = vmatpush1.bf16.xpose.msra.mxu0 0
    %2015 = vmatprep.subr.bf16.mxu0 0
    %2016 = vmatpush1.bf16.xpose.msra.mxu0 0
    %2017 = vmatprep.subr.bf16.mxu0 0
    %2018 = vmatpush1.bf16.xpose.msra.mxu0 0
    %2019 = vmatprep.subr.bf16.mxu0 0
    %2020 = vmatpush1.bf16.xpose.msra.mxu0 0
    %2021 = vmatprep.subr.bf16.mxu0 0
    %2022 = vmatpush1.bf16.xpose.msra.mxu0 0
    %2023 = vmatprep.mubr.bf16.mxu0 0
    %2024 = vmatmul.mubr.bf16.gmra.mrb[0].mxu0 %v1989
    %v2025 = vpop.f32.mrb[0].mxu0
    %v2026 = vadd.f32 0.0, %v2025
    %v2027 = vpop.f32.mrb[0].mxu0
    %v2028 = vpop.f32.mrb[0].mxu0
    %v2029 = vpop.f32.mrb[0].mxu0
    %2030 = vdwg.mxu0
    %v2032 = vsel %vm308, %v1789, 0
    %2034 = vmatprep.subr.bf16.mxu0 0
    %2035 = vmatpush1.bf16.xpose.msra.mxu0 %v1860
    %2036 = vmatprep.subr.bf16.mxu0 0
    %2037 = vmatpush1.bf16.xpose.msra.mxu0 0
    %2038 = vmatprep.subr.bf16.mxu0 0
    %2039 = vmatpush1.bf16.xpose.msra.mxu0 0
    %2040 = vmatprep.subr.bf16.mxu0 0
    %2041 = vmatpush1.bf16.xpose.msra.mxu0 0
    %2042 = vmatprep.subr.bf16.mxu0 0
    %2043 = vmatpush1.bf16.xpose.msra.mxu0 0
    %2044 = vmatprep.subr.bf16.mxu0 0
    %2045 = vmatpush1.bf16.xpose.msra.mxu0 0
    %2046 = vmatprep.subr.bf16.mxu0 0
    %2047 = vmatpush1.bf16.xpose.msra.mxu0 0
    %2048 = vmatprep.subr.bf16.mxu0 0
    %2049 = vmatpush1.bf16.xpose.msra.mxu0 0
    %2050 = vmatprep.subr.bf16.mxu0 0
    %2051 = vmatpush1.bf16.xpose.msra.mxu0 0
    %2052 = vmatprep.subr.bf16.mxu0 0
    %2053 = vmatpush1.bf16.xpose.msra.mxu0 0
    %2054 = vmatprep.subr.bf16.mxu0 0
    %2055 = vmatpush1.bf16.xpose.msra.mxu0 0
    %2056 = vmatprep.subr.bf16.mxu0 0
    %2057 = vmatpush1.bf16.xpose.msra.mxu0 0
    %2058 = vmatprep.subr.bf16.mxu0 0
    %2059 = vmatpush1.bf16.xpose.msra.mxu0 0
    %2060 = vmatprep.subr.bf16.mxu0 0
    %2061 = vmatpush1.bf16.xpose.msra.mxu0 0
    %2062 = vmatprep.subr.bf16.mxu0 0
    %2063 = vmatpush1.bf16.xpose.msra.mxu0 0
    %2064 = vmatprep.subr.bf16.mxu0 0
    %2065 = vmatpush1.bf16.xpose.msra.mxu0 0
    %2066 = vmatprep.mubr.bf16.mxu0 0
    %2067 = vmatmul.mubr.bf16.gmra.mrb[0].mxu0 %v2032
    %v2068 = vpop.f32.mrb[0].mxu0
    %v2069 = vadd.f32 0.0, %v2068
    %v2070 = vpop.f32.mrb[0].mxu0
    %v2071 = vpop.f32.mrb[0].mxu0
    %v2072 = vpop.f32.mrb[0].mxu0
    %2073 = vdwg.mxu0
    %v2075 = vsel %vm308, %v1790, 0
    %2077 = vmatprep.subr.bf16.mxu0 0
    %2078 = vmatpush1.bf16.xpose.msra.mxu0 %v1814
    %2079 = vmatprep.subr.bf16.mxu0 0
    %2080 = vmatpush1.bf16.xpose.msra.mxu0 0
    %2081 = vmatprep.subr.bf16.mxu0 0
    %2082 = vmatpush1.bf16.xpose.msra.mxu0 0
    %2083 = vmatprep.subr.bf16.mxu0 0
    %2084 = vmatpush1.bf16.xpose.msra.mxu0 0
    %2085 = vmatprep.subr.bf16.mxu0 0
    %2086 = vmatpush1.bf16.xpose.msra.mxu0 0
    %2087 = vmatprep.subr.bf16.mxu0 0
    %2088 = vmatpush1.bf16.xpose.msra.mxu0 0
    %2089 = vmatprep.subr.bf16.mxu0 0
    %2090 = vmatpush1.bf16.xpose.msra.mxu0 0
    %2091 = vmatprep.subr.bf16.mxu0 0
    %2092 = vmatpush1.bf16.xpose.msra.mxu0 0
    %2093 = vmatprep.subr.bf16.mxu0 0
    %2094 = vmatpush1.bf16.xpose.msra.mxu0 0
    %2095 = vmatprep.subr.bf16.mxu0 0
    %2096 = vmatpush1.bf16.xpose.msra.mxu0 0
    %2097 = vmatprep.subr.bf16.mxu0 0
    %2098 = vmatpush1.bf16.xpose.msra.mxu0 0
    %2099 = vmatprep.subr.bf16.mxu0 0
    %2100 = vmatpush1.bf16.xpose.msra.mxu0 0
    %2101 = vmatprep.subr.bf16.mxu0 0
    %2102 = vmatpush1.bf16.xpose.msra.mxu0 0
    %2103 = vmatprep.subr.bf16.mxu0 0
    %2104 = vmatpush1.bf16.xpose.msra.mxu0 0
    %2105 = vmatprep.subr.bf16.mxu0 0
    %2106 = vmatpush1.bf16.xpose.msra.mxu0 0
    %2107 = vmatprep.subr.bf16.mxu0 0
    %2108 = vmatpush1.bf16.xpose.msra.mxu0 0
    %2109 = vmatprep.mubr.bf16.mxu0 0
    %2110 = vmatmul.mubr.bf16.gmra.mrb[0].mxu0 %v2075
    %v2111 = vpop.f32.mrb[0].mxu0
    %v2112 = vadd.f32 0.0, %v2111
    %v2113 = vpop.f32.mrb[0].mxu0
    %v2114 = vpop.f32.mrb[0].mxu0
    %v2115 = vpop.f32.mrb[0].mxu0
    %2116 = vdwg.mxu0
    %v2118 = vsel %vm308, %v1791, 0
    %2120 = vmatprep.subr.bf16.mxu0 0
    %2121 = vmatpush1.bf16.xpose.msra.mxu0 %v1860
    %2122 = vmatprep.subr.bf16.mxu0 0
    %2123 = vmatpush1.bf16.xpose.msra.mxu0 0
    %2124 = vmatprep.subr.bf16.mxu0 0
    %2125 = vmatpush1.bf16.xpose.msra.mxu0 0
    %2126 = vmatprep.subr.bf16.mxu0 0
    %2127 = vmatpush1.bf16.xpose.msra.mxu0 0
    %2128 = vmatprep.subr.bf16.mxu0 0
    %2129 = vmatpush1.bf16.xpose.msra.mxu0 0
    %2130 = vmatprep.subr.bf16.mxu0 0
    %2131 = vmatpush1.bf16.xpose.msra.mxu0 0
    %2132 = vmatprep.subr.bf16.mxu0 0
    %2133 = vmatpush1.bf16.xpose.msra.mxu0 0
    %2134 = vmatprep.subr.bf16.mxu0 0
    %2135 = vmatpush1.bf16.xpose.msra.mxu0 0
    %2136 = vmatprep.subr.bf16.mxu0 0
    %2137 = vmatpush1.bf16.xpose.msra.mxu0 0
    %2138 = vmatprep.subr.bf16.mxu0 0
    %2139 = vmatpush1.bf16.xpose.msra.mxu0 0
    %2140 = vmatprep.subr.bf16.mxu0 0
    %2141 = vmatpush1.bf16.xpose.msra.mxu0 0
    %2142 = vmatprep.subr.bf16.mxu0 0
    %2143 = vmatpush1.bf16.xpose.msra.mxu0 0
    %2144 = vmatprep.subr.bf16.mxu0 0
    %2145 = vmatpush1.bf16.xpose.msra.mxu0 0
    %2146 = vmatprep.subr.bf16.mxu0 0
    %2147 = vmatpush1.bf16.xpose.msra.mxu0 0
    %2148 = vmatprep.subr.bf16.mxu0 0
    %2149 = vmatpush1.bf16.xpose.msra.mxu0 0
    %2150 = vmatprep.subr.bf16.mxu0 0
    %2151 = vmatpush1.bf16.xpose.msra.mxu0 0
    %2152 = vmatprep.mubr.bf16.mxu0 0
    %2153 = vmatmul.mubr.bf16.gmra.mrb[0].mxu0 %v2118
    %v2154 = vpop.f32.mrb[0].mxu0
    %v2155 = vadd.f32 0.0, %v2154
    %v2156 = vpop.f32.mrb[0].mxu0
    %v2157 = vpop.f32.mrb[0].mxu0
    %v2158 = vpop.f32.mrb[0].mxu0
    %2159 = vdwg.mxu0
    %v2160 = vsel %vm875, %v1851, -inf
    %2161 = vmax.xlane.f32.xlu0 %v2160
    %v2162 = vpop.xlane.xlu0 %2161
    %v2163 = vsel %vm875, %v1897, -inf
    %2164 = vmax.xlane.f32.xlu0 %v2163
    %v2165 = vpop.xlane.xlu0 %2164
    %v2166 = vsel %vm875, %v1940, -inf
    %2167 = vmax.xlane.f32.xlu0 %v2166
    %v2168 = vpop.xlane.xlu0 %2167
    %v2169 = vsel %vm875, %v1983, -inf
    %2170 = vmax.xlane.f32.xlu0 %v2169
    %v2171 = vpop.xlane.xlu0 %2170
    %v2172 = vsel %vm875, %v2026, -inf
    %2173 = vmax.xlane.f32.xlu0 %v2172
    %v2174 = vpop.xlane.xlu0 %2173
    %v2175 = vsel %vm875, %v2069, -inf
    %2176 = vmax.xlane.f32.xlu0 %v2175
    %v2177 = vpop.xlane.xlu0 %2176
    %v2178 = vsel %vm875, %v2112, -inf
    %2179 = vmax.xlane.f32.xlu0 %v2178
    %v2180 = vpop.xlane.xlu0 %2179
    %v2181 = vsel %vm875, %v2155, -inf
    %2182 = vmax.xlane.f32.xlu0 %v2181
    %v2183 = vpop.xlane.xlu0 %2182
    %v2184 = vsub.f32 %v1851, %v2162
    %v2185 = vsub.f32 %v1897, %v2165
    %v2186 = vsub.f32 %v1940, %v2168
    %v2187 = vsub.f32 %v1983, %v2171
    %v2188 = vsub.f32 %v2026, %v2174
    %v2189 = vsub.f32 %v2069, %v2177
    %v2190 = vsub.f32 %v2112, %v2180
    %v2191 = vsub.f32 %v2155, %v2183
    %v2192 = vmul.f32 %v2184, 1.442695
    %v2193 = vpow.pop %v2192
    %v2194 = vmul.f32 %v2185, 1.442695
    %v2195 = vpow.pop %v2194
    %v2196 = vmul.f32 %v2186, 1.442695
    %v2197 = vpow.pop %v2196
    %v2198 = vmul.f32 %v2187, 1.442695
    %v2199 = vpow.pop %v2198
    %v2200 = vmul.f32 %v2188, 1.442695
    %v2201 = vpow.pop %v2200
    %v2202 = vmul.f32 %v2189, 1.442695
    %v2203 = vpow.pop %v2202
    %v2204 = vmul.f32 %v2190, 1.442695
    %v2205 = vpow.pop %v2204
    %v2206 = vmul.f32 %v2191, 1.442695
    %v2207 = vpow.pop %v2206
    %v2208 = vsel %vm875, %v2193, 0.0
    %2209 = vadd.xlane.f32.xlu0 %v2208
    %v2210 = vpop.xlane.xlu0 %2209
    %v2211 = vsel %vm875, %v2195, 0.0
    %2212 = vadd.xlane.f32.xlu0 %v2211
    %v2213 = vpop.xlane.xlu0 %2212
    %v2214 = vsel %vm875, %v2197, 0.0
    %2215 = vadd.xlane.f32.xlu0 %v2214
    %v2216 = vpop.xlane.xlu0 %2215
    %v2217 = vsel %vm875, %v2199, 0.0
    %2218 = vadd.xlane.f32.xlu0 %v2217
    %v2219 = vpop.xlane.xlu0 %2218
    %v2220 = vsel %vm875, %v2201, 0.0
    %2221 = vadd.xlane.f32.xlu0 %v2220
    %v2222 = vpop.xlane.xlu0 %2221
    %v2223 = vsel %vm875, %v2203, 0.0
    %2224 = vadd.xlane.f32.xlu0 %v2223
    %v2225 = vpop.xlane.xlu0 %2224
    %v2226 = vsel %vm875, %v2205, 0.0
    %2227 = vadd.xlane.f32.xlu0 %v2226
    %v2228 = vpop.xlane.xlu0 %2227
    %v2229 = vsel %vm875, %v2207, 0.0
    %2230 = vadd.xlane.f32.xlu0 %v2229
    %v2231 = vpop.xlane.xlu0 %2230
    %v2232 = vrcp.pop %v2210
    %v2233 = vrcp.pop %v2213
    %v2234 = vrcp.pop %v2216
    %v2235 = vrcp.pop %v2219
    %v2236 = vrcp.pop %v2222
    %v2237 = vrcp.pop %v2225
    %v2238 = vrcp.pop %v2228
    %v2239 = vrcp.pop %v2231
    %v2240 = vmul.f32 %v2193, %v2232
    %v2241 = vmul.f32 %v2195, %v2233
    %v2242 = vmul.f32 %v2197, %v2234
    %v2243 = vmul.f32 %v2199, %v2235
    %v2244 = vmul.f32 %v2201, %v2236
    %v2245 = vmul.f32 %v2203, %v2237
    %v2246 = vmul.f32 %v2205, %v2238
    %v2247 = vmul.f32 %v2207, %v2239
    %v2248 = vpack.c.bf16 %v2240, %v2240
    %v2249 = vpack.c.bf16 %v2241, %v2241
    %v2250 = vpack.c.bf16 %v2242, %v2242
    %v2251 = vpack.c.bf16 %v2243, %v2243
    %v2252 = vpack.c.bf16 %v2244, %v2244
    %v2253 = vpack.c.bf16 %v2245, %v2245
    %v2254 = vpack.c.bf16 %v2246, %v2246
    %v2255 = vpack.c.bf16 %v2247, %v2247
    %v2257 = vsel %vm875, %v2248, 0
    %v2260 = vsel %vm975, %v1800, 0
    %2262 = vmatprep.subr.bf16.mxu0 0
    %2263 = vmatpush1.bf16.msra.mxu0 %v2260
    %2264 = vmatprep.subr.bf16.mxu0 0
    %2265 = vmatpush1.bf16.msra.mxu0 0
    %2266 = vmatprep.subr.bf16.mxu0 0
    %2267 = vmatpush1.bf16.msra.mxu0 0
    %2268 = vmatprep.subr.bf16.mxu0 0
    %2269 = vmatpush1.bf16.msra.mxu0 0
    %2270 = vmatprep.subr.bf16.mxu0 0
    %2271 = vmatpush1.bf16.msra.mxu0 0
    %2272 = vmatprep.subr.bf16.mxu0 0
    %2273 = vmatpush1.bf16.msra.mxu0 0
    %2274 = vmatprep.subr.bf16.mxu0 0
    %2275 = vmatpush1.bf16.msra.mxu0 0
    %2276 = vmatprep.subr.bf16.mxu0 0
    %2277 = vmatpush1.bf16.msra.mxu0 0
    %2278 = vmatprep.subr.bf16.mxu0 0
    %2279 = vmatpush1.bf16.msra.mxu0 0
    %2280 = vmatprep.subr.bf16.mxu0 0
    %2281 = vmatpush1.bf16.msra.mxu0 0
    %2282 = vmatprep.subr.bf16.mxu0 0
    %2283 = vmatpush1.bf16.msra.mxu0 0
    %2284 = vmatprep.subr.bf16.mxu0 0
    %2285 = vmatpush1.bf16.msra.mxu0 0
    %2286 = vmatprep.subr.bf16.mxu0 0
    %2287 = vmatpush1.bf16.msra.mxu0 0
    %2288 = vmatprep.subr.bf16.mxu0 0
    %2289 = vmatpush1.bf16.msra.mxu0 0
    %2290 = vmatprep.subr.bf16.mxu0 0
    %2291 = vmatpush1.bf16.msra.mxu0 0
    %2292 = vmatprep.subr.bf16.mxu0 0
    %2293 = vmatpush1.bf16.msra.mxu0 0
    %2294 = vmatprep.mubr.bf16.mxu0 0
    %2295 = vmatmul.mubr.bf16.gmra.mrb[0].mxu0 %v2257
    %v2296 = vpop.f32.mrb[0].mxu0
    %v2297 = vadd.f32 0.0, %v2296
    %v2298 = vpop.f32.mrb[0].mxu0
    %v2299 = vpop.f32.mrb[0].mxu0
    %v2300 = vpop.f32.mrb[0].mxu0
    %2301 = vdwg.mxu0
    %v2303 = vsel %vm875, %v2249, 0
    %v2306 = vsel %vm975, %v1801, 0
    %2308 = vmatprep.subr.bf16.mxu0 0
    %2309 = vmatpush1.bf16.msra.mxu0 %v2306
    %2310 = vmatprep.subr.bf16.mxu0 0
    %2311 = vmatpush1.bf16.msra.mxu0 0
    %2312 = vmatprep.subr.bf16.mxu0 0
    %2313 = vmatpush1.bf16.msra.mxu0 0
    %2314 = vmatprep.subr.bf16.mxu0 0
    %2315 = vmatpush1.bf16.msra.mxu0 0
    %2316 = vmatprep.subr.bf16.mxu0 0
    %2317 = vmatpush1.bf16.msra.mxu0 0
    %2318 = vmatprep.subr.bf16.mxu0 0
    %2319 = vmatpush1.bf16.msra.mxu0 0
    %2320 = vmatprep.subr.bf16.mxu0 0
    %2321 = vmatpush1.bf16.msra.mxu0 0
    %2322 = vmatprep.subr.bf16.mxu0 0
    %2323 = vmatpush1.bf16.msra.mxu0 0
    %2324 = vmatprep.subr.bf16.mxu0 0
    %2325 = vmatpush1.bf16.msra.mxu0 0
    %2326 = vmatprep.subr.bf16.mxu0 0
    %2327 = vmatpush1.bf16.msra.mxu0 0
    %2328 = vmatprep.subr.bf16.mxu0 0
    %2329 = vmatpush1.bf16.msra.mxu0 0
    %2330 = vmatprep.subr.bf16.mxu0 0
    %2331 = vmatpush1.bf16.msra.mxu0 0
    %2332 = vmatprep.subr.bf16.mxu0 0
    %2333 = vmatpush1.bf16.msra.mxu0 0
    %2334 = vmatprep.subr.bf16.mxu0 0
    %2335 = vmatpush1.bf16.msra.mxu0 0
    %2336 = vmatprep.subr.bf16.mxu0 0
    %2337 = vmatpush1.bf16.msra.mxu0 0
    %2338 = vmatprep.subr.bf16.mxu0 0
    %2339 = vmatpush1.bf16.msra.mxu0 0
    %2340 = vmatprep.mubr.bf16.mxu0 0
    %2341 = vmatmul.mubr.bf16.gmra.mrb[0].mxu0 %v2303
    %v2342 = vpop.f32.mrb[0].mxu0
    %v2343 = vadd.f32 0.0, %v2342
    %v2344 = vpop.f32.mrb[0].mxu0
    %v2345 = vpop.f32.mrb[0].mxu0
    %v2346 = vpop.f32.mrb[0].mxu0
    %2347 = vdwg.mxu0
    %v2349 = vsel %vm875, %v2250, 0
    %v2352 = vsel %vm975, %v1802, 0
    %2354 = vmatprep.subr.bf16.mxu0 0
    %2355 = vmatpush1.bf16.msra.mxu0 %v2352
    %2356 = vmatprep.subr.bf16.mxu0 0
    %2357 = vmatpush1.bf16.msra.mxu0 0
    %2358 = vmatprep.subr.bf16.mxu0 0
    %2359 = vmatpush1.bf16.msra.mxu0 0
    %2360 = vmatprep.subr.bf16.mxu0 0
    %2361 = vmatpush1.bf16.msra.mxu0 0
    %2362 = vmatprep.subr.bf16.mxu0 0
    %2363 = vmatpush1.bf16.msra.mxu0 0
    %2364 = vmatprep.subr.bf16.mxu0 0
    %2365 = vmatpush1.bf16.msra.mxu0 0
    %2366 = vmatprep.subr.bf16.mxu0 0
    %2367 = vmatpush1.bf16.msra.mxu0 0
    %2368 = vmatprep.subr.bf16.mxu0 0
    %2369 = vmatpush1.bf16.msra.mxu0 0
    %2370 = vmatprep.subr.bf16.mxu0 0
    %2371 = vmatpush1.bf16.msra.mxu0 0
    %2372 = vmatprep.subr.bf16.mxu0 0
    %2373 = vmatpush1.bf16.msra.mxu0 0
    %2374 = vmatprep.subr.bf16.mxu0 0
    %2375 = vmatpush1.bf16.msra.mxu0 0
    %2376 = vmatprep.subr.bf16.mxu0 0
    %2377 = vmatpush1.bf16.msra.mxu0 0
    %2378 = vmatprep.subr.bf16.mxu0 0
    %2379 = vmatpush1.bf16.msra.mxu0 0
    %2380 = vmatprep.subr.bf16.mxu0 0
    %2381 = vmatpush1.bf16.msra.mxu0 0
    %2382 = vmatprep.subr.bf16.mxu0 0
    %2383 = vmatpush1.bf16.msra.mxu0 0
    %2384 = vmatprep.subr.bf16.mxu0 0
    %2385 = vmatpush1.bf16.msra.mxu0 0
    %2386 = vmatprep.mubr.bf16.mxu0 0
    %2387 = vmatmul.mubr.bf16.gmra.mrb[0].mxu0 %v2349
    %v2388 = vpop.f32.mrb[0].mxu0
    %v2389 = vadd.f32 0.0, %v2388
    %v2390 = vpop.f32.mrb[0].mxu0
    %v2391 = vpop.f32.mrb[0].mxu0
    %v2392 = vpop.f32.mrb[0].mxu0
    %2393 = vdwg.mxu0
    %v2395 = vsel %vm875, %v2251, 0
    %v2398 = vsel %vm975, %v1803, 0
    %2400 = vmatprep.subr.bf16.mxu0 0
    %2401 = vmatpush1.bf16.msra.mxu0 %v2398
    %2402 = vmatprep.subr.bf16.mxu0 0
    %2403 = vmatpush1.bf16.msra.mxu0 0
    %2404 = vmatprep.subr.bf16.mxu0 0
    %2405 = vmatpush1.bf16.msra.mxu0 0
    %2406 = vmatprep.subr.bf16.mxu0 0
    %2407 = vmatpush1.bf16.msra.mxu0 0
    %2408 = vmatprep.subr.bf16.mxu0 0
    %2409 = vmatpush1.bf16.msra.mxu0 0
    %2410 = vmatprep.subr.bf16.mxu0 0
    %2411 = vmatpush1.bf16.msra.mxu0 0
    %2412 = vmatprep.subr.bf16.mxu0 0
    %2413 = vmatpush1.bf16.msra.mxu0 0
    %2414 = vmatprep.subr.bf16.mxu0 0
    %2415 = vmatpush1.bf16.msra.mxu0 0
    %2416 = vmatprep.subr.bf16.mxu0 0
    %2417 = vmatpush1.bf16.msra.mxu0 0
    %2418 = vmatprep.subr.bf16.mxu0 0
    %2419 = vmatpush1.bf16.msra.mxu0 0
    %2420 = vmatprep.subr.bf16.mxu0 0
    %2421 = vmatpush1.bf16.msra.mxu0 0
    %2422 = vmatprep.subr.bf16.mxu0 0
    %2423 = vmatpush1.bf16.msra.mxu0 0
    %2424 = vmatprep.subr.bf16.mxu0 0
    %2425 = vmatpush1.bf16.msra.mxu0 0
    %2426 = vmatprep.subr.bf16.mxu0 0
    %2427 = vmatpush1.bf16.msra.mxu0 0
    %2428 = vmatprep.subr.bf16.mxu0 0
    %2429 = vmatpush1.bf16.msra.mxu0 0
    %2430 = vmatprep.subr.bf16.mxu0 0
    %2431 = vmatpush1.bf16.msra.mxu0 0
    %2432 = vmatprep.mubr.bf16.mxu0 0
    %2433 = vmatmul.mubr.bf16.gmra.mrb[0].mxu0 %v2395
    %v2434 = vpop.f32.mrb[0].mxu0
    %v2435 = vadd.f32 0.0, %v2434
    %v2436 = vpop.f32.mrb[0].mxu0
    %v2437 = vpop.f32.mrb[0].mxu0
    %v2438 = vpop.f32.mrb[0].mxu0
    %2439 = vdwg.mxu0
    %v2441 = vsel %vm875, %v2252, 0
    %v2444 = vsel %vm975, %v1804, 0
    %2446 = vmatprep.subr.bf16.mxu0 0
    %2447 = vmatpush1.bf16.msra.mxu0 %v2444
    %2448 = vmatprep.subr.bf16.mxu0 0
    %2449 = vmatpush1.bf16.msra.mxu0 0
    %2450 = vmatprep.subr.bf16.mxu0 0
    %2451 = vmatpush1.bf16.msra.mxu0 0
    %2452 = vmatprep.subr.bf16.mxu0 0
    %2453 = vmatpush1.bf16.msra.mxu0 0
    %2454 = vmatprep.subr.bf16.mxu0 0
    %2455 = vmatpush1.bf16.msra.mxu0 0
    %2456 = vmatprep.subr.bf16.mxu0 0
    %2457 = vmatpush1.bf16.msra.mxu0 0
    %2458 = vmatprep.subr.bf16.mxu0 0
    %2459 = vmatpush1.bf16.msra.mxu0 0
    %2460 = vmatprep.subr.bf16.mxu0 0
    %2461 = vmatpush1.bf16.msra.mxu0 0
    %2462 = vmatprep.subr.bf16.mxu0 0
    %2463 = vmatpush1.bf16.msra.mxu0 0
    %2464 = vmatprep.subr.bf16.mxu0 0
    %2465 = vmatpush1.bf16.msra.mxu0 0
    %2466 = vmatprep.subr.bf16.mxu0 0
    %2467 = vmatpush1.bf16.msra.mxu0 0
    %2468 = vmatprep.subr.bf16.mxu0 0
    %2469 = vmatpush1.bf16.msra.mxu0 0
    %2470 = vmatprep.subr.bf16.mxu0 0
    %2471 = vmatpush1.bf16.msra.mxu0 0
    %2472 = vmatprep.subr.bf16.mxu0 0
    %2473 = vmatpush1.bf16.msra.mxu0 0
    %2474 = vmatprep.subr.bf16.mxu0 0
    %2475 = vmatpush1.bf16.msra.mxu0 0
    %2476 = vmatprep.subr.bf16.mxu0 0
    %2477 = vmatpush1.bf16.msra.mxu0 0
    %2478 = vmatprep.mubr.bf16.mxu0 0
    %2479 = vmatmul.mubr.bf16.gmra.mrb[0].mxu0 %v2441
    %v2480 = vpop.f32.mrb[0].mxu0
    %v2481 = vadd.f32 0.0, %v2480
    %v2482 = vpop.f32.mrb[0].mxu0
    %v2483 = vpop.f32.mrb[0].mxu0
    %v2484 = vpop.f32.mrb[0].mxu0
    %2485 = vdwg.mxu0
    %v2487 = vsel %vm875, %v2253, 0
    %v2490 = vsel %vm975, %v1805, 0
    %2492 = vmatprep.subr.bf16.mxu0 0
    %2493 = vmatpush1.bf16.msra.mxu0 %v2490
    %2494 = vmatprep.subr.bf16.mxu0 0
    %2495 = vmatpush1.bf16.msra.mxu0 0
    %2496 = vmatprep.subr.bf16.mxu0 0
    %2497 = vmatpush1.bf16.msra.mxu0 0
    %2498 = vmatprep.subr.bf16.mxu0 0
    %2499 = vmatpush1.bf16.msra.mxu0 0
    %2500 = vmatprep.subr.bf16.mxu0 0
    %2501 = vmatpush1.bf16.msra.mxu0 0
    %2502 = vmatprep.subr.bf16.mxu0 0
    %2503 = vmatpush1.bf16.msra.mxu0 0
    %2504 = vmatprep.subr.bf16.mxu0 0
    %2505 = vmatpush1.bf16.msra.mxu0 0
    %2506 = vmatprep.subr.bf16.mxu0 0
    %2507 = vmatpush1.bf16.msra.mxu0 0
    %2508 = vmatprep.subr.bf16.mxu0 0
    %2509 = vmatpush1.bf16.msra.mxu0 0
    %2510 = vmatprep.subr.bf16.mxu0 0
    %2511 = vmatpush1.bf16.msra.mxu0 0
    %2512 = vmatprep.subr.bf16.mxu0 0
    %2513 = vmatpush1.bf16.msra.mxu0 0
    %2514 = vmatprep.subr.bf16.mxu0 0
    %2515 = vmatpush1.bf16.msra.mxu0 0
    %2516 = vmatprep.subr.bf16.mxu0 0
    %2517 = vmatpush1.bf16.msra.mxu0 0
    %2518 = vmatprep.subr.bf16.mxu0 0
    %2519 = vmatpush1.bf16.msra.mxu0 0
    %2520 = vmatprep.subr.bf16.mxu0 0
    %2521 = vmatpush1.bf16.msra.mxu0 0
    %2522 = vmatprep.subr.bf16.mxu0 0
    %2523 = vmatpush1.bf16.msra.mxu0 0
    %2524 = vmatprep.mubr.bf16.mxu0 0
    %2525 = vmatmul.mubr.bf16.gmra.mrb[0].mxu0 %v2487
    %v2526 = vpop.f32.mrb[0].mxu0
    %v2527 = vadd.f32 0.0, %v2526
    %v2528 = vpop.f32.mrb[0].mxu0
    %v2529 = vpop.f32.mrb[0].mxu0
    %v2530 = vpop.f32.mrb[0].mxu0
    %2531 = vdwg.mxu0
    %v2533 = vsel %vm875, %v2254, 0
    %v2536 = vsel %vm975, %v1806, 0
    %2538 = vmatprep.subr.bf16.mxu0 0
    %2539 = vmatpush1.bf16.msra.mxu0 %v2536
    %2540 = vmatprep.subr.bf16.mxu0 0
    %2541 = vmatpush1.bf16.msra.mxu0 0
    %2542 = vmatprep.subr.bf16.mxu0 0
    %2543 = vmatpush1.bf16.msra.mxu0 0
    %2544 = vmatprep.subr.bf16.mxu0 0
    %2545 = vmatpush1.bf16.msra.mxu0 0
    %2546 = vmatprep.subr.bf16.mxu0 0
    %2547 = vmatpush1.bf16.msra.mxu0 0
    %2548 = vmatprep.subr.bf16.mxu0 0
    %2549 = vmatpush1.bf16.msra.mxu0 0
    %2550 = vmatprep.subr.bf16.mxu0 0
    %2551 = vmatpush1.bf16.msra.mxu0 0
    %2552 = vmatprep.subr.bf16.mxu0 0
    %2553 = vmatpush1.bf16.msra.mxu0 0
    %2554 = vmatprep.subr.bf16.mxu0 0
    %2555 = vmatpush1.bf16.msra.mxu0 0
    %2556 = vmatprep.subr.bf16.mxu0 0
    %2557 = vmatpush1.bf16.msra.mxu0 0
    %2558 = vmatprep.subr.bf16.mxu0 0
    %2559 = vmatpush1.bf16.msra.mxu0 0
    %2560 = vmatprep.subr.bf16.mxu0 0
    %2561 = vmatpush1.bf16.msra.mxu0 0
    %2562 = vmatprep.subr.bf16.mxu0 0
    %2563 = vmatpush1.bf16.msra.mxu0 0
    %2564 = vmatprep.subr.bf16.mxu0 0
    %2565 = vmatpush1.bf16.msra.mxu0 0
    %2566 = vmatprep.subr.bf16.mxu0 0
    %2567 = vmatpush1.bf16.msra.mxu0 0
    %2568 = vmatprep.subr.bf16.mxu0 0
    %2569 = vmatpush1.bf16.msra.mxu0 0
    %2570 = vmatprep.mubr.bf16.mxu0 0
    %2571 = vmatmul.mubr.bf16.gmra.mrb[0].mxu0 %v2533
    %v2572 = vpop.f32.mrb[0].mxu0
    %v2573 = vadd.f32 0.0, %v2572
    %v2574 = vpop.f32.mrb[0].mxu0
    %v2575 = vpop.f32.mrb[0].mxu0
    %v2576 = vpop.f32.mrb[0].mxu0
    %2577 = vdwg.mxu0
    %v2579 = vsel %vm875, %v2255, 0
    %v2582 = vsel %vm975, %v1807, 0
    %2584 = vmatprep.subr.bf16.mxu0 0
    %2585 = vmatpush1.bf16.msra.mxu0 %v2582
    %2586 = vmatprep.subr.bf16.mxu0 0
    %2587 = vmatpush1.bf16.msra.mxu0 0
    %2588 = vmatprep.subr.bf16.mxu0 0
    %2589 = vmatpush1.bf16.msra.mxu0 0
    %2590 = vmatprep.subr.bf16.mxu0 0
    %2591 = vmatpush1.bf16.msra.mxu0 0
    %2592 = vmatprep.subr.bf16.mxu0 0
    %2593 = vmatpush1.bf16.msra.mxu0 0
    %2594 = vmatprep.subr.bf16.mxu0 0
    %2595 = vmatpush1.bf16.msra.mxu0 0
    %2596 = vmatprep.subr.bf16.mxu0 0
    %2597 = vmatpush1.bf16.msra.mxu0 0
    %2598 = vmatprep.subr.bf16.mxu0 0
    %2599 = vmatpush1.bf16.msra.mxu0 0
    %2600 = vmatprep.subr.bf16.mxu0 0
    %2601 = vmatpush1.bf16.msra.mxu0 0
    %2602 = vmatprep.subr.bf16.mxu0 0
    %2603 = vmatpush1.bf16.msra.mxu0 0
    %2604 = vmatprep.subr.bf16.mxu0 0
    %2605 = vmatpush1.bf16.msra.mxu0 0
    %2606 = vmatprep.subr.bf16.mxu0 0
    %2607 = vmatpush1.bf16.msra.mxu0 0
    %2608 = vmatprep.subr.bf16.mxu0 0
    %2609 = vmatpush1.bf16.msra.mxu0 0
    %2610 = vmatprep.subr.bf16.mxu0 0
    %2611 = vmatpush1.bf16.msra.mxu0 0
    %2612 = vmatprep.subr.bf16.mxu0 0
    %2613 = vmatpush1.bf16.msra.mxu0 0
    %2614 = vmatprep.subr.bf16.mxu0 0
    %2615 = vmatpush1.bf16.msra.mxu0 0
    %2616 = vmatprep.mubr.bf16.mxu0 0
    %2617 = vmatmul.mubr.bf16.gmra.mrb[0].mxu0 %v2579
    %v2618 = vpop.f32.mrb[0].mxu0
    %v2619 = vadd.f32 0.0, %v2618
    %v2620 = vpop.f32.mrb[0].mxu0
    %v2621 = vpop.f32.mrb[0].mxu0
    %v2622 = vpop.f32.mrb[0].mxu0
    %2623 = vdwg.mxu0
    %v2624 = vadd.f32 %v2297, %v2389
    %v2625 = vadd.f32 %v2343, %v2435
    %v2626 = vadd.f32 %v2624, %v2481
    %v2627 = vadd.f32 %v2625, %v2527
    %v2628 = vadd.f32 %v2626, %v2573
    %v2629 = vadd.f32 %v2627, %v2619
    %v2630 = vpack.c.bf16 %v2629, %v2628
    %v2631 = vlaneseq
    %v2632 = vshrl.u32 %v2631, 7
    %v2633 = vsub.s32 0, %v2632
    %v2634 = vrot.slane %v1610, %v2633
    %v2636 = vsel %vm308, %v2630, 0
    %2638 = vmatprep.subr.bf16.mxu0 0
    %2639 = vmatpush1.bf16.msra.mxu0 %v1608
    %2640 = vmatprep.subr.bf16.mxu0 0
    %2641 = vmatpush1.bf16.msra.mxu0 %v1609
    %2642 = vmatprep.subr.bf16.mxu0 0
    %2643 = vmatpush1.bf16.msra.mxu0 0
    %2644 = vmatprep.subr.bf16.mxu0 0
    %2645 = vmatpush1.bf16.msra.mxu0 0
    %2646 = vmatprep.subr.bf16.mxu0 0
    %2647 = vmatpush1.bf16.msra.mxu0 0
    %2648 = vmatprep.subr.bf16.mxu0 0
    %2649 = vmatpush1.bf16.msra.mxu0 0
    %2650 = vmatprep.subr.bf16.mxu0 0
    %2651 = vmatpush1.bf16.msra.mxu0 0
    %2652 = vmatprep.subr.bf16.mxu0 0
    %2653 = vmatpush1.bf16.msra.mxu0 0
    %2654 = vmatprep.subr.bf16.mxu0 0
    %2655 = vmatpush1.bf16.msra.mxu0 0
    %2656 = vmatprep.subr.bf16.mxu0 0
    %2657 = vmatpush1.bf16.msra.mxu0 0
    %2658 = vmatprep.subr.bf16.mxu0 0
    %2659 = vmatpush1.bf16.msra.mxu0 0
    %2660 = vmatprep.subr.bf16.mxu0 0
    %2661 = vmatpush1.bf16.msra.mxu0 0
    %2662 = vmatprep.subr.bf16.mxu0 0
    %2663 = vmatpush1.bf16.msra.mxu0 0
    %2664 = vmatprep.subr.bf16.mxu0 0
    %2665 = vmatpush1.bf16.msra.mxu0 0
    %2666 = vmatprep.subr.bf16.mxu0 0
    %2667 = vmatpush1.bf16.msra.mxu0 0
    %2668 = vmatprep.subr.bf16.mxu0 0
    %2669 = vmatpush1.bf16.msra.mxu0 0
    %2670 = vmatprep.mubr.bf16.mxu0 0
    %2671 = vmatmul.mubr.bf16.gmra.mrb[0].mxu0 %v2636
    %v2672 = vpop.f32.mrb[0].mxu0
    %v2673 = vadd.f32 %v2634, %v2672
    %v2674 = vpop.f32.mrb[0].mxu0
    %v2675 = vpop.f32.mrb[0].mxu0
    %v2676 = vadd.f32 %v2634, %v2675
    %v2677 = vpop.f32.mrb[0].mxu0
    %2678 = vdwg.mxu0
    %v2679 = vadd.f32 %v1576, %v2673
    %v2680 = vadd.f32 %v1577, %v2676
    %v2681 = vsel %vm308, %v2679, 0.0
    %2682 = vadd.xlane.f32.xlu0 %v2681
    %v2683 = vpop.xlane.xlu0 %2682
    %v2684 = vsel %vm308, %v2680, 0.0
    %2685 = vadd.xlane.f32.xlu0 %v2684
    %v2686 = vpop.xlane.xlu0 %2685
    %v2687 = vmul.f32 %v2683, %v1404
    %v2688 = vmul.f32 %v2686, %v1404
    %v2689 = vsub.f32 %v2679, %v2687
    %v2690 = vsub.f32 %v2680, %v2688
    %v2691 = vmul.f32 %v2689, %v2689
    %v2692 = vmul.f32 %v2690, %v2690
    %v2693 = vsel %vm308, %v2691, 0.0
    %2694 = vadd.xlane.f32.xlu0 %v2693
    %v2695 = vpop.xlane.xlu0 %2694
    %v2696 = vsel %vm308, %v2692, 0.0
    %2697 = vadd.xlane.f32.xlu0 %v2696
    %v2698 = vpop.xlane.xlu0 %2697
    %v2699 = vmul.f32 %v2695, %v1404
    %v2700 = vmul.f32 %v2698, %v1404
    %v2701 = vadd.f32 %v2699, 1e-05
    %v2702 = vadd.f32 %v2700, 1e-05
    %v2703 = vrsqrt.pop %v2701
    %v2704 = vrsqrt.pop %v2702
    %v2705 = vmul.f32 %v2689, %v2703
    %v2706 = vmul.f32 %v2690, %v2704
    %v2707 = vlaneseq
    %v2708 = vshrl.u32 %v2707, 7
    %v2709 = vsub.s32 0, %v2708
    %v2710 = vrot.slane %v1633, %v2709
    %v2711 = vmul.f32 %v2705, %v2710
    %v2712 = vmul.f32 %v2706, %v2710
    %v2713 = vlaneseq
    %v2714 = vshrl.u32 %v2713, 7
    %v2715 = vsub.s32 0, %v2714
    %v2716 = vrot.slane %v1634, %v2715
    %v2717 = vadd.f32 %v2711, %v2716
    %v2718 = vadd.f32 %v2712, %v2716
    %v2719 = vpack.c.bf16 %v2718, %v2717
    %v2720 = vlaneseq
    %v2721 = vshrl.u32 %v2720, 7
    %v2722 = vsub.s32 0, %v2721
    %v2723 = vrot.slane %v1618, %v2722
    %v2725 = vsel %vm308, %v2719, 0
    %2727 = vmatprep.subr.bf16.mxu0 0
    %2728 = vmatpush1.bf16.msra.mxu0 %v1616
    %2729 = vmatprep.subr.bf16.mxu0 0
    %2730 = vmatpush1.bf16.msra.mxu0 %v1617
    %2731 = vmatprep.subr.bf16.mxu0 0
    %2732 = vmatpush1.bf16.msra.mxu0 0
    %2733 = vmatprep.subr.bf16.mxu0 0
    %2734 = vmatpush1.bf16.msra.mxu0 0
    %2735 = vmatprep.subr.bf16.mxu0 0
    %2736 = vmatpush1.bf16.msra.mxu0 0
    %2737 = vmatprep.subr.bf16.mxu0 0
    %2738 = vmatpush1.bf16.msra.mxu0 0
    %2739 = vmatprep.subr.bf16.mxu0 0
    %2740 = vmatpush1.bf16.msra.mxu0 0
    %2741 = vmatprep.subr.bf16.mxu0 0
    %2742 = vmatpush1.bf16.msra.mxu0 0
    %2743 = vmatprep.subr.bf16.mxu0 0
    %2744 = vmatpush1.bf16.msra.mxu0 0
    %2745 = vmatprep.subr.bf16.mxu0 0
    %2746 = vmatpush1.bf16.msra.mxu0 0
    %2747 = vmatprep.subr.bf16.mxu0 0
    %2748 = vmatpush1.bf16.msra.mxu0 0
    %2749 = vmatprep.subr.bf16.mxu0 0
    %2750 = vmatpush1.bf16.msra.mxu0 0
    %2751 = vmatprep.subr.bf16.mxu0 0
    %2752 = vmatpush1.bf16.msra.mxu0 0
    %2753 = vmatprep.subr.bf16.mxu0 0
    %2754 = vmatpush1.bf16.msra.mxu0 0
    %2755 = vmatprep.subr.bf16.mxu0 0
    %2756 = vmatpush1.bf16.msra.mxu0 0
    %2757 = vmatprep.subr.bf16.mxu0 0
    %2758 = vmatpush1.bf16.msra.mxu0 0
    %2759 = vmatprep.mubr.bf16.mxu0 0
    %2760 = vmatmul.mubr.bf16.gmra.mrb[0].mxu0 %v2725
    %v2761 = vpop.f32.mrb[0].mxu0
    %v2762 = vadd.f32 %v2723, %v2761
    %v2763 = vpop.f32.mrb[0].mxu0
    %v2764 = vpop.f32.mrb[0].mxu0
    %v2765 = vadd.f32 %v2723, %v2764
    %v2766 = vpop.f32.mrb[0].mxu0
    %2767 = vdwg.mxu0
    %v2768 = vmax.f32 %v2762, 0.0
    %v2769 = vmax.f32 %v2765, 0.0
    %v2770 = vpack.c.bf16 %v2769, %v2768
    %v2771 = vlaneseq
    %v2772 = vshrl.u32 %v2771, 7
    %v2773 = vsub.s32 0, %v2772
    %v2774 = vrot.slane %v1632, %v2773
    %v2776 = vsel %vm1493, %v2770, 0
    %2778 = vmatprep.subr.bf16.mxu0 0
    %2779 = vmatpush1.bf16.msra.mxu0 %v1628
    %2780 = vmatprep.subr.bf16.mxu0 0
    %2781 = vmatpush1.bf16.msra.mxu0 %v1629
    %2782 = vmatprep.subr.bf16.mxu0 0
    %2783 = vmatpush1.bf16.msra.mxu0 %v1630
    %2784 = vmatprep.subr.bf16.mxu0 0
    %2785 = vmatpush1.bf16.msra.mxu0 %v1631
    %2786 = vmatprep.subr.bf16.mxu0 0
    %2787 = vmatpush1.bf16.msra.mxu0 0
    %2788 = vmatprep.subr.bf16.mxu0 0
    %2789 = vmatpush1.bf16.msra.mxu0 0
    %2790 = vmatprep.subr.bf16.mxu0 0
    %2791 = vmatpush1.bf16.msra.mxu0 0
    %2792 = vmatprep.subr.bf16.mxu0 0
    %2793 = vmatpush1.bf16.msra.mxu0 0
    %2794 = vmatprep.subr.bf16.mxu0 0
    %2795 = vmatpush1.bf16.msra.mxu0 0
    %2796 = vmatprep.subr.bf16.mxu0 0
    %2797 = vmatpush1.bf16.msra.mxu0 0
    %2798 = vmatprep.subr.bf16.mxu0 0
    %2799 = vmatpush1.bf16.msra.mxu0 0
    %2800 = vmatprep.subr.bf16.mxu0 0
    %2801 = vmatpush1.bf16.msra.mxu0 0
    %2802 = vmatprep.subr.bf16.mxu0 0
    %2803 = vmatpush1.bf16.msra.mxu0 0
    %2804 = vmatprep.subr.bf16.mxu0 0
    %2805 = vmatpush1.bf16.msra.mxu0 0
    %2806 = vmatprep.subr.bf16.mxu0 0
    %2807 = vmatpush1.bf16.msra.mxu0 0
    %2808 = vmatprep.subr.bf16.mxu0 0
    %2809 = vmatpush1.bf16.msra.mxu0 0
    %2810 = vmatprep.mubr.bf16.mxu0 0
    %2811 = vmatmul.mubr.bf16.gmra.mrb[0].mxu0 %v2776
    %v2812 = vpop.f32.mrb[0].mxu0
    %v2813 = vadd.f32 %v2774, %v2812
    %v2814 = vpop.f32.mrb[0].mxu0
    %v2815 = vpop.f32.mrb[0].mxu0
    %v2816 = vadd.f32 %v2774, %v2815
    %v2817 = vpop.f32.mrb[0].mxu0
    %2818 = vdwg.mxu0
    %v2819 = vadd.f32 %v2717, %v2813
    %v2820 = vadd.f32 %v2718, %v2816
    %v2821 = vsel %vm308, %v2819, 0.0
    %2822 = vadd.xlane.f32.xlu0 %v2821
    %v2823 = vpop.xlane.xlu0 %2822
    %v2824 = vsel %vm308, %v2820, 0.0
    %2825 = vadd.xlane.f32.xlu0 %v2824
    %v2826 = vpop.xlane.xlu0 %2825
    %v2827 = vmul.f32 %v2823, %v1404
    %v2828 = vmul.f32 %v2826, %v1404
    %v2829 = vsub.f32 %v2819, %v2827
    %v2830 = vsub.f32 %v2820, %v2828
    %v2831 = vmul.f32 %v2829, %v2829
    %v2832 = vmul.f32 %v2830, %v2830
    %v2833 = vsel %vm308, %v2831, 0.0
    %2834 = vadd.xlane.f32.xlu0 %v2833
    %v2835 = vpop.xlane.xlu0 %2834
    %v2836 = vsel %vm308, %v2832, 0.0
    %2837 = vadd.xlane.f32.xlu0 %v2836
    %v2838 = vpop.xlane.xlu0 %2837
    %v2839 = vmul.f32 %v2835, %v1404
    %v2840 = vmul.f32 %v2838, %v1404
    %v2841 = vadd.f32 %v2839, 1e-05
    %v2842 = vadd.f32 %v2840, 1e-05
    %v2843 = vrsqrt.pop %v2841
    %v2844 = vrsqrt.pop %v2842
    %v2845 = vmul.f32 %v2829, %v2843
    %v2846 = vmul.f32 %v2830, %v2844
    %v2847 = vlaneseq
    %v2848 = vshrl.u32 %v2847, 7
    %v2849 = vsub.s32 0, %v2848
    %v2850 = vrot.slane %v1635, %v2849
    %v2851 = vmul.f32 %v2845, %v2850
    %v2852 = vmul.f32 %v2846, %v2850
    %v2853 = vlaneseq
    %v2854 = vshrl.u32 %v2853, 7
    %v2855 = vsub.s32 0, %v2854
    %v2856 = vrot.slane %v1636, %v2855
    %v2857 = vadd.f32 %v2851, %v2856
    %v2858 = vadd.f32 %v2852, %v2856
    %v2859 = vpack.c.bf16 %v2857, %v2857
    %v2860 = vpack.c.bf16 %v2858, %v2858
    %v2861 = vld [vmem:[%s18] sm:$0xff]
    %v2862 = vld [vmem:[%s18 + $0x8] sm:$0xff]
    %v2863 = vld [vmem:[%s18 + $0x10] sm:$0xff]
    %v2864 = vld [vmem:[%s18 + $0x18] sm:$0xff]
    %v2865 = vpack.c.bf16 %v2862, %v2861
    %v2866 = vpack.c.bf16 %v2864, %v2863
    %v2867 = vld [vmem:[%s19] sm:$0x1]
    %v2869 = vlaneseq
    %v2870 = vshrl.u32 %v2869, 7
    %v2871 = vsub.s32 0, %v2870
    %v2872 = vrot.slane %v2867, %v2871
    %v2876 = vunpack.c.l.b16 %v2859
    %v2877 = vunpack.c.l.b16 %v2860
    %v2878 = vrot.slane %v2876, 7
    %v2879 = vrot.slane %v2877, 6
    %vm2880 = vcmask 1041409
    %v2881 = vsel %vm2880, %v2879, %v2878
    %v2882 = vpack.c.b16 %v2881, %v2881
    %v2884 = vsel %vm308, %v2882, 0
    %2886 = vmatprep.subr.bf16.mxu0 0
    %2887 = vmatpush1.bf16.msra.mxu0 %v2865
    %2888 = vmatprep.subr.bf16.mxu0 0
    %2889 = vmatpush1.bf16.msra.mxu0 %v2866
    %2890 = vmatprep.subr.bf16.mxu0 0
    %2891 = vmatpush1.bf16.msra.mxu0 0
    %2892 = vmatprep.subr.bf16.mxu0 0
    %2893 = vmatpush1.bf16.msra.mxu0 0
    %2894 = vmatprep.subr.bf16.mxu0 0
    %2895 = vmatpush1.bf16.msra.mxu0 0
    %2896 = vmatprep.subr.bf16.mxu0 0
    %2897 = vmatpush1.bf16.msra.mxu0 0
    %2898 = vmatprep.subr.bf16.mxu0 0
    %2899 = vmatpush1.bf16.msra.mxu0 0
    %2900 = vmatprep.subr.bf16.mxu0 0
    %2901 = vmatpush1.bf16.msra.mxu0 0
    %2902 = vmatprep.subr.bf16.mxu0 0
    %2903 = vmatpush1.bf16.msra.mxu0 0
    %2904 = vmatprep.subr.bf16.mxu0 0
    %2905 = vmatpush1.bf16.msra.mxu0 0
    %2906 = vmatprep.subr.bf16.mxu0 0
    %2907 = vmatpush1.bf16.msra.mxu0 0
    %2908 = vmatprep.subr.bf16.mxu0 0
    %2909 = vmatpush1.bf16.msra.mxu0 0
    %2910 = vmatprep.subr.bf16.mxu0 0
    %2911 = vmatpush1.bf16.msra.mxu0 0
    %2912 = vmatprep.subr.bf16.mxu0 0
    %2913 = vmatpush1.bf16.msra.mxu0 0
    %2914 = vmatprep.subr.bf16.mxu0 0
    %2915 = vmatpush1.bf16.msra.mxu0 0
    %2916 = vmatprep.subr.bf16.mxu0 0
    %2917 = vmatpush1.bf16.msra.mxu0 0
    %2918 = vmatprep.mubr.bf16.mxu0 0
    %2919 = vmatmul.mubr.bf16.gmra.mrb[0].mxu0 %v2884
    %v2920 = vpop.f32.mrb[0].mxu0
    %v2921 = vadd.f32 %v2872, %v2920
    %v2922 = vpop.f32.mrb[0].mxu0
    %v2923 = vpop.f32.mrb[0].mxu0
    %v2924 = vpop.f32.mrb[0].mxu0
    %2925 = vdwg.mxu0
    %vm2926 = vcmask 25600
    %2927 = vst.msk [vmem:[#allocation17] sm:$0x3] %vm2926, %v2921
    // Predicated region
    $region118: #{tpu_custom_call.1} parent=1 // pred_check
      _
    $region119: #{tpu_custom_call.1} parent=1 // pred_check_branch
      %2929 = sbr.rel (0) target = $region121
    $region120: #{tpu_custom_call.1} parent=1 // pred_region
      %s2931 = ssub.s32 32, 32
      %2932 = vsyncadd [#allocation4], %s2931
      %s2934 = sshll.u32 [#allocation17], 4
      %s2935 = int_to_ptr.vmem [resolvable:$true] %s2934
      %2937 = dma.vmem_to_hbm [thread:$0]  %s2935, 32, %s20, [#allocation4]
    $region121: #{tpu_custom_call.1} parent=1 // pred_fallthru
      _
    // Predicated region
    $region122: #{tpu_custom_call.1} parent=1 // pred_check
      _
    $region123: #{tpu_custom_call.1} parent=1 // pred_check_branch
      %2939 = sbr.rel (0) target = $region125
    $region124: #{tpu_custom_call.1} parent=1 // pred_region
      %2940 = dma.done [#allocation4], 32
    $region125: #{tpu_custom_call.1} parent=1 // pred_fallthru
      _
    %2941 = vsyncpa [#allocation3], 1
    %2942 = vsyncpa [#allocation6], 1
    %2943 = vsyncpa [#allocation9], 1
    %2944 = vsyncpa [#allocation12], 1
    %2945 = vsyncpa [#allocation15], 1
    %2946 = vsyncpa [#allocation4], 1

</llo_original>
